<compile_context>
chip_gen: v7x
topology: tpu7x:2x2x1
jax: 0.10.0
libtpu: 0.0.40
codegen_flags: <defaults>
</compile_context>

<pallas_src>
import functools

import jax
import jax.numpy as jnp
from jax.experimental import pallas as pl
from jax.experimental.pallas import tpu as pltpu

LANE = 128                       # pad K and Cout to multiples of the lane width
_EPS = 1e-5                      # BatchNorm2d eps (PyTorch default)
_NEG_SLOPE = 0.2                 # LeakyReLU slope
_VMEM_LIMIT = 32 * 1024 * 1024   # explicit scoped-VMEM limit, safe on v5e/v6e/v7x


def _round_up(x, m):
    return ((x + m - 1) // m) * m


def _compiler_params(sem):
    return pltpu.CompilerParams(dimension_semantics=sem,
                                vmem_limit_bytes=_VMEM_LIMIT)


def _tiles(M, block_rows):
    """Pick an M tile: <= block_rows, sublane(8)-aligned whenever the axis is tiled."""
    tile = min(block_rows, M)
    if tile < M and tile % 8 != 0:
        tile = max(8, (tile // 8) * 8)
    n = -(-M // tile)
    return tile, n, n * tile


def _pad2d(a, rows, cols):
    r, c = a.shape
    if (r, c) == (rows, cols):
        return a
    return jnp.pad(a, ((0, rows - r), (0, cols - c)))


# ----------------------------------------------------------------------------
# Pallas kernels
# ----------------------------------------------------------------------------
def _conv_bias_act_kernel(p_ref, w_ref, b_ref, o_ref, *, act):
    """One M tile: [tile_M, Kp] @ [Kp, Coutp]  + bias + activation."""
    acc = jnp.dot(p_ref[...], w_ref[...], preferred_element_type=jnp.float32)
    acc = acc + b_ref[...]                               # (1, Coutp) broadcast
    if act == "leaky":
        acc = jnp.where(acc > 0, acc, _NEG_SLOPE * acc)
    else:                                                # sigmoid
        acc = jax.nn.sigmoid(acc)
    o_ref[...] = acc.astype(o_ref.dtype)


def _conv_stats_kernel(p_ref, w_ref, conv_ref, sum_ref, sq_ref):
    """One M tile: conv matmul -> raw f32 conv tile, plus per-channel sum and
    sum-of-squares accumulated across the whole grid (accumulator outputs with a
    constant block index -> grid axis is 'arbitrary')."""
    acc = jnp.dot(p_ref[...], w_ref[...], preferred_element_type=jnp.float32)
    conv_ref[...] = acc

    @pl.when(pl.program_id(0) == 0)
    def _():
        sum_ref[...] = jnp.zeros_like(sum_ref)
        sq_ref[...] = jnp.zeros_like(sq_ref)

    sum_ref[...] = sum_ref[...] + jnp.sum(acc, axis=0, keepdims=True)
    sq_ref[...] = sq_ref[...] + jnp.sum(acc * acc, axis=0, keepdims=True)


def _bn_apply_kernel(conv_ref, sum_ref, sq_ref, gb_ref, o_ref, *, inv_m):
    """BatchNorm (train mode, biased variance) + LeakyReLU(0.2) on one M tile."""
    mean = sum_ref[...] * inv_m                          # (1, Coutp)
    var = sq_ref[...] * inv_m - mean * mean              # biased variance
    gb = gb_ref[...]                                     # (2, Coutp): gamma, beta
    scale = gb[0:1, :] * jax.lax.rsqrt(var + _EPS)
    shift = gb[1:2, :] - mean * scale
    y = conv_ref[...] * scale + shift
    y = jnp.where(y > 0, y, _NEG_SLOPE * y)
    o_ref[...] = y.astype(o_ref.dtype)


# ----------------------------------------------------------------------------
# Layer wrappers (im2col glue + pallas_call plumbing)
# ----------------------------------------------------------------------------
def _im2col(x, ksize, stride, pad):
    """x: [N, H, W, C] (bf16) -> ([N*OH*OW, ksize*ksize*C], OH, OW).
    K ordering is (kh, kw, cin), matching the flattened weight layout."""
    N, H, W, C = x.shape
    xp = jnp.pad(x, ((0, 0), (pad, pad), (pad, pad), (0, 0)))
    OH = (H + 2 * pad - ksize) // stride + 1
    OW = (W + 2 * pad - ksize) // stride + 1
    cols = []
    for i in range(ksize):
        for j in range(ksize):
            cols.append(xp[:, i:i + stride * OH:stride, j:j + stride * OW:stride, :])
    patches = jnp.stack(cols, axis=3)                    # [N, OH, OW, k*k, C]
    return patches.reshape(N * OH * OW, ksize * ksize * C), OH, OW


def _conv_bias_act(patches, w, b, act, block_rows, out_dtype):
    """Conv-as-matmul + bias + activation.  patches [M,K] bf16, w [K,Cout] f32."""
    M, K = patches.shape
    Cout = w.shape[1]
    Kp, Coutp = _round_up(K, LANE), _round_up(Cout, LANE)
    tile, n_tiles, M_pad = _tiles(M, block_rows)

    p = _pad2d(patches, M_pad, Kp)
    wp = _pad2d(w, Kp, Coutp).astype(jnp.bfloat16)
    bp = _pad2d(b.reshape(1, -1), 1, Coutp).astype(jnp.float32)

    out = pl.pallas_call(
        functools.partial(_conv_bias_act_kernel, act=act),
        out_shape=jax.ShapeDtypeStruct((M_pad, Coutp), out_dtype),
        grid=(n_tiles,),
        in_specs=[pl.BlockSpec((tile, Kp), lambda i: (i, 0)),
                  pl.BlockSpec((Kp, Coutp), lambda i: (0, 0)),
                  pl.BlockSpec((1, Coutp), lambda i: (0, 0))],
        out_specs=pl.BlockSpec((tile, Coutp), lambda i: (i, 0)),
        compiler_params=_compiler_params(("parallel",)),
    )(p, wp, bp)
    return out[:M, :Cout]


def _conv_bn_leaky(patches, w, gamma, beta, block_rows):
    """Conv (no bias) + train-mode BatchNorm + LeakyReLU(0.2), tiled over M."""
    M, K = patches.shape
    Cout = w.shape[1]
    Kp, Coutp = _round_up(K, LANE), _round_up(Cout, LANE)
    tile, n_tiles, M_pad = _tiles(M, block_rows)

    p = _pad2d(patches, M_pad, Kp)
    wp = _pad2d(w, Kp, Coutp).astype(jnp.bfloat16)
    gb = _pad2d(jnp.stack([gamma, beta], axis=0), 2, Coutp).astype(jnp.float32)

    # Pass 1: conv matmul + cross-tile sum / sum-of-squares accumulation.
    conv, s, sq = pl.pallas_call(
        _conv_stats_kernel,
        out_shape=(jax.ShapeDtypeStruct((M_pad, Coutp), jnp.float32),
                   jax.ShapeDtypeStruct((1, Coutp), jnp.float32),
                   jax.ShapeDtypeStruct((1, Coutp), jnp.float32)),
        grid=(n_tiles,),
        in_specs=[pl.BlockSpec((tile, Kp), lambda i: (i, 0)),
                  pl.BlockSpec((Kp, Coutp), lambda i: (0, 0))],
        out_specs=(pl.BlockSpec((tile, Coutp), lambda i: (i, 0)),
                   pl.BlockSpec((1, Coutp), lambda i: (0, 0)),
                   pl.BlockSpec((1, Coutp), lambda i: (0, 0))),
        compiler_params=_compiler_params(("arbitrary",)),
    )(p, wp)

    # Pass 2: normalize + affine + LeakyReLU, emitted as bf16 activations.
    out = pl.pallas_call(
        functools.partial(_bn_apply_kernel, inv_m=1.0 / M),   # divide by REAL M
        out_shape=jax.ShapeDtypeStruct((M_pad, Coutp), jnp.bfloat16),
        grid=(n_tiles,),
        in_specs=[pl.BlockSpec((tile, Coutp), lambda i: (i, 0)),
                  pl.BlockSpec((1, Coutp), lambda i: (0, 0)),
                  pl.BlockSpec((1, Coutp), lambda i: (0, 0)),
                  pl.BlockSpec((2, Coutp), lambda i: (0, 0))],
        out_specs=pl.BlockSpec((tile, Coutp), lambda i: (i, 0)),
        compiler_params=_compiler_params(("parallel",)),
    )(conv, s, sq, gb)
    return out[:M, :Cout]


# ----------------------------------------------------------------------------
# Parameters (synthetic, PyTorch-like shapes: flattened [kh*kw*cin, cout])
# ----------------------------------------------------------------------------
def init_discriminator_params(key, in_channels=3, features=8):
    keys = jax.random.split(key, 16)

    def conv_w(k, cin, cout):
        return 0.05 * jax.random.normal(k, (4 * 4 * cin, cout), jnp.float32)

    p = {}
    p["w1"] = conv_w(keys[0], in_channels * 2, features)
    p["b1"] = 0.05 * jax.random.normal(keys[1], (features,), jnp.float32)
    chans = [(features, features * 2),
             (features * 2, features * 4),
             (features * 4, features * 8)]
    ki = 2
    for idx, (cin, cout) in enumerate(chans, start=2):
        p[f"w{idx}"] = conv_w(keys[ki], cin, cout); ki += 1
        p[f"g{idx}"] = 1.0 + 0.1 * jax.random.normal(keys[ki], (cout,), jnp.float32); ki += 1
        p[f"beta{idx}"] = 0.1 * jax.random.normal(keys[ki], (cout,), jnp.float32); ki += 1
    p["w5"] = conv_w(keys[ki], features * 8, 1); ki += 1
    p["b5"] = 0.05 * jax.random.normal(keys[ki], (1,), jnp.float32)
    return p


# ----------------------------------------------------------------------------
# Forward pass
# ----------------------------------------------------------------------------
def discriminator_forward(params, x, y, *, block_rows=512):
    """x, y: NCHW f32.  Returns NCHW sigmoid patch scores (f32)."""
    xy = jnp.concatenate([x, y], axis=1)                     # NCHW channel concat
    h = jnp.transpose(xy, (0, 2, 3, 1)).astype(jnp.bfloat16)  # NHWC bf16
    N = h.shape[0]

    # Layer 1: Conv(4,2,1)+bias + LeakyReLU(0.2)
    patches, OH, OW = _im2col(h, 4, 2, 1)
    h = _conv_bias_act(patches, params["w1"], params["b1"], "leaky",
                       block_rows, jnp.bfloat16).reshape(N, OH, OW, -1)

    # Blocks 2..4: Conv(4,2,1, no bias) + BatchNorm(train) + LeakyReLU(0.2)
    for idx in (2, 3, 4):
        patches, OH, OW = _im2col(h, 4, 2, 1)
        h = _conv_bn_leaky(patches, params[f"w{idx}"], params[f"g{idx}"],
                           params[f"beta{idx}"], block_rows).reshape(N, OH, OW, -1)

    # Layer 5: Conv(4,1,1)+bias + Sigmoid (output padded to 128 lanes in-kernel)
    patches, OH, OW = _im2col(h, 4, 1, 1)
    out = _conv_bias_act(patches, params["w5"], params["b5"], "sigmoid",
                         block_rows, jnp.float32).reshape(N, OH, OW, 1)
    return jnp.transpose(out, (0, 3, 1, 2))                  # NCHW


# ----------------------------------------------------------------------------
# Pure-JAX reference (same bf16 rounding points) for a self-check
# ----------------------------------------------------------------------------
def _reference_forward(params, x, y):
    xy = jnp.concatenate([x, y], axis=1)
    h = jnp.transpose(xy, (0, 2, 3, 1)).astype(jnp.bfloat16)
    N = h.shape[0]

    def conv(h, w, stride):
        patches, OH, OW = _im2col(h, 4, stride, 1)
        acc = jnp.dot(patches, w.astype(jnp.bfloat16),
                      preferred_element_type=jnp.float32)
        return acc, OH, OW

    acc, OH, OW = conv(h, params["w1"], 2)
    acc = acc + params["b1"][None, :]
    h = jnp.where(acc > 0, acc, _NEG_SLOPE * acc).astype(jnp.bfloat16)
    h = h.reshape(N, OH, OW, -1)

    for idx in (2, 3, 4):
        acc, OH, OW = conv(h, params[f"w{idx}"], 2)
        mean = jnp.mean(acc, axis=0, keepdims=True)
        var = jnp.mean(acc * acc, axis=0, keepdims=True) - mean * mean
        scale = params[f"g{idx}"][None, :] * jax.lax.rsqrt(var + _EPS)
        shift = params[f"beta{idx}"][None, :] - mean * scale
        acc = acc * scale + shift
        h = jnp.where(acc > 0, acc, _NEG_SLOPE * acc).astype(jnp.bfloat16)
        h = h.reshape(N, OH, OW, -1)

    acc, OH, OW = conv(h, params["w5"], 1)
    acc = jax.nn.sigmoid(acc + params["b5"][None, :])
    return jnp.transpose(acc.reshape(N, OH, OW, 1), (0, 3, 1, 2))


if __name__ == "__main__":
    key = jax.random.PRNGKey(0)
    k_params, k_x, k_y = jax.random.split(key, 3)

    in_channels, features = 3, 8          # small synthetic config
    N, H, W = 2, 32, 32                   # 32 -> 16 -> 8 -> 4 -> 2 -> 1

    params = init_discriminator_params(k_params, in_channels, features)
    x = jax.random.normal(k_x, (N, in_channels, H, W), jnp.float32)
    y = jax.random.normal(k_y, (N, in_channels, H, W), jnp.float32)

    # block_rows=64 so the multi-tile grid and the cross-tile BN stats
    # accumulation are exercised at this toy size; use 256-512 at realistic
    # image sizes (the 32 MiB VMEM limit still holds, including on v7x).
    fwd = jax.jit(functools.partial(discriminator_forward, block_rows=64))
    out = jax.block_until_ready(fwd(params, x, y))

    assert out.shape == (N, 1, 1, 1), out.shape
    assert bool(jnp.all(jnp.isfinite(out)))
    assert bool(jnp.all((out >= 0.0) & (out <= 1.0)))        # sigmoid range

    ref = jax.block_until_ready(jax.jit(_reference_forward)(params, x, y))
    max_err = float(jnp.max(jnp.abs(out - ref)))
    assert max_err < 1e-2, max_err

    print("KERNEL_OK")
</pallas_src>

<mosaic_0001>
module attributes {stable_mosaic.version = 11 : i64} {
  func.func @_conv_bias_act_kernel(%arg0: i32, %arg1: memref<64x128xbf16, #tpu.memory_space<vmem>>, %arg2: memref<128x128xbf16, #tpu.memory_space<vmem>>, %arg3: memref<1x128xf32, #tpu.memory_space<vmem>>, %arg4: memref<64x128xbf16, #tpu.memory_space<vmem>>) attributes {dimension_semantics = [#tpu.dimension_semantics<parallel>], iteration_bounds = array<i64: 8>, scalar_prefetch = 0 : i64, scratch_operands = 0 : i64, tpu.core_type = #tpu.core_type<tc>, window_params = [{transform_indices = @transform_0, window_bounds = array<i64: 64, 128>}, {pipeline_mode = #tpu.pipeline_mode<synchronous>, transform_indices = @transform_1, window_bounds = array<i64: 128, 128>}, {pipeline_mode = #tpu.pipeline_mode<synchronous>, transform_indices = @transform_2, window_bounds = array<i64: 1, 128>}, {transform_indices = @transform_3, window_bounds = array<i64: 64, 128>}]} {
    %c0 = arith.constant 0 : index
    %c0_0 = arith.constant 0 : index
    %0 = vector.load %arg1[%c0, %c0_0] : memref<64x128xbf16, #tpu.memory_space<vmem>>, vector<64x128xbf16>
    %c0_1 = arith.constant 0 : index
    %c0_2 = arith.constant 0 : index
    %1 = vector.load %arg2[%c0_1, %c0_2] : memref<128x128xbf16, #tpu.memory_space<vmem>>, vector<128x128xbf16>
    %cst = arith.constant dense<0.000000e+00> : vector<64x128xf32>
    %2 = tpu.matmul %0, %1, %cst {dimension_numbers = #tpu.dot_dimension_numbers<[1], [0], [0], [1], [0, 0, 1, 1], [], []>} : vector<64x128xbf16>, vector<128x128xbf16>, vector<64x128xf32> -> vector<64x128xf32>
    %c0_3 = arith.constant 0 : index
    %c0_4 = arith.constant 0 : index
    %3 = vector.load %arg3[%c0_3, %c0_4] : memref<1x128xf32, #tpu.memory_space<vmem>>, vector<1x128xf32>
    %4 = vector.broadcast %3 : vector<1x128xf32> to vector<64x128xf32>
    %5 = arith.addf %2, %4 : vector<64x128xf32>
    %cst_5 = arith.constant 0.000000e+00 : f32
    %6 = vector.broadcast %cst_5 : f32 to vector<64x128xf32>
    %7 = arith.cmpf ogt, %5, %6 : vector<64x128xf32>
    %cst_6 = arith.constant 2.000000e-01 : f32
    %8 = vector.broadcast %cst_6 : f32 to vector<64x128xf32>
    %9 = arith.mulf %8, %5 : vector<64x128xf32>
    %10 = arith.select %7, %5, %9 : vector<64x128xi1>, vector<64x128xf32>
    %11 = arith.truncf %10 : vector<64x128xf32> to vector<64x128xbf16>
    %c0_7 = arith.constant 0 : index
    %c0_8 = arith.constant 0 : index
    %12 = vector.load %arg4[%c0_7, %c0_8] : memref<64x128xbf16, #tpu.memory_space<vmem>>, vector<64x128xbf16>
    tpu.vector_store %arg4[%c0_7, %c0_8], %11 {strides = array<i32>} : memref<64x128xbf16, #tpu.memory_space<vmem>>, vector<64x128xbf16>,
    return
  }
  func.func @transform_0(%arg0: i32) -> (i32, i32) {
    %c0_i32 = arith.constant 0 : i32
    %c0_i32_0 = arith.constant 0 : i32
    return %arg0, %c0_i32 : i32, i32
  }
  func.func @transform_1(%arg0: i32) -> (i32, i32) {
    %c0_i32 = arith.constant 0 : i32
    %c0_i32_0 = arith.constant 0 : i32
    %c0_i32_1 = arith.constant 0 : i32
    return %c0_i32, %c0_i32_0 : i32, i32
  }
  func.func @transform_2(%arg0: i32) -> (i32, i32) {
    %c0_i32 = arith.constant 0 : i32
    %c0_i32_0 = arith.constant 0 : i32
    %c0_i32_1 = arith.constant 0 : i32
    return %c0_i32, %c0_i32_0 : i32, i32
  }
  func.func @transform_3(%arg0: i32) -> (i32, i32) {
    %c0_i32 = arith.constant 0 : i32
    %c0_i32_0 = arith.constant 0 : i32
    return %arg0, %c0_i32 : i32, i32
  }
}

module attributes {stable_mosaic.version = 11 : i64} {
  func.func @_conv_stats_kernel(%arg0: i32, %arg1: memref<64x128xbf16, #tpu.memory_space<vmem>>, %arg2: memref<128x128xbf16, #tpu.memory_space<vmem>>, %arg3: memref<64x128xf32, #tpu.memory_space<vmem>>, %arg4: memref<1x128xf32, #tpu.memory_space<vmem>>, %arg5: memref<1x128xf32, #tpu.memory_space<vmem>>) attributes {dimension_semantics = [#tpu.dimension_semantics<arbitrary>], iteration_bounds = array<i64: 2>, scalar_prefetch = 0 : i64, scratch_operands = 0 : i64, tpu.core_type = #tpu.core_type<tc>, window_params = [{transform_indices = @transform_0, window_bounds = array<i64: 64, 128>}, {pipeline_mode = #tpu.pipeline_mode<synchronous>, transform_indices = @transform_1, window_bounds = array<i64: 128, 128>}, {transform_indices = @transform_2, window_bounds = array<i64: 64, 128>}, {pipeline_mode = #tpu.pipeline_mode<synchronous>, transform_indices = @transform_3, window_bounds = array<i64: 1, 128>}, {pipeline_mode = #tpu.pipeline_mode<synchronous>, transform_indices = @transform_4, window_bounds = array<i64: 1, 128>}]} {
    %c0 = arith.constant 0 : index
    %c0_0 = arith.constant 0 : index
    %0 = vector.load %arg1[%c0, %c0_0] : memref<64x128xbf16, #tpu.memory_space<vmem>>, vector<64x128xbf16>
    %c0_1 = arith.constant 0 : index
    %c0_2 = arith.constant 0 : index
    %1 = vector.load %arg2[%c0_1, %c0_2] : memref<128x128xbf16, #tpu.memory_space<vmem>>, vector<128x128xbf16>
    %cst = arith.constant dense<0.000000e+00> : vector<64x128xf32>
    %2 = tpu.matmul %0, %1, %cst {dimension_numbers = #tpu.dot_dimension_numbers<[1], [0], [0], [1], [0, 0, 1, 1], [], []>} : vector<64x128xbf16>, vector<128x128xbf16>, vector<64x128xf32> -> vector<64x128xf32>
    %c0_3 = arith.constant 0 : index
    %c0_4 = arith.constant 0 : index
    %3 = vector.load %arg3[%c0_3, %c0_4] : memref<64x128xf32, #tpu.memory_space<vmem>>, vector<64x128xf32>
    tpu.vector_store %arg3[%c0_3, %c0_4], %2 {strides = array<i32>} : memref<64x128xf32, #tpu.memory_space<vmem>>, vector<64x128xf32>,
    %c0_i32 = arith.constant 0 : i32
    %4 = arith.cmpi eq, %arg0, %c0_i32 : i32
    %5 = arith.extui %4 : i1 to i32
    %c0_i32_5 = arith.constant 0 : i32
    %6 = arith.cmpi ne, %5, %c0_i32_5 : i32
    scf.if %6 {
      %cst_16 = arith.constant 0.000000e+00 : f32
      %18 = vector.broadcast %cst_16 : f32 to vector<1x128xf32>
      %c0_17 = arith.constant 0 : index
      %c0_18 = arith.constant 0 : index
      %19 = vector.load %arg4[%c0_17, %c0_18] : memref<1x128xf32, #tpu.memory_space<vmem>>, vector<1x128xf32>
      tpu.vector_store %arg4[%c0_17, %c0_18], %18 {strides = array<i32>} : memref<1x128xf32, #tpu.memory_space<vmem>>, vector<1x128xf32>,
      %cst_19 = arith.constant 0.000000e+00 : f32
      %20 = vector.broadcast %cst_19 : f32 to vector<1x128xf32>
      %c0_20 = arith.constant 0 : index
      %c0_21 = arith.constant 0 : index
      %21 = vector.load %arg5[%c0_20, %c0_21] : memref<1x128xf32, #tpu.memory_space<vmem>>, vector<1x128xf32>
      tpu.vector_store %arg5[%c0_20, %c0_21], %20 {strides = array<i32>} : memref<1x128xf32, #tpu.memory_space<vmem>>, vector<1x128xf32>,
    } else {
    }
    %c0_6 = arith.constant 0 : index
    %c0_7 = arith.constant 0 : index
    %7 = vector.load %arg4[%c0_6, %c0_7] : memref<1x128xf32, #tpu.memory_space<vmem>>, vector<1x128xf32>
    %cst_8 = arith.constant dense<0.000000e+00> : vector<128xf32>
    %8 = vector.multi_reduction <add>, %2, %cst_8 [0] : vector<64x128xf32> to vector<128xf32>
    %9 = vector.shape_cast %8 : vector<128xf32> to vector<1x128xf32>
    %10 = arith.addf %7, %9 : vector<1x128xf32>
    %c0_9 = arith.constant 0 : index
    %c0_10 = arith.constant 0 : index
    %11 = vector.load %arg4[%c0_9, %c0_10] : memref<1x128xf32, #tpu.memory_space<vmem>>, vector<1x128xf32>
    tpu.vector_store %arg4[%c0_9, %c0_10], %10 {strides = array<i32>} : memref<1x128xf32, #tpu.memory_space<vmem>>, vector<1x128xf32>,
    %c0_11 = arith.constant 0 : index
    %c0_12 = arith.constant 0 : index
    %12 = vector.load %arg5[%c0_11, %c0_12] : memref<1x128xf32, #tpu.memory_space<vmem>>, vector<1x128xf32>
    %13 = arith.mulf %2, %2 : vector<64x128xf32>
    %cst_13 = arith.constant dense<0.000000e+00> : vector<128xf32>
    %14 = vector.multi_reduction <add>, %13, %cst_13 [0] : vector<64x128xf32> to vector<128xf32>
    %15 = vector.shape_cast %14 : vector<128xf32> to vector<1x128xf32>
    %16 = arith.addf %12, %15 : vector<1x128xf32>
    %c0_14 = arith.constant 0 : index
    %c0_15 = arith.constant 0 : index
    %17 = vector.load %arg5[%c0_14, %c0_15] : memref<1x128xf32, #tpu.memory_space<vmem>>, vector<1x128xf32>
    tpu.vector_store %arg5[%c0_14, %c0_15], %16 {strides = array<i32>} : memref<1x128xf32, #tpu.memory_space<vmem>>, vector<1x128xf32>,
    return
  }
  func.func @transform_0(%arg0: i32) -> (i32, i32) {
    %c0_i32 = arith.constant 0 : i32
    %c0_i32_0 = arith.constant 0 : i32
    return %arg0, %c0_i32 : i32, i32
  }
  func.func @transform_1(%arg0: i32) -> (i32, i32) {
    %c0_i32 = arith.constant 0 : i32
    %c0_i32_0 = arith.constant 0 : i32
    %c0_i32_1 = arith.constant 0 : i32
    return %c0_i32, %c0_i32_0 : i32, i32
  }
  func.func @transform_2(%arg0: i32) -> (i32, i32) {
    %c0_i32 = arith.constant 0 : i32
    %c0_i32_0 = arith.constant 0 : i32
    return %arg0, %c0_i32 : i32, i32
  }
  func.func @transform_3(%arg0: i32) -> (i32, i32) {
    %c0_i32 = arith.constant 0 : i32
    %c0_i32_0 = arith.constant 0 : i32
    %c0_i32_1 = arith.constant 0 : i32
    return %c0_i32, %c0_i32_0 : i32, i32
  }
  func.func @transform_4(%arg0: i32) -> (i32, i32) {
    %c0_i32 = arith.constant 0 : i32
    %c0_i32_0 = arith.constant 0 : i32
    %c0_i32_1 = arith.constant 0 : i32
    return %c0_i32, %c0_i32_0 : i32, i32
  }
}

module attributes {stable_mosaic.version = 11 : i64} {
  func.func @_bn_apply_kernel(%arg0: i32, %arg1: memref<64x128xf32, #tpu.memory_space<vmem>>, %arg2: memref<1x128xf32, #tpu.memory_space<vmem>>, %arg3: memref<1x128xf32, #tpu.memory_space<vmem>>, %arg4: memref<2x128xf32, #tpu.memory_space<vmem>>, %arg5: memref<64x128xbf16, #tpu.memory_space<vmem>>) attributes {dimension_semantics = [#tpu.dimension_semantics<parallel>], iteration_bounds = array<i64: 2>, scalar_prefetch = 0 : i64, scratch_operands = 0 : i64, tpu.core_type = #tpu.core_type<tc>, window_params = [{transform_indices = @transform_0, window_bounds = array<i64: 64, 128>}, {pipeline_mode = #tpu.pipeline_mode<synchronous>, transform_indices = @transform_1, window_bounds = array<i64: 1, 128>}, {pipeline_mode = #tpu.pipeline_mode<synchronous>, transform_indices = @transform_2, window_bounds = array<i64: 1, 128>}, {pipeline_mode = #tpu.pipeline_mode<synchronous>, transform_indices = @transform_3, window_bounds = array<i64: 2, 128>}, {transform_indices = @transform_4, window_bounds = array<i64: 64, 128>}]} {
    %c0 = arith.constant 0 : index
    %c0_0 = arith.constant 0 : index
    %0 = vector.load %arg2[%c0, %c0_0] : memref<1x128xf32, #tpu.memory_space<vmem>>, vector<1x128xf32>
    %cst = arith.constant 7.812500e-03 : f32
    %1 = vector.broadcast %cst : f32 to vector<1x128xf32>
    %2 = arith.mulf %0, %1 : vector<1x128xf32>
    %c0_1 = arith.constant 0 : index
    %c0_2 = arith.constant 0 : index
    %3 = vector.load %arg3[%c0_1, %c0_2] : memref<1x128xf32, #tpu.memory_space<vmem>>, vector<1x128xf32>
    %cst_3 = arith.constant 7.812500e-03 : f32
    %4 = vector.broadcast %cst_3 : f32 to vector<1x128xf32>
    %5 = arith.mulf %3, %4 : vector<1x128xf32>
    %6 = arith.mulf %2, %2 : vector<1x128xf32>
    %7 = arith.subf %5, %6 : vector<1x128xf32>
    %c0_4 = arith.constant 0 : index
    %c0_5 = arith.constant 0 : index
    %8 = vector.load %arg4[%c0_4, %c0_5] : memref<2x128xf32, #tpu.memory_space<vmem>>, vector<2x128xf32>
    %9 = vector.extract_strided_slice %8 {offsets = [0, 0], sizes = [1, 128], strides = [1, 1]} : vector<2x128xf32> to vector<1x128xf32>
    %cst_6 = arith.constant 9.99999974E-6 : f32
    %10 = vector.broadcast %cst_6 : f32 to vector<1x128xf32>
    %11 = arith.addf %7, %10 : vector<1x128xf32>
    %12 = math.rsqrt %11 : vector<1x128xf32>
    %13 = arith.mulf %9, %12 : vector<1x128xf32>
    %14 = vector.extract_strided_slice %8 {offsets = [1, 0], sizes = [1, 128], strides = [1, 1]} : vector<2x128xf32> to vector<1x128xf32>
    %15 = arith.mulf %2, %13 : vector<1x128xf32>
    %16 = arith.subf %14, %15 : vector<1x128xf32>
    %c0_7 = arith.constant 0 : index
    %c0_8 = arith.constant 0 : index
    %17 = vector.load %arg1[%c0_7, %c0_8] : memref<64x128xf32, #tpu.memory_space<vmem>>, vector<64x128xf32>
    %18 = vector.broadcast %13 : vector<1x128xf32> to vector<64x128xf32>
    %19 = arith.mulf %17, %18 : vector<64x128xf32>
    %20 = vector.broadcast %16 : vector<1x128xf32> to vector<64x128xf32>
    %21 = arith.addf %19, %20 : vector<64x128xf32>
    %cst_9 = arith.constant 0.000000e+00 : f32
    %22 = vector.broadcast %cst_9 : f32 to vector<64x128xf32>
    %23 = arith.cmpf ogt, %21, %22 : vector<64x128xf32>
    %cst_10 = arith.constant 2.000000e-01 : f32
    %24 = vector.broadcast %cst_10 : f32 to vector<64x128xf32>
    %25 = arith.mulf %24, %21 : vector<64x128xf32>
    %26 = arith.select %23, %21, %25 : vector<64x128xi1>, vector<64x128xf32>
    %27 = arith.truncf %26 : vector<64x128xf32> to vector<64x128xbf16>
    %c0_11 = arith.constant 0 : index
    %c0_12 = arith.constant 0 : index
    %28 = vector.load %arg5[%c0_11, %c0_12] : memref<64x128xbf16, #tpu.memory_space<vmem>>, vector<64x128xbf16>
    tpu.vector_store %arg5[%c0_11, %c0_12], %27 {strides = array<i32>} : memref<64x128xbf16, #tpu.memory_space<vmem>>, vector<64x128xbf16>,
    return
  }
  func.func @transform_0(%arg0: i32) -> (i32, i32) {
    %c0_i32 = arith.constant 0 : i32
    %c0_i32_0 = arith.constant 0 : i32
    return %arg0, %c0_i32 : i32, i32
  }
  func.func @transform_1(%arg0: i32) -> (i32, i32) {
    %c0_i32 = arith.constant 0 : i32
    %c0_i32_0 = arith.constant 0 : i32
    %c0_i32_1 = arith.constant 0 : i32
    return %c0_i32, %c0_i32_0 : i32, i32
  }
  func.func @transform_2(%arg0: i32) -> (i32, i32) {
    %c0_i32 = arith.constant 0 : i32
    %c0_i32_0 = arith.constant 0 : i32
    %c0_i32_1 = arith.constant 0 : i32
    return %c0_i32, %c0_i32_0 : i32, i32
  }
  func.func @transform_3(%arg0: i32) -> (i32, i32) {
    %c0_i32 = arith.constant 0 : i32
    %c0_i32_0 = arith.constant 0 : i32
    %c0_i32_1 = arith.constant 0 : i32
    return %c0_i32, %c0_i32_0 : i32, i32
  }
  func.func @transform_4(%arg0: i32) -> (i32, i32) {
    %c0_i32 = arith.constant 0 : i32
    %c0_i32_0 = arith.constant 0 : i32
    return %arg0, %c0_i32 : i32, i32
  }
}

module attributes {stable_mosaic.version = 11 : i64} {
  func.func @_bn_apply_kernel(%arg0: i32, %arg1: memref<32x128xf32, #tpu.memory_space<vmem>>, %arg2: memref<1x128xf32, #tpu.memory_space<vmem>>, %arg3: memref<1x128xf32, #tpu.memory_space<vmem>>, %arg4: memref<2x128xf32, #tpu.memory_space<vmem>>, %arg5: memref<32x128xbf16, #tpu.memory_space<vmem>>) attributes {dimension_semantics = [#tpu.dimension_semantics<parallel>], iteration_bounds = array<i64: 1>, scalar_prefetch = 0 : i64, scratch_operands = 0 : i64, tpu.core_type = #tpu.core_type<tc>, window_params = [{transform_indices = @transform_0, window_bounds = array<i64: 32, 128>}, {pipeline_mode = #tpu.pipeline_mode<synchronous>, transform_indices = @transform_1, window_bounds = array<i64: 1, 128>}, {pipeline_mode = #tpu.pipeline_mode<synchronous>, transform_indices = @transform_2, window_bounds = array<i64: 1, 128>}, {pipeline_mode = #tpu.pipeline_mode<synchronous>, transform_indices = @transform_3, window_bounds = array<i64: 2, 128>}, {transform_indices = @transform_4, window_bounds = array<i64: 32, 128>}]} {
    %c0 = arith.constant 0 : index
    %c0_0 = arith.constant 0 : index
    %0 = vector.load %arg2[%c0, %c0_0] : memref<1x128xf32, #tpu.memory_space<vmem>>, vector<1x128xf32>
    %cst = arith.constant 3.125000e-02 : f32
    %1 = vector.broadcast %cst : f32 to vector<1x128xf32>
    %2 = arith.mulf %0, %1 : vector<1x128xf32>
    %c0_1 = arith.constant 0 : index
    %c0_2 = arith.constant 0 : index
    %3 = vector.load %arg3[%c0_1, %c0_2] : memref<1x128xf32, #tpu.memory_space<vmem>>, vector<1x128xf32>
    %cst_3 = arith.constant 3.125000e-02 : f32
    %4 = vector.broadcast %cst_3 : f32 to vector<1x128xf32>
    %5 = arith.mulf %3, %4 : vector<1x128xf32>
    %6 = arith.mulf %2, %2 : vector<1x128xf32>
    %7 = arith.subf %5, %6 : vector<1x128xf32>
    %c0_4 = arith.constant 0 : index
    %c0_5 = arith.constant 0 : index
    %8 = vector.load %arg4[%c0_4, %c0_5] : memref<2x128xf32, #tpu.memory_space<vmem>>, vector<2x128xf32>
    %9 = vector.extract_strided_slice %8 {offsets = [0, 0], sizes = [1, 128], strides = [1, 1]} : vector<2x128xf32> to vector<1x128xf32>
    %cst_6 = arith.constant 9.99999974E-6 : f32
    %10 = vector.broadcast %cst_6 : f32 to vector<1x128xf32>
    %11 = arith.addf %7, %10 : vector<1x128xf32>
    %12 = math.rsqrt %11 : vector<1x128xf32>
    %13 = arith.mulf %9, %12 : vector<1x128xf32>
    %14 = vector.extract_strided_slice %8 {offsets = [1, 0], sizes = [1, 128], strides = [1, 1]} : vector<2x128xf32> to vector<1x128xf32>
    %15 = arith.mulf %2, %13 : vector<1x128xf32>
    %16 = arith.subf %14, %15 : vector<1x128xf32>
    %c0_7 = arith.constant 0 : index
    %c0_8 = arith.constant 0 : index
    %17 = vector.load %arg1[%c0_7, %c0_8] : memref<32x128xf32, #tpu.memory_space<vmem>>, vector<32x128xf32>
    %18 = vector.broadcast %13 : vector<1x128xf32> to vector<32x128xf32>
    %19 = arith.mulf %17, %18 : vector<32x128xf32>
    %20 = vector.broadcast %16 : vector<1x128xf32> to vector<32x128xf32>
    %21 = arith.addf %19, %20 : vector<32x128xf32>
    %cst_9 = arith.constant 0.000000e+00 : f32
    %22 = vector.broadcast %cst_9 : f32 to vector<32x128xf32>
    %23 = arith.cmpf ogt, %21, %22 : vector<32x128xf32>
    %cst_10 = arith.constant 2.000000e-01 : f32
    %24 = vector.broadcast %cst_10 : f32 to vector<32x128xf32>
    %25 = arith.mulf %24, %21 : vector<32x128xf32>
    %26 = arith.select %23, %21, %25 : vector<32x128xi1>, vector<32x128xf32>
    %27 = arith.truncf %26 : vector<32x128xf32> to vector<32x128xbf16>
    %c0_11 = arith.constant 0 : index
    %c0_12 = arith.constant 0 : index
    %28 = vector.load %arg5[%c0_11, %c0_12] : memref<32x128xbf16, #tpu.memory_space<vmem>>, vector<32x128xbf16>
    tpu.vector_store %arg5[%c0_11, %c0_12], %27 {strides = array<i32>} : memref<32x128xbf16, #tpu.memory_space<vmem>>, vector<32x128xbf16>,
    return
  }
  func.func @transform_0(%arg0: i32) -> (i32, i32) {
    %c0_i32 = arith.constant 0 : i32
    %c0_i32_0 = arith.constant 0 : i32
    return %arg0, %c0_i32 : i32, i32
  }
  func.func @transform_1(%arg0: i32) -> (i32, i32) {
    %c0_i32 = arith.constant 0 : i32
    %c0_i32_0 = arith.constant 0 : i32
    %c0_i32_1 = arith.constant 0 : i32
    return %c0_i32, %c0_i32_0 : i32, i32
  }
  func.func @transform_2(%arg0: i32) -> (i32, i32) {
    %c0_i32 = arith.constant 0 : i32
    %c0_i32_0 = arith.constant 0 : i32
    %c0_i32_1 = arith.constant 0 : i32
    return %c0_i32, %c0_i32_0 : i32, i32
  }
  func.func @transform_3(%arg0: i32) -> (i32, i32) {
    %c0_i32 = arith.constant 0 : i32
    %c0_i32_0 = arith.constant 0 : i32
    %c0_i32_1 = arith.constant 0 : i32
    return %c0_i32, %c0_i32_0 : i32, i32
  }
  func.func @transform_4(%arg0: i32) -> (i32, i32) {
    %c0_i32 = arith.constant 0 : i32
    %c0_i32_0 = arith.constant 0 : i32
    return %arg0, %c0_i32 : i32, i32
  }
}

module attributes {stable_mosaic.version = 11 : i64} {
  func.func @_conv_stats_kernel(%arg0: i32, %arg1: memref<32x256xbf16, #tpu.memory_space<vmem>>, %arg2: memref<256x128xbf16, #tpu.memory_space<vmem>>, %arg3: memref<32x128xf32, #tpu.memory_space<vmem>>, %arg4: memref<1x128xf32, #tpu.memory_space<vmem>>, %arg5: memref<1x128xf32, #tpu.memory_space<vmem>>) attributes {dimension_semantics = [#tpu.dimension_semantics<arbitrary>], iteration_bounds = array<i64: 1>, scalar_prefetch = 0 : i64, scratch_operands = 0 : i64, tpu.core_type = #tpu.core_type<tc>, window_params = [{transform_indices = @transform_0, window_bounds = array<i64: 32, 256>}, {pipeline_mode = #tpu.pipeline_mode<synchronous>, transform_indices = @transform_1, window_bounds = array<i64: 256, 128>}, {transform_indices = @transform_2, window_bounds = array<i64: 32, 128>}, {pipeline_mode = #tpu.pipeline_mode<synchronous>, transform_indices = @transform_3, window_bounds = array<i64: 1, 128>}, {pipeline_mode = #tpu.pipeline_mode<synchronous>, transform_indices = @transform_4, window_bounds = array<i64: 1, 128>}]} {
    %c0 = arith.constant 0 : index
    %c0_0 = arith.constant 0 : index
    %0 = vector.load %arg1[%c0, %c0_0] : memref<32x256xbf16, #tpu.memory_space<vmem>>, vector<32x256xbf16>
    %c0_1 = arith.constant 0 : index
    %c0_2 = arith.constant 0 : index
    %1 = vector.load %arg2[%c0_1, %c0_2] : memref<256x128xbf16, #tpu.memory_space<vmem>>, vector<256x128xbf16>
    %cst = arith.constant dense<0.000000e+00> : vector<32x128xf32>
    %2 = tpu.matmul %0, %1, %cst {dimension_numbers = #tpu.dot_dimension_numbers<[1], [0], [0], [1], [0, 0, 1, 1], [], []>} : vector<32x256xbf16>, vector<256x128xbf16>, vector<32x128xf32> -> vector<32x128xf32>
    %c0_3 = arith.constant 0 : index
    %c0_4 = arith.constant 0 : index
    %3 = vector.load %arg3[%c0_3, %c0_4] : memref<32x128xf32, #tpu.memory_space<vmem>>, vector<32x128xf32>
    tpu.vector_store %arg3[%c0_3, %c0_4], %2 {strides = array<i32>} : memref<32x128xf32, #tpu.memory_space<vmem>>, vector<32x128xf32>,
    %c0_i32 = arith.constant 0 : i32
    %4 = arith.cmpi eq, %arg0, %c0_i32 : i32
    %5 = arith.extui %4 : i1 to i32
    %c0_i32_5 = arith.constant 0 : i32
    %6 = arith.cmpi ne, %5, %c0_i32_5 : i32
    scf.if %6 {
      %cst_16 = arith.constant 0.000000e+00 : f32
      %18 = vector.broadcast %cst_16 : f32 to vector<1x128xf32>
      %c0_17 = arith.constant 0 : index
      %c0_18 = arith.constant 0 : index
      %19 = vector.load %arg4[%c0_17, %c0_18] : memref<1x128xf32, #tpu.memory_space<vmem>>, vector<1x128xf32>
      tpu.vector_store %arg4[%c0_17, %c0_18], %18 {strides = array<i32>} : memref<1x128xf32, #tpu.memory_space<vmem>>, vector<1x128xf32>,
      %cst_19 = arith.constant 0.000000e+00 : f32
      %20 = vector.broadcast %cst_19 : f32 to vector<1x128xf32>
      %c0_20 = arith.constant 0 : index
      %c0_21 = arith.constant 0 : index
      %21 = vector.load %arg5[%c0_20, %c0_21] : memref<1x128xf32, #tpu.memory_space<vmem>>, vector<1x128xf32>
      tpu.vector_store %arg5[%c0_20, %c0_21], %20 {strides = array<i32>} : memref<1x128xf32, #tpu.memory_space<vmem>>, vector<1x128xf32>,
    } else {
    }
    %c0_6 = arith.constant 0 : index
    %c0_7 = arith.constant 0 : index
    %7 = vector.load %arg4[%c0_6, %c0_7] : memref<1x128xf32, #tpu.memory_space<vmem>>, vector<1x128xf32>
    %cst_8 = arith.constant dense<0.000000e+00> : vector<128xf32>
    %8 = vector.multi_reduction <add>, %2, %cst_8 [0] : vector<32x128xf32> to vector<128xf32>
    %9 = vector.shape_cast %8 : vector<128xf32> to vector<1x128xf32>
    %10 = arith.addf %7, %9 : vector<1x128xf32>
    %c0_9 = arith.constant 0 : index
    %c0_10 = arith.constant 0 : index
    %11 = vector.load %arg4[%c0_9, %c0_10] : memref<1x128xf32, #tpu.memory_space<vmem>>, vector<1x128xf32>
    tpu.vector_store %arg4[%c0_9, %c0_10], %10 {strides = array<i32>} : memref<1x128xf32, #tpu.memory_space<vmem>>, vector<1x128xf32>,
    %c0_11 = arith.constant 0 : index
    %c0_12 = arith.constant 0 : index
    %12 = vector.load %arg5[%c0_11, %c0_12] : memref<1x128xf32, #tpu.memory_space<vmem>>, vector<1x128xf32>
    %13 = arith.mulf %2, %2 : vector<32x128xf32>
    %cst_13 = arith.constant dense<0.000000e+00> : vector<128xf32>
    %14 = vector.multi_reduction <add>, %13, %cst_13 [0] : vector<32x128xf32> to vector<128xf32>
    %15 = vector.shape_cast %14 : vector<128xf32> to vector<1x128xf32>
    %16 = arith.addf %12, %15 : vector<1x128xf32>
    %c0_14 = arith.constant 0 : index
    %c0_15 = arith.constant 0 : index
    %17 = vector.load %arg5[%c0_14, %c0_15] : memref<1x128xf32, #tpu.memory_space<vmem>>, vector<1x128xf32>
    tpu.vector_store %arg5[%c0_14, %c0_15], %16 {strides = array<i32>} : memref<1x128xf32, #tpu.memory_space<vmem>>, vector<1x128xf32>,
    return
  }
  func.func @transform_0(%arg0: i32) -> (i32, i32) {
    %c0_i32 = arith.constant 0 : i32
    %c0_i32_0 = arith.constant 0 : i32
    return %arg0, %c0_i32 : i32, i32
  }
  func.func @transform_1(%arg0: i32) -> (i32, i32) {
    %c0_i32 = arith.constant 0 : i32
    %c0_i32_0 = arith.constant 0 : i32
    %c0_i32_1 = arith.constant 0 : i32
    return %c0_i32, %c0_i32_0 : i32, i32
  }
  func.func @transform_2(%arg0: i32) -> (i32, i32) {
    %c0_i32 = arith.constant 0 : i32
    %c0_i32_0 = arith.constant 0 : i32
    return %arg0, %c0_i32 : i32, i32
  }
  func.func @transform_3(%arg0: i32) -> (i32, i32) {
    %c0_i32 = arith.constant 0 : i32
    %c0_i32_0 = arith.constant 0 : i32
    %c0_i32_1 = arith.constant 0 : i32
    return %c0_i32, %c0_i32_0 : i32, i32
  }
  func.func @transform_4(%arg0: i32) -> (i32, i32) {
    %c0_i32 = arith.constant 0 : i32
    %c0_i32_0 = arith.constant 0 : i32
    %c0_i32_1 = arith.constant 0 : i32
    return %c0_i32, %c0_i32_0 : i32, i32
  }
}

module attributes {stable_mosaic.version = 11 : i64} {
  func.func @_conv_stats_kernel(%arg0: i32, %arg1: memref<8x512xbf16, #tpu.memory_space<vmem>>, %arg2: memref<512x128xbf16, #tpu.memory_space<vmem>>, %arg3: memref<8x128xf32, #tpu.memory_space<vmem>>, %arg4: memref<1x128xf32, #tpu.memory_space<vmem>>, %arg5: memref<1x128xf32, #tpu.memory_space<vmem>>) attributes {dimension_semantics = [#tpu.dimension_semantics<arbitrary>], iteration_bounds = array<i64: 1>, scalar_prefetch = 0 : i64, scratch_operands = 0 : i64, tpu.core_type = #tpu.core_type<tc>, window_params = [{transform_indices = @transform_0, window_bounds = array<i64: 8, 512>}, {pipeline_mode = #tpu.pipeline_mode<synchronous>, transform_indices = @transform_1, window_bounds = array<i64: 512, 128>}, {transform_indices = @transform_2, window_bounds = array<i64: 8, 128>}, {pipeline_mode = #tpu.pipeline_mode<synchronous>, transform_indices = @transform_3, window_bounds = array<i64: 1, 128>}, {pipeline_mode = #tpu.pipeline_mode<synchronous>, transform_indices = @transform_4, window_bounds = array<i64: 1, 128>}]} {
    %c0 = arith.constant 0 : index
    %c0_0 = arith.constant 0 : index
    %0 = vector.load %arg1[%c0, %c0_0] : memref<8x512xbf16, #tpu.memory_space<vmem>>, vector<8x512xbf16>
    %c0_1 = arith.constant 0 : index
    %c0_2 = arith.constant 0 : index
    %1 = vector.load %arg2[%c0_1, %c0_2] : memref<512x128xbf16, #tpu.memory_space<vmem>>, vector<512x128xbf16>
    %cst = arith.constant dense<0.000000e+00> : vector<8x128xf32>
    %2 = tpu.matmul %0, %1, %cst {dimension_numbers = #tpu.dot_dimension_numbers<[1], [0], [0], [1], [0, 0, 1, 1], [], []>} : vector<8x512xbf16>, vector<512x128xbf16>, vector<8x128xf32> -> vector<8x128xf32>
    %c0_3 = arith.constant 0 : index
    %c0_4 = arith.constant 0 : index
    %3 = vector.load %arg3[%c0_3, %c0_4] : memref<8x128xf32, #tpu.memory_space<vmem>>, vector<8x128xf32>
    tpu.vector_store %arg3[%c0_3, %c0_4], %2 {strides = array<i32>} : memref<8x128xf32, #tpu.memory_space<vmem>>, vector<8x128xf32>,
    %c0_i32 = arith.constant 0 : i32
    %4 = arith.cmpi eq, %arg0, %c0_i32 : i32
    %5 = arith.extui %4 : i1 to i32
    %c0_i32_5 = arith.constant 0 : i32
    %6 = arith.cmpi ne, %5, %c0_i32_5 : i32
    scf.if %6 {
      %cst_16 = arith.constant 0.000000e+00 : f32
      %18 = vector.broadcast %cst_16 : f32 to vector<1x128xf32>
      %c0_17 = arith.constant 0 : index
      %c0_18 = arith.constant 0 : index
      %19 = vector.load %arg4[%c0_17, %c0_18] : memref<1x128xf32, #tpu.memory_space<vmem>>, vector<1x128xf32>
      tpu.vector_store %arg4[%c0_17, %c0_18], %18 {strides = array<i32>} : memref<1x128xf32, #tpu.memory_space<vmem>>, vector<1x128xf32>,
      %cst_19 = arith.constant 0.000000e+00 : f32
      %20 = vector.broadcast %cst_19 : f32 to vector<1x128xf32>
      %c0_20 = arith.constant 0 : index
      %c0_21 = arith.constant 0 : index
      %21 = vector.load %arg5[%c0_20, %c0_21] : memref<1x128xf32, #tpu.memory_space<vmem>>, vector<1x128xf32>
      tpu.vector_store %arg5[%c0_20, %c0_21], %20 {strides = array<i32>} : memref<1x128xf32, #tpu.memory_space<vmem>>, vector<1x128xf32>,
    } else {
    }
    %c0_6 = arith.constant 0 : index
    %c0_7 = arith.constant 0 : index
    %7 = vector.load %arg4[%c0_6, %c0_7] : memref<1x128xf32, #tpu.memory_space<vmem>>, vector<1x128xf32>
    %cst_8 = arith.constant dense<0.000000e+00> : vector<128xf32>
    %8 = vector.multi_reduction <add>, %2, %cst_8 [0] : vector<8x128xf32> to vector<128xf32>
    %9 = vector.shape_cast %8 : vector<128xf32> to vector<1x128xf32>
    %10 = arith.addf %7, %9 : vector<1x128xf32>
    %c0_9 = arith.constant 0 : index
    %c0_10 = arith.constant 0 : index
    %11 = vector.load %arg4[%c0_9, %c0_10] : memref<1x128xf32, #tpu.memory_space<vmem>>, vector<1x128xf32>
    tpu.vector_store %arg4[%c0_9, %c0_10], %10 {strides = array<i32>} : memref<1x128xf32, #tpu.memory_space<vmem>>, vector<1x128xf32>,
    %c0_11 = arith.constant 0 : index
    %c0_12 = arith.constant 0 : index
    %12 = vector.load %arg5[%c0_11, %c0_12] : memref<1x128xf32, #tpu.memory_space<vmem>>, vector<1x128xf32>
    %13 = arith.mulf %2, %2 : vector<8x128xf32>
    %cst_13 = arith.constant dense<0.000000e+00> : vector<128xf32>
    %14 = vector.multi_reduction <add>, %13, %cst_13 [0] : vector<8x128xf32> to vector<128xf32>
    %15 = vector.shape_cast %14 : vector<128xf32> to vector<1x128xf32>
    %16 = arith.addf %12, %15 : vector<1x128xf32>
    %c0_14 = arith.constant 0 : index
    %c0_15 = arith.constant 0 : index
    %17 = vector.load %arg5[%c0_14, %c0_15] : memref<1x128xf32, #tpu.memory_space<vmem>>, vector<1x128xf32>
    tpu.vector_store %arg5[%c0_14, %c0_15], %16 {strides = array<i32>} : memref<1x128xf32, #tpu.memory_space<vmem>>, vector<1x128xf32>,
    return
  }
  func.func @transform_0(%arg0: i32) -> (i32, i32) {
    %c0_i32 = arith.constant 0 : i32
    %c0_i32_0 = arith.constant 0 : i32
    return %arg0, %c0_i32 : i32, i32
  }
  func.func @transform_1(%arg0: i32) -> (i32, i32) {
    %c0_i32 = arith.constant 0 : i32
    %c0_i32_0 = arith.constant 0 : i32
    %c0_i32_1 = arith.constant 0 : i32
    return %c0_i32, %c0_i32_0 : i32, i32
  }
  func.func @transform_2(%arg0: i32) -> (i32, i32) {
    %c0_i32 = arith.constant 0 : i32
    %c0_i32_0 = arith.constant 0 : i32
    return %arg0, %c0_i32 : i32, i32
  }
  func.func @transform_3(%arg0: i32) -> (i32, i32) {
    %c0_i32 = arith.constant 0 : i32
    %c0_i32_0 = arith.constant 0 : i32
    %c0_i32_1 = arith.constant 0 : i32
    return %c0_i32, %c0_i32_0 : i32, i32
  }
  func.func @transform_4(%arg0: i32) -> (i32, i32) {
    %c0_i32 = arith.constant 0 : i32
    %c0_i32_0 = arith.constant 0 : i32
    %c0_i32_1 = arith.constant 0 : i32
    return %c0_i32, %c0_i32_0 : i32, i32
  }
}

module attributes {stable_mosaic.version = 11 : i64} {
  func.func @_bn_apply_kernel(%arg0: i32, %arg1: memref<8x128xf32, #tpu.memory_space<vmem>>, %arg2: memref<1x128xf32, #tpu.memory_space<vmem>>, %arg3: memref<1x128xf32, #tpu.memory_space<vmem>>, %arg4: memref<2x128xf32, #tpu.memory_space<vmem>>, %arg5: memref<8x128xbf16, #tpu.memory_space<vmem>>) attributes {dimension_semantics = [#tpu.dimension_semantics<parallel>], iteration_bounds = array<i64: 1>, scalar_prefetch = 0 : i64, scratch_operands = 0 : i64, tpu.core_type = #tpu.core_type<tc>, window_params = [{transform_indices = @transform_0, window_bounds = array<i64: 8, 128>}, {pipeline_mode = #tpu.pipeline_mode<synchronous>, transform_indices = @transform_1, window_bounds = array<i64: 1, 128>}, {pipeline_mode = #tpu.pipeline_mode<synchronous>, transform_indices = @transform_2, window_bounds = array<i64: 1, 128>}, {pipeline_mode = #tpu.pipeline_mode<synchronous>, transform_indices = @transform_3, window_bounds = array<i64: 2, 128>}, {transform_indices = @transform_4, window_bounds = array<i64: 8, 128>}]} {
    %c0 = arith.constant 0 : index
    %c0_0 = arith.constant 0 : index
    %0 = vector.load %arg2[%c0, %c0_0] : memref<1x128xf32, #tpu.memory_space<vmem>>, vector<1x128xf32>
    %cst = arith.constant 1.250000e-01 : f32
    %1 = vector.broadcast %cst : f32 to vector<1x128xf32>
    %2 = arith.mulf %0, %1 : vector<1x128xf32>
    %c0_1 = arith.constant 0 : index
    %c0_2 = arith.constant 0 : index
    %3 = vector.load %arg3[%c0_1, %c0_2] : memref<1x128xf32, #tpu.memory_space<vmem>>, vector<1x128xf32>
    %cst_3 = arith.constant 1.250000e-01 : f32
    %4 = vector.broadcast %cst_3 : f32 to vector<1x128xf32>
    %5 = arith.mulf %3, %4 : vector<1x128xf32>
    %6 = arith.mulf %2, %2 : vector<1x128xf32>
    %7 = arith.subf %5, %6 : vector<1x128xf32>
    %c0_4 = arith.constant 0 : index
    %c0_5 = arith.constant 0 : index
    %8 = vector.load %arg4[%c0_4, %c0_5] : memref<2x128xf32, #tpu.memory_space<vmem>>, vector<2x128xf32>
    %9 = vector.extract_strided_slice %8 {offsets = [0, 0], sizes = [1, 128], strides = [1, 1]} : vector<2x128xf32> to vector<1x128xf32>
    %cst_6 = arith.constant 9.99999974E-6 : f32
    %10 = vector.broadcast %cst_6 : f32 to vector<1x128xf32>
    %11 = arith.addf %7, %10 : vector<1x128xf32>
    %12 = math.rsqrt %11 : vector<1x128xf32>
    %13 = arith.mulf %9, %12 : vector<1x128xf32>
    %14 = vector.extract_strided_slice %8 {offsets = [1, 0], sizes = [1, 128], strides = [1, 1]} : vector<2x128xf32> to vector<1x128xf32>
    %15 = arith.mulf %2, %13 : vector<1x128xf32>
    %16 = arith.subf %14, %15 : vector<1x128xf32>
    %c0_7 = arith.constant 0 : index
    %c0_8 = arith.constant 0 : index
    %17 = vector.load %arg1[%c0_7, %c0_8] : memref<8x128xf32, #tpu.memory_space<vmem>>, vector<8x128xf32>
    %18 = vector.broadcast %13 : vector<1x128xf32> to vector<8x128xf32>
    %19 = arith.mulf %17, %18 : vector<8x128xf32>
    %20 = vector.broadcast %16 : vector<1x128xf32> to vector<8x128xf32>
    %21 = arith.addf %19, %20 : vector<8x128xf32>
    %cst_9 = arith.constant 0.000000e+00 : f32
    %22 = vector.broadcast %cst_9 : f32 to vector<8x128xf32>
    %23 = arith.cmpf ogt, %21, %22 : vector<8x128xf32>
    %cst_10 = arith.constant 2.000000e-01 : f32
    %24 = vector.broadcast %cst_10 : f32 to vector<8x128xf32>
    %25 = arith.mulf %24, %21 : vector<8x128xf32>
    %26 = arith.select %23, %21, %25 : vector<8x128xi1>, vector<8x128xf32>
    %27 = arith.truncf %26 : vector<8x128xf32> to vector<8x128xbf16>
    %c0_11 = arith.constant 0 : index
    %c0_12 = arith.constant 0 : index
    %28 = vector.load %arg5[%c0_11, %c0_12] : memref<8x128xbf16, #tpu.memory_space<vmem>>, vector<8x128xbf16>
    tpu.vector_store %arg5[%c0_11, %c0_12], %27 {strides = array<i32>} : memref<8x128xbf16, #tpu.memory_space<vmem>>, vector<8x128xbf16>,
    return
  }
  func.func @transform_0(%arg0: i32) -> (i32, i32) {
    %c0_i32 = arith.constant 0 : i32
    %c0_i32_0 = arith.constant 0 : i32
    return %arg0, %c0_i32 : i32, i32
  }
  func.func @transform_1(%arg0: i32) -> (i32, i32) {
    %c0_i32 = arith.constant 0 : i32
    %c0_i32_0 = arith.constant 0 : i32
    %c0_i32_1 = arith.constant 0 : i32
    return %c0_i32, %c0_i32_0 : i32, i32
  }
  func.func @transform_2(%arg0: i32) -> (i32, i32) {
    %c0_i32 = arith.constant 0 : i32
    %c0_i32_0 = arith.constant 0 : i32
    %c0_i32_1 = arith.constant 0 : i32
    return %c0_i32, %c0_i32_0 : i32, i32
  }
  func.func @transform_3(%arg0: i32) -> (i32, i32) {
    %c0_i32 = arith.constant 0 : i32
    %c0_i32_0 = arith.constant 0 : i32
    %c0_i32_1 = arith.constant 0 : i32
    return %c0_i32, %c0_i32_0 : i32, i32
  }
  func.func @transform_4(%arg0: i32) -> (i32, i32) {
    %c0_i32 = arith.constant 0 : i32
    %c0_i32_0 = arith.constant 0 : i32
    return %arg0, %c0_i32 : i32, i32
  }
}

module attributes {stable_mosaic.version = 11 : i64} {
  func.func @_conv_bias_act_kernel(%arg0: i32, %arg1: memref<2x1024xbf16, #tpu.memory_space<vmem>>, %arg2: memref<1024x128xbf16, #tpu.memory_space<vmem>>, %arg3: memref<1x128xf32, #tpu.memory_space<vmem>>, %arg4: memref<2x128xf32, #tpu.memory_space<vmem>>) attributes {dimension_semantics = [#tpu.dimension_semantics<parallel>], iteration_bounds = array<i64: 1>, scalar_prefetch = 0 : i64, scratch_operands = 0 : i64, tpu.core_type = #tpu.core_type<tc>, window_params = [{transform_indices = @transform_0, window_bounds = array<i64: 2, 1024>}, {pipeline_mode = #tpu.pipeline_mode<synchronous>, transform_indices = @transform_1, window_bounds = array<i64: 1024, 128>}, {pipeline_mode = #tpu.pipeline_mode<synchronous>, transform_indices = @transform_2, window_bounds = array<i64: 1, 128>}, {transform_indices = @transform_3, window_bounds = array<i64: 2, 128>}]} {
    %c0 = arith.constant 0 : index
    %c0_0 = arith.constant 0 : index
    %0 = vector.load %arg1[%c0, %c0_0] : memref<2x1024xbf16, #tpu.memory_space<vmem>>, vector<2x1024xbf16>
    %c0_1 = arith.constant 0 : index
    %c0_2 = arith.constant 0 : index
    %1 = vector.load %arg2[%c0_1, %c0_2] : memref<1024x128xbf16, #tpu.memory_space<vmem>>, vector<1024x128xbf16>
    %cst = arith.constant dense<0.000000e+00> : vector<2x128xf32>
    %2 = tpu.matmul %0, %1, %cst {dimension_numbers = #tpu.dot_dimension_numbers<[1], [0], [0], [1], [0, 0, 1, 1], [], []>} : vector<2x1024xbf16>, vector<1024x128xbf16>, vector<2x128xf32> -> vector<2x128xf32>
    %c0_3 = arith.constant 0 : index
    %c0_4 = arith.constant 0 : index
    %3 = vector.load %arg3[%c0_3, %c0_4] : memref<1x128xf32, #tpu.memory_space<vmem>>, vector<1x128xf32>
    %4 = vector.broadcast %3 : vector<1x128xf32> to vector<2x128xf32>
    %5 = arith.addf %2, %4 : vector<2x128xf32>
    %6 = arith.negf %5 : vector<2x128xf32>
    %7 = math.exp %6 : vector<2x128xf32>
    %cst_5 = arith.constant 1.000000e+00 : f32
    %8 = vector.broadcast %cst_5 : f32 to vector<2x128xf32>
    %9 = arith.addf %8, %7 : vector<2x128xf32>
    %10 = arith.divf %8, %9 : vector<2x128xf32>
    %c0_6 = arith.constant 0 : index
    %c0_7 = arith.constant 0 : index
    %11 = vector.load %arg4[%c0_6, %c0_7] : memref<2x128xf32, #tpu.memory_space<vmem>>, vector<2x128xf32>
    tpu.vector_store %arg4[%c0_6, %c0_7], %10 {strides = array<i32>} : memref<2x128xf32, #tpu.memory_space<vmem>>, vector<2x128xf32>,
    return
  }
  func.func @transform_0(%arg0: i32) -> (i32, i32) {
    %c0_i32 = arith.constant 0 : i32
    %c0_i32_0 = arith.constant 0 : i32
    return %arg0, %c0_i32 : i32, i32
  }
  func.func @transform_1(%arg0: i32) -> (i32, i32) {
    %c0_i32 = arith.constant 0 : i32
    %c0_i32_0 = arith.constant 0 : i32
    %c0_i32_1 = arith.constant 0 : i32
    return %c0_i32, %c0_i32_0 : i32, i32
  }
  func.func @transform_2(%arg0: i32) -> (i32, i32) {
    %c0_i32 = arith.constant 0 : i32
    %c0_i32_0 = arith.constant 0 : i32
    %c0_i32_1 = arith.constant 0 : i32
    return %c0_i32, %c0_i32_0 : i32, i32
  }
  func.func @transform_3(%arg0: i32) -> (i32, i32) {
    %c0_i32 = arith.constant 0 : i32
    %c0_i32_0 = arith.constant 0 : i32
    return %arg0, %c0_i32 : i32, i32
  }
}

</mosaic_0001>

<llo_original>
// kernel: discriminator_forward.8
$region0: #{discriminator_forward.8}
  #allocation0 [shape = 'u32[]', space=smem, size = 0x4, offset = 0x4, fixed_abs, tag = 'smem constant byte address 0x4 - core index']
  #allocation1 [shape = 'u32[144,128]{1,0:T(1,128)}', space=vmem, size = 0x12000, scoped, tag = 'internal scratch']
  %s0 = inlined_call_operand.vmem [shape: bf16[512,128], index: 0, kind: input, shape index: {}]
  %s1 = inlined_call_operand.vmem [shape: bf16[128,128], index: 1, kind: input, shape index: {}]
  %s2 = inlined_call_operand.vmem [shape: f32[1,128], index: 2, kind: input, shape index: {}]
  %s3 = inlined_call_operand.vmem [shape: bf16[512,128], index: 3, kind: output, shape index: {}]
  %s4 = sld [smem:[#allocation0]]
  $region45: #{discriminator_forward.8} parent=0
    _
  %s6 = ssub.s32 1, %s4
  %s7 = scalar_select 0, %s6, %s4
  loop: start=0, step=1, limit=10
  $region2: #{discriminator_forward.8} parent=0 // loop_pre_header
    _
  $region3: #{discriminator_forward.8} parent=0 // loop_header
    %s9 = sphi 0, %s13
    %p10 = scmp.ge.s32.totalorder %s9, 10
    %s19 = sphi 0, %s21
    %s22 = sphi 0, %s19
    %s23 = sphi 0, %s22
    %s39 = sphi 0, %s23
    %s43 = sphi 0, %s43
    %s45 = sphi 0, %s43
    %s46 = sphi 0, %s45
    %s60 = sphi 0, %s46
    %s64 = sphi 0, %s64
    %s66 = sphi 0, %s64
    %s67 = sphi 0, %s66
    %s81 = sphi 0, %s67
    %s87 = sphi 0, %s89
    %s90 = sphi 0, %s87
    %s91 = sphi 0, %s90
    %s107 = sphi 0, %s91
  $region4: #{discriminator_forward.8} parent=0 // loop_header_branch
    %12 = sbr.rel (%p10) target = $region8
  $region5: #{discriminator_forward.8} parent=0 // loop_body
    %s14 = ssub.s32 %s9, 1
    %s15 = ssub.s32 %s9, 2
    %s16 = sadd.s32 %s9, 1
    %s17 = ssub.s32 %s9, %s16
    %p18 = scmp.eq.s32.totalorder %s17, 0
    %s20 = sadd.s32 %s19, 1
    %s21 = scalar_select %p18, %s19, %s20
    %p24 = pneg %p18
    %p25 = scmp.eq.s32.totalorder %s9, 7
    %p26 = por %p24, %p25
    %p27 = scmp.ne.s32.totalorder %s19, %s22
    %p28 = scmp.eq.s32.totalorder %s9, 0
    %p29 = por %p27, %p28
    %p30 = scmp.ne.s32.totalorder %s19, %s22
    %p31 = scmp.eq.s32.totalorder %s14, 7
    %p32 = por %p30, %p31
    %p33 = scmp.ne.s32.totalorder %s22, %s23
    %p34 = scmp.eq.s32.totalorder %s14, 0
    %p35 = por %p33, %p34
    %p36 = scmp.ne.s32.totalorder %s22, %s23
    %p37 = scmp.eq.s32.totalorder %s15, 7
    %p38 = por %p36, %p37
    %p40 = scmp.ne.s32.totalorder %s23, %s39
    %p41 = scmp.eq.s32.totalorder %s15, 0
    %p42 = por %p40, %p41
    %s44 = sadd.s32 %s43, 1
    %p47 = scmp.eq.s32.totalorder %s9, 7
    %p48 = scmp.ne.s32.totalorder %s43, %s45
    %p49 = scmp.eq.s32.totalorder %s9, 0
    %p50 = por %p48, %p49
    %p51 = scmp.ne.s32.totalorder %s43, %s45
    %p52 = scmp.eq.s32.totalorder %s14, 7
    %p53 = por %p51, %p52
    %p54 = scmp.ne.s32.totalorder %s45, %s46
    %p55 = scmp.eq.s32.totalorder %s14, 0
    %p56 = por %p54, %p55
    %p57 = scmp.ne.s32.totalorder %s45, %s46
    %p58 = scmp.eq.s32.totalorder %s15, 7
    %p59 = por %p57, %p58
    %p61 = scmp.ne.s32.totalorder %s46, %s60
    %p62 = scmp.eq.s32.totalorder %s15, 0
    %p63 = por %p61, %p62
    %s65 = sadd.s32 %s64, 1
    %p68 = scmp.eq.s32.totalorder %s9, 7
    %p69 = scmp.ne.s32.totalorder %s64, %s66
    %p70 = scmp.eq.s32.totalorder %s9, 0
    %p71 = por %p69, %p70
    %p72 = scmp.ne.s32.totalorder %s64, %s66
    %p73 = scmp.eq.s32.totalorder %s14, 7
    %p74 = por %p72, %p73
    %p75 = scmp.ne.s32.totalorder %s66, %s67
    %p76 = scmp.eq.s32.totalorder %s14, 0
    %p77 = por %p75, %p76
    %p78 = scmp.ne.s32.totalorder %s66, %s67
    %p79 = scmp.eq.s32.totalorder %s15, 7
    %p80 = por %p78, %p79
    %p82 = scmp.ne.s32.totalorder %s67, %s81
    %p83 = scmp.eq.s32.totalorder %s15, 0
    %p84 = por %p82, %p83
    %s85 = ssub.s32 %s9, %s16
    %p86 = scmp.eq.s32.totalorder %s85, 0
    %s88 = sadd.s32 %s87, 1
    %s89 = scalar_select %p86, %s87, %s88
    %p92 = pneg %p86
    %p93 = scmp.eq.s32.totalorder %s9, 7
    %p94 = por %p92, %p93
    %p95 = scmp.ne.s32.totalorder %s87, %s90
    %p96 = scmp.eq.s32.totalorder %s9, 0
    %p97 = por %p95, %p96
    %p98 = scmp.ne.s32.totalorder %s87, %s90
    %p99 = scmp.eq.s32.totalorder %s14, 7
    %p100 = por %p98, %p99
    %p101 = scmp.ne.s32.totalorder %s90, %s91
    %p102 = scmp.eq.s32.totalorder %s14, 0
    %p103 = por %p101, %p102
    %p104 = scmp.ne.s32.totalorder %s90, %s91
    %p105 = scmp.eq.s32.totalorder %s15, 7
    %p106 = por %p104, %p105
    %p108 = scmp.ne.s32.totalorder %s91, %s107
    %p109 = scmp.eq.s32.totalorder %s15, 0
    %p110 = por %p108, %p109
    %p111 = scmp.le.s32.totalorder 1, %s9
    %p112 = scmp.lt.s32.totalorder %s9, 9
    %p113 = pnand %p111, %p112
    %p114 = pneg %p113
    // Predicated region
    $region9: #{discriminator_forward.8} parent=5 // pred_check
      _
    $region10: #{discriminator_forward.8} parent=5 // pred_check_branch
      %116 = sbr.rel (%p113) target = $region12
    $region11: #{discriminator_forward.8} parent=5 // pred_region
      %s117 = ssub.s32 %s9, 1
      // Predicated region
      $region13: #{discriminator_forward.8} parent=11 // pred_check
        %p118 = pneg %p56
      $region14: #{discriminator_forward.8} parent=11 // pred_check_branch
        %120 = sbr.rel (%p118) target = $region16
      $region15: #{discriminator_forward.8} parent=11 // pred_region
        _
      $region16: #{discriminator_forward.8} parent=11 // pred_fallthru
        _
      // Predicated region
      $region17: #{discriminator_forward.8} parent=11 // pred_check
        %p121 = pneg %p77
      $region18: #{discriminator_forward.8} parent=11 // pred_check_branch
        %123 = sbr.rel (%p121) target = $region20
      $region19: #{discriminator_forward.8} parent=11 // pred_region
        _
      $region20: #{discriminator_forward.8} parent=11 // pred_fallthru
        _
    $region12: #{discriminator_forward.8} parent=5 // pred_fallthru
      _
    %p124 = scmp.lt.s32.totalorder %s9, 8
    // Predicated region
    $region21: #{discriminator_forward.8} parent=5 // pred_check
      %p125 = pneg %p124
    $region22: #{discriminator_forward.8} parent=5 // pred_check_branch
      %127 = sbr.rel (%p125) target = $region24
    $region23: #{discriminator_forward.8} parent=5 // pred_region
      // Predicated region
      $region25: #{discriminator_forward.8} parent=23 // pred_check
        %p128 = pneg %p29
      $region26: #{discriminator_forward.8} parent=23 // pred_check_branch
        %130 = sbr.rel (%p128) target = $region28
      $region27: #{discriminator_forward.8} parent=23 // pred_region
        %s131 = smul.u32 8, %s9
        %p132 = scmp.lt.s32.totalorder %s131, 63
        %s133 = scalar_select %p132, %s131, 63
        %s134 = smul.addr %s133, 4
        %s135 = scalar_lea.vmem %s0, %s134
        %s136 = smul.u32 8, %s9
      $region28: #{discriminator_forward.8} parent=23 // pred_fallthru
        _
    $region24: #{discriminator_forward.8} parent=5 // pred_fallthru
      _
    %p137 = scmp.le.s32.totalorder 1, %s9
    %p138 = scmp.lt.s32.totalorder %s9, 9
    %p139 = pnand %p137, %p138
    %p140 = pneg %p139
    // Predicated region
    $region29: #{discriminator_forward.8} parent=5 // pred_check
      _
    $region30: #{discriminator_forward.8} parent=5 // pred_check_branch
      %142 = sbr.rel (%p139) target = $region32
    $region31: #{discriminator_forward.8} parent=5 // pred_region
      %s143 = ssub.s32 %s9, 1
      %s144 = smul.u32 8, %s14
      %p145 = scmp.lt.s32.totalorder %s144, 63
      %s146 = scalar_select %p145, %s144, 63
      %s147 = smul.addr %s146, 4
      %s148 = scalar_lea.vmem %s0, %s147
      %p149 = pneg %p35
      %p150 = pneg %p32
      %p151 = pneg %p56
      %p152 = pneg %p53
      %p153 = pneg %p77
      %p154 = pneg %p74
      %p155 = pneg %p103
      %p156 = pneg %p100
      %s157 = smul.u32 8, %s14
      %p158 = scmp.lt.s32.totalorder %s157, 63
      %s159 = scalar_select %p158, %s157, 63
      %s160 = smul.addr %s159, 4
      %s161 = scalar_lea.vmem %s3, %s160
      %s162 = smul.u32 8, %s14
      %p163 = scmp.lt.s32.totalorder %s162, 63
      %s164 = scalar_select %p163, %s162, 63
      %s165 = smul.addr %s164, 4
      %s166 = scalar_lea.vmem %s0, %s165
      %s167 = smul.u32 8, %s14
      %s168 = smul.u32 8, %s14
      %p169 = scmp.lt.s32.totalorder %s168, 63
      %s170 = scalar_select %p169, %s168, 63
      %s171 = smul.addr %s170, 4
      %s172 = scalar_lea.vmem %s3, %s171
      %s173 = smul.u32 8, %s14
      %v175 = vld [vmem:[%s166] sm:$0xf]
      %v176 = vld [vmem:[%s166 + $0x4] sm:$0xf]
      %v177 = vld [vmem:[%s166 + $0x8] sm:$0xf]
      %v178 = vld [vmem:[%s166 + $0xc] sm:$0xf]
      %v179 = vld [vmem:[%s166 + $0x10] sm:$0xf]
      %v180 = vld [vmem:[%s166 + $0x14] sm:$0xf]
      %v181 = vld [vmem:[%s166 + $0x18] sm:$0xf]
      %v182 = vld [vmem:[%s166 + $0x1c] sm:$0xf]
      %v183 = vld [vmem:[%s1] sm:$0xf]
      %v184 = vld [vmem:[%s1 + $0x4] sm:$0xf]
      %v185 = vld [vmem:[%s1 + $0x8] sm:$0xf]
      %v186 = vld [vmem:[%s1 + $0xc] sm:$0xf]
      %v187 = vld [vmem:[%s1 + $0x10] sm:$0xf]
      %v188 = vld [vmem:[%s1 + $0x14] sm:$0xf]
      %v189 = vld [vmem:[%s1 + $0x18] sm:$0xf]
      %v190 = vld [vmem:[%s1 + $0x1c] sm:$0xf]
      %v191 = vld [vmem:[%s1 + $0x20] sm:$0xf]
      %v192 = vld [vmem:[%s1 + $0x24] sm:$0xf]
      %v193 = vld [vmem:[%s1 + $0x28] sm:$0xf]
      %v194 = vld [vmem:[%s1 + $0x2c] sm:$0xf]
      %v195 = vld [vmem:[%s1 + $0x30] sm:$0xf]
      %v196 = vld [vmem:[%s1 + $0x34] sm:$0xf]
      %v197 = vld [vmem:[%s1 + $0x38] sm:$0xf]
      %v198 = vld [vmem:[%s1 + $0x3c] sm:$0xf]
      %v199 = vld [vmem:[%s2] sm:$0x1]
      %v201 = vlaneseq
      %v202 = vshrl.u32 %v201, 7
      %v203 = vsub.s32 0, %v202
      %v204 = vrot.slane %v199, %v203
      %v214 = vunpack.c.l.b16 %v175
      %v215 = vunpack.c.l.b16 %v176
      %v216 = vunpack.c.l.b16 %v177
      %v217 = vunpack.c.l.b16 %v178
      %v218 = vunpack.c.l.b16 %v179
      %v219 = vunpack.c.l.b16 %v180
      %v220 = vunpack.c.l.b16 %v181
      %v221 = vunpack.c.l.b16 %v182
      %v222 = vpack.c.b16 %v215, %v214
      %v223 = vpack.c.b16 %v217, %v216
      %v224 = vpack.c.b16 %v219, %v218
      %v225 = vpack.c.b16 %v221, %v220
      %v246 = vunpack.c.l.b16 %v183
      %v247 = vunpack.c.l.b16 %v184
      %v248 = vunpack.c.l.b16 %v185
      %v249 = vunpack.c.l.b16 %v186
      %v250 = vunpack.c.l.b16 %v187
      %v251 = vunpack.c.l.b16 %v188
      %v252 = vunpack.c.l.b16 %v189
      %v253 = vunpack.c.l.b16 %v190
      %v254 = vunpack.c.l.b16 %v191
      %v255 = vunpack.c.l.b16 %v192
      %v256 = vunpack.c.l.b16 %v193
      %v257 = vunpack.c.l.b16 %v194
      %v258 = vunpack.c.l.b16 %v195
      %v259 = vunpack.c.l.b16 %v196
      %v260 = vunpack.c.l.b16 %v197
      %v261 = vunpack.c.l.b16 %v198
      %v262 = vpack.c.b16 %v247, %v246
      %v263 = vpack.c.b16 %v249, %v248
      %v264 = vpack.c.b16 %v251, %v250
      %v265 = vpack.c.b16 %v253, %v252
      %v266 = vpack.c.b16 %v255, %v254
      %v267 = vpack.c.b16 %v257, %v256
      %v268 = vpack.c.b16 %v259, %v258
      %v269 = vpack.c.b16 %v261, %v260
      %278 = vmatprep.subr.bf16.mxu0 0
      %279 = vmatpush1.bf16.msra.mxu0 %v262
      %280 = vmatprep.subr.bf16.mxu0 0
      %281 = vmatpush1.bf16.msra.mxu0 %v263
      %282 = vmatprep.subr.bf16.mxu0 0
      %283 = vmatpush1.bf16.msra.mxu0 %v264
      %284 = vmatprep.subr.bf16.mxu0 0
      %285 = vmatpush1.bf16.msra.mxu0 %v265
      %286 = vmatprep.subr.bf16.mxu0 0
      %287 = vmatpush1.bf16.msra.mxu0 %v266
      %288 = vmatprep.subr.bf16.mxu0 0
      %289 = vmatpush1.bf16.msra.mxu0 %v267
      %290 = vmatprep.subr.bf16.mxu0 0
      %291 = vmatpush1.bf16.msra.mxu0 %v268
      %292 = vmatprep.subr.bf16.mxu0 0
      %293 = vmatpush1.bf16.msra.mxu0 %v269
      %294 = vmatprep.subr.bf16.mxu0 0
      %295 = vmatpush1.bf16.msra.mxu0 0
      %296 = vmatprep.subr.bf16.mxu0 0
      %297 = vmatpush1.bf16.msra.mxu0 0
      %298 = vmatprep.subr.bf16.mxu0 0
      %299 = vmatpush1.bf16.msra.mxu0 0
      %300 = vmatprep.subr.bf16.mxu0 0
      %301 = vmatpush1.bf16.msra.mxu0 0
      %302 = vmatprep.subr.bf16.mxu0 0
      %303 = vmatpush1.bf16.msra.mxu0 0
      %304 = vmatprep.subr.bf16.mxu0 0
      %305 = vmatpush1.bf16.msra.mxu0 0
      %306 = vmatprep.subr.bf16.mxu0 0
      %307 = vmatpush1.bf16.msra.mxu0 0
      %308 = vmatprep.subr.bf16.mxu0 0
      %309 = vmatpush1.bf16.msra.mxu0 0
      %310 = vmatprep.mubr.bf16.mxu0 0
      %311 = vmatmul.mubr.bf16.gmra.mrb[0].mxu0 %v222
      %v312 = vpop.f32.mrb[0].mxu0
      %v313 = vadd.f32 %v204, %v312
      %v314 = vpop.f32.mrb[0].mxu0
      %v315 = vpop.f32.mrb[0].mxu0
      %v316 = vadd.f32 %v204, %v315
      %v317 = vpop.f32.mrb[0].mxu0
      %318 = vmatprep.mubr.bf16.mxu0 0
      %319 = vmatmul.mubr.bf16.gmra.mrb[0].mxu0 %v223
      %v320 = vpop.f32.mrb[0].mxu0
      %v321 = vadd.f32 %v204, %v320
      %v322 = vpop.f32.mrb[0].mxu0
      %v323 = vpop.f32.mrb[0].mxu0
      %v324 = vadd.f32 %v204, %v323
      %v325 = vpop.f32.mrb[0].mxu0
      %326 = vmatprep.mubr.bf16.mxu0 0
      %327 = vmatmul.mubr.bf16.gmra.mrb[0].mxu0 %v224
      %v328 = vpop.f32.mrb[0].mxu0
      %v329 = vadd.f32 %v204, %v328
      %v330 = vpop.f32.mrb[0].mxu0
      %v331 = vpop.f32.mrb[0].mxu0
      %v332 = vadd.f32 %v204, %v331
      %v333 = vpop.f32.mrb[0].mxu0
      %334 = vmatprep.mubr.bf16.mxu0 0
      %335 = vmatmul.mubr.bf16.gmra.mrb[0].mxu0 %v225
      %v336 = vpop.f32.mrb[0].mxu0
      %v337 = vadd.f32 %v204, %v336
      %v338 = vpop.f32.mrb[0].mxu0
      %v339 = vpop.f32.mrb[0].mxu0
      %v340 = vadd.f32 %v204, %v339
      %v341 = vpop.f32.mrb[0].mxu0
      %342 = vdwg.mxu0
      %vm343 = vcmp.gt.f32.partialorder %v313, 0.0
      %vm344 = vcmp.gt.f32.partialorder %v316, 0.0
      %vm345 = vcmp.gt.f32.partialorder %v321, 0.0
      %vm346 = vcmp.gt.f32.partialorder %v324, 0.0
      %vm347 = vcmp.gt.f32.partialorder %v329, 0.0
      %vm348 = vcmp.gt.f32.partialorder %v332, 0.0
      %vm349 = vcmp.gt.f32.partialorder %v337, 0.0
      %vm350 = vcmp.gt.f32.partialorder %v340, 0.0
      %v351 = vmul.f32 %v313, 0.2
      %v352 = vmul.f32 %v316, 0.2
      %v353 = vmul.f32 %v321, 0.2
      %v354 = vmul.f32 %v324, 0.2
      %v355 = vmul.f32 %v329, 0.2
      %v356 = vmul.f32 %v332, 0.2
      %v357 = vmul.f32 %v337, 0.2
      %v358 = vmul.f32 %v340, 0.2
      %v359 = vsel %vm343, %v313, %v351
      %v360 = vsel %vm344, %v316, %v352
      %v361 = vsel %vm345, %v321, %v353
      %v362 = vsel %vm346, %v324, %v354
      %v363 = vsel %vm347, %v329, %v355
      %v364 = vsel %vm348, %v332, %v356
      %v365 = vsel %vm349, %v337, %v357
      %v366 = vsel %vm350, %v340, %v358
      %v367 = vpack.c.bf16 %v360, %v359
      %v368 = vpack.c.bf16 %v362, %v361
      %v369 = vpack.c.bf16 %v364, %v363
      %v370 = vpack.c.bf16 %v366, %v365
      %v375 = vunpack.c.l.b16 %v367
      %v376 = vunpack.c.h.b16 %v367
      %v377 = vunpack.c.l.b16 %v368
      %v378 = vunpack.c.h.b16 %v368
      %v379 = vunpack.c.l.b16 %v369
      %v380 = vunpack.c.h.b16 %v369
      %v381 = vunpack.c.l.b16 %v370
      %v382 = vunpack.c.h.b16 %v370
      %v383 = vpack.c.b16 %v375, %v375
      %v384 = vpack.c.b16 %v376, %v376
      %v385 = vpack.c.b16 %v377, %v377
      %v386 = vpack.c.b16 %v378, %v378
      %v387 = vpack.c.b16 %v379, %v379
      %v388 = vpack.c.b16 %v380, %v380
      %v389 = vpack.c.b16 %v381, %v381
      %v390 = vpack.c.b16 %v382, %v382
      %399 = vst [vmem:[%s172] sm:$0xf] %v383
      %400 = vst [vmem:[%s172 + $0x4] sm:$0xf] %v384
      %401 = vst [vmem:[%s172 + $0x8] sm:$0xf] %v385
      %402 = vst [vmem:[%s172 + $0xc] sm:$0xf] %v386
      %403 = vst [vmem:[%s172 + $0x10] sm:$0xf] %v387
      %404 = vst [vmem:[%s172 + $0x14] sm:$0xf] %v388
      %405 = vst [vmem:[%s172 + $0x18] sm:$0xf] %v389
      %406 = vst [vmem:[%s172 + $0x1c] sm:$0xf] %v390
      %s407 = smul.u32 8, %s14
      %p408 = scmp.lt.s32.totalorder %s407, 63
      %s409 = scalar_select %p408, %s407, 63
      %s410 = smul.addr %s409, 4
      %s411 = scalar_lea.vmem %s3, %s410
      // Predicated region
      $region33: #{discriminator_forward.8} parent=31 // pred_check
        %p412 = pneg %p100
      $region34: #{discriminator_forward.8} parent=31 // pred_check_branch
        %414 = sbr.rel (%p412) target = $region36
      $region35: #{discriminator_forward.8} parent=31 // pred_region
        %s415 = smul.u32 8, %s14
      $region36: #{discriminator_forward.8} parent=31 // pred_fallthru
        _
    $region32: #{discriminator_forward.8} parent=5 // pred_fallthru
      _
    %p416 = scmp.le.s32.totalorder 2, %s9
    // Predicated region
    $region37: #{discriminator_forward.8} parent=5 // pred_check
      %p417 = pneg %p416
    $region38: #{discriminator_forward.8} parent=5 // pred_check_branch
      %419 = sbr.rel (%p417) target = $region40
    $region39: #{discriminator_forward.8} parent=5 // pred_region
      %s420 = ssub.s32 %s9, 2
      // Predicated region
      $region41: #{discriminator_forward.8} parent=39 // pred_check
        %p421 = pneg %p106
      $region42: #{discriminator_forward.8} parent=39 // pred_check_branch
        %423 = sbr.rel (%p421) target = $region44
      $region43: #{discriminator_forward.8} parent=39 // pred_region
        %s424 = smul.u32 8, %s15
        %p425 = scmp.lt.s32.totalorder %s424, 63
        %s426 = scalar_select %p425, %s424, 63
        %s427 = smul.addr %s426, 4
        %s428 = scalar_lea.vmem %s3, %s427
      $region44: #{discriminator_forward.8} parent=39 // pred_fallthru
        _
    $region40: #{discriminator_forward.8} parent=5 // pred_fallthru
      _
  $region6: #{discriminator_forward.8} parent=0 // loop_footer
    %s13 = sadd.s32 1, %s9
  $region7: #{discriminator_forward.8} parent=0 // loop_footer_branch
    %8 = sbr.rel target = $region3
  $region8: #{discriminator_forward.8} parent=0 // loop_exit
    _

// kernel: discriminator_forward.9
$region0: #{discriminator_forward.9}
  #allocation0 [shape = 'u32[]', space=smem, size = 0x4, offset = 0x4, fixed_abs, tag = 'smem constant byte address 0x4 - core index']
  #allocation1 [shape = 'u32[144,128]{1,0:T(1,128)}', space=vmem, size = 0x12000, scoped, tag = 'internal scratch']
  %s0 = inlined_call_operand.vmem [shape: bf16[128,128], index: 0, kind: input, shape index: {}]
  %s1 = inlined_call_operand.vmem [shape: bf16[128,128], index: 1, kind: input, shape index: {}]
  %s2 = inlined_call_operand.vmem [shape: f32[128,128], index: 2, kind: output, shape index: {0}]
  %s3 = inlined_call_operand.vmem [shape: f32[1,128], index: 3, kind: output, shape index: {1}]
  %s4 = inlined_call_operand.vmem [shape: f32[1,128], index: 4, kind: output, shape index: {2}]
  %5 = xla_tuple %s2, %s3, %s4
  %s6 = sld [smem:[#allocation0]]
  $region61: #{discriminator_forward.9} parent=0
    _
  %s8 = ssub.s32 1, %s6
  %s9 = scalar_select 0, %s8, %s6
  loop: start=0, step=1, limit=4
  $region2: #{discriminator_forward.9} parent=0 // loop_pre_header
    _
  $region3: #{discriminator_forward.9} parent=0 // loop_header
    %s11 = sphi 0, %s15
    %p12 = scmp.ge.s32.totalorder %s11, 4
    %s21 = sphi 0, %s23
    %s24 = sphi 0, %s21
    %s25 = sphi 0, %s24
    %s41 = sphi 0, %s25
    %s45 = sphi 0, %s45
    %s47 = sphi 0, %s45
    %s48 = sphi 0, %s47
    %s62 = sphi 0, %s48
    %s68 = sphi 0, %s70
    %s71 = sphi 0, %s68
    %s72 = sphi 0, %s71
    %s88 = sphi 0, %s72
    %s92 = sphi 0, %s92
    %s94 = sphi 0, %s92
    %s95 = sphi 0, %s94
    %s109 = sphi 0, %s95
    %s113 = sphi 0, %s113
    %s115 = sphi 0, %s113
    %s116 = sphi 0, %s115
    %s130 = sphi 0, %s116
  $region4: #{discriminator_forward.9} parent=0 // loop_header_branch
    %14 = sbr.rel (%p12) target = $region8
  $region5: #{discriminator_forward.9} parent=0 // loop_body
    %s16 = ssub.s32 %s11, 1
    %s17 = ssub.s32 %s11, 2
    %s18 = sadd.s32 %s11, 1
    %s19 = ssub.s32 %s11, %s18
    %p20 = scmp.eq.s32.totalorder %s19, 0
    %s22 = sadd.s32 %s21, 1
    %s23 = scalar_select %p20, %s21, %s22
    %p26 = pneg %p20
    %p27 = scmp.eq.s32.totalorder %s11, 1
    %p28 = por %p26, %p27
    %p29 = scmp.ne.s32.totalorder %s21, %s24
    %p30 = scmp.eq.s32.totalorder %s11, 0
    %p31 = por %p29, %p30
    %p32 = scmp.ne.s32.totalorder %s21, %s24
    %p33 = scmp.eq.s32.totalorder %s16, 1
    %p34 = por %p32, %p33
    %p35 = scmp.ne.s32.totalorder %s24, %s25
    %p36 = scmp.eq.s32.totalorder %s16, 0
    %p37 = por %p35, %p36
    %p38 = scmp.ne.s32.totalorder %s24, %s25
    %p39 = scmp.eq.s32.totalorder %s17, 1
    %p40 = por %p38, %p39
    %p42 = scmp.ne.s32.totalorder %s25, %s41
    %p43 = scmp.eq.s32.totalorder %s17, 0
    %p44 = por %p42, %p43
    %s46 = sadd.s32 %s45, 1
    %p49 = scmp.eq.s32.totalorder %s11, 1
    %p50 = scmp.ne.s32.totalorder %s45, %s47
    %p51 = scmp.eq.s32.totalorder %s11, 0
    %p52 = por %p50, %p51
    %p53 = scmp.ne.s32.totalorder %s45, %s47
    %p54 = scmp.eq.s32.totalorder %s16, 1
    %p55 = por %p53, %p54
    %p56 = scmp.ne.s32.totalorder %s47, %s48
    %p57 = scmp.eq.s32.totalorder %s16, 0
    %p58 = por %p56, %p57
    %p59 = scmp.ne.s32.totalorder %s47, %s48
    %p60 = scmp.eq.s32.totalorder %s17, 1
    %p61 = por %p59, %p60
    %p63 = scmp.ne.s32.totalorder %s48, %s62
    %p64 = scmp.eq.s32.totalorder %s17, 0
    %p65 = por %p63, %p64
    %s66 = ssub.s32 %s11, %s18
    %p67 = scmp.eq.s32.totalorder %s66, 0
    %s69 = sadd.s32 %s68, 1
    %s70 = scalar_select %p67, %s68, %s69
    %p73 = pneg %p67
    %p74 = scmp.eq.s32.totalorder %s11, 1
    %p75 = por %p73, %p74
    %p76 = scmp.ne.s32.totalorder %s68, %s71
    %p77 = scmp.eq.s32.totalorder %s11, 0
    %p78 = por %p76, %p77
    %p79 = scmp.ne.s32.totalorder %s68, %s71
    %p80 = scmp.eq.s32.totalorder %s16, 1
    %p81 = por %p79, %p80
    %p82 = scmp.ne.s32.totalorder %s71, %s72
    %p83 = scmp.eq.s32.totalorder %s16, 0
    %p84 = por %p82, %p83
    %p85 = scmp.ne.s32.totalorder %s71, %s72
    %p86 = scmp.eq.s32.totalorder %s17, 1
    %p87 = por %p85, %p86
    %p89 = scmp.ne.s32.totalorder %s72, %s88
    %p90 = scmp.eq.s32.totalorder %s17, 0
    %p91 = por %p89, %p90
    %s93 = sadd.s32 %s92, 1
    %p96 = scmp.eq.s32.totalorder %s11, 1
    %p97 = scmp.ne.s32.totalorder %s92, %s94
    %p98 = scmp.eq.s32.totalorder %s11, 0
    %p99 = por %p97, %p98
    %p100 = scmp.ne.s32.totalorder %s92, %s94
    %p101 = scmp.eq.s32.totalorder %s16, 1
    %p102 = por %p100, %p101
    %p103 = scmp.ne.s32.totalorder %s94, %s95
    %p104 = scmp.eq.s32.totalorder %s16, 0
    %p105 = por %p103, %p104
    %p106 = scmp.ne.s32.totalorder %s94, %s95
    %p107 = scmp.eq.s32.totalorder %s17, 1
    %p108 = por %p106, %p107
    %p110 = scmp.ne.s32.totalorder %s95, %s109
    %p111 = scmp.eq.s32.totalorder %s17, 0
    %p112 = por %p110, %p111
    %s114 = sadd.s32 %s113, 1
    %p117 = scmp.eq.s32.totalorder %s11, 1
    %p118 = scmp.ne.s32.totalorder %s113, %s115
    %p119 = scmp.eq.s32.totalorder %s11, 0
    %p120 = por %p118, %p119
    %p121 = scmp.ne.s32.totalorder %s113, %s115
    %p122 = scmp.eq.s32.totalorder %s16, 1
    %p123 = por %p121, %p122
    %p124 = scmp.ne.s32.totalorder %s115, %s116
    %p125 = scmp.eq.s32.totalorder %s16, 0
    %p126 = por %p124, %p125
    %p127 = scmp.ne.s32.totalorder %s115, %s116
    %p128 = scmp.eq.s32.totalorder %s17, 1
    %p129 = por %p127, %p128
    %p131 = scmp.ne.s32.totalorder %s116, %s130
    %p132 = scmp.eq.s32.totalorder %s17, 0
    %p133 = por %p131, %p132
    %p134 = scmp.le.s32.totalorder 1, %s11
    %p135 = scmp.lt.s32.totalorder %s11, 3
    %p136 = pnand %p134, %p135
    %p137 = pneg %p136
    // Predicated region
    $region9: #{discriminator_forward.9} parent=5 // pred_check
      _
    $region10: #{discriminator_forward.9} parent=5 // pred_check_branch
      %139 = sbr.rel (%p136) target = $region12
    $region11: #{discriminator_forward.9} parent=5 // pred_region
      %s140 = ssub.s32 %s11, 1
      // Predicated region
      $region13: #{discriminator_forward.9} parent=11 // pred_check
        %p141 = pneg %p58
      $region14: #{discriminator_forward.9} parent=11 // pred_check_branch
        %143 = sbr.rel (%p141) target = $region16
      $region15: #{discriminator_forward.9} parent=11 // pred_region
        _
      $region16: #{discriminator_forward.9} parent=11 // pred_fallthru
        _
    $region12: #{discriminator_forward.9} parent=5 // pred_fallthru
      _
    %p144 = scmp.lt.s32.totalorder %s11, 2
    // Predicated region
    $region17: #{discriminator_forward.9} parent=5 // pred_check
      %p145 = pneg %p144
    $region18: #{discriminator_forward.9} parent=5 // pred_check_branch
      %147 = sbr.rel (%p145) target = $region20
    $region19: #{discriminator_forward.9} parent=5 // pred_region
      // Predicated region
      $region21: #{discriminator_forward.9} parent=19 // pred_check
        %p148 = pneg %p31
      $region22: #{discriminator_forward.9} parent=19 // pred_check_branch
        %150 = sbr.rel (%p148) target = $region24
      $region23: #{discriminator_forward.9} parent=19 // pred_region
        %s151 = smul.u32 8, %s11
        %p152 = scmp.lt.s32.totalorder %s151, 15
        %s153 = scalar_select %p152, %s151, 15
        %s154 = smul.addr %s153, 4
        %s155 = scalar_lea.vmem %s0, %s154
        %s156 = smul.u32 8, %s11
      $region24: #{discriminator_forward.9} parent=19 // pred_fallthru
        _
    $region20: #{discriminator_forward.9} parent=5 // pred_fallthru
      _
    %p157 = scmp.le.s32.totalorder 1, %s11
    %p158 = scmp.lt.s32.totalorder %s11, 3
    %p159 = pnand %p157, %p158
    %p160 = pneg %p159
    // Predicated region
    $region25: #{discriminator_forward.9} parent=5 // pred_check
      _
    $region26: #{discriminator_forward.9} parent=5 // pred_check_branch
      %162 = sbr.rel (%p159) target = $region28
    $region27: #{discriminator_forward.9} parent=5 // pred_region
      %s163 = ssub.s32 %s11, 1
      %s164 = smul.u32 8, %s16
      %p165 = scmp.lt.s32.totalorder %s164, 15
      %s166 = scalar_select %p165, %s164, 15
      %s167 = smul.addr %s166, 4
      %s168 = scalar_lea.vmem %s0, %s167
      %p169 = pneg %p37
      %p170 = pneg %p34
      %p171 = pneg %p58
      %p172 = pneg %p55
      %p173 = pneg %p84
      %p174 = pneg %p81
      %s175 = smul.u32 8, %s16
      %p176 = scmp.lt.s32.totalorder %s175, 15
      %s177 = scalar_select %p176, %s175, 15
      %s178 = smul.addr %s177, 8
      %s179 = scalar_lea.vmem %s2, %s178
      %p180 = pneg %p105
      %p181 = pneg %p102
      %p182 = pneg %p126
      %p183 = pneg %p123
      %s184 = smul.u32 8, %s16
      %p185 = scmp.lt.s32.totalorder %s184, 15
      %s186 = scalar_select %p185, %s184, 15
      %s187 = smul.addr %s186, 4
      %s188 = scalar_lea.vmem %s0, %s187
      %s189 = smul.u32 8, %s16
      %s190 = smul.u32 8, %s16
      %p191 = scmp.lt.s32.totalorder %s190, 15
      %s192 = scalar_select %p191, %s190, 15
      %s193 = smul.addr %s192, 8
      %s194 = scalar_lea.vmem %s2, %s193
      %s195 = smul.u32 8, %s16
      %v197 = vld [vmem:[%s188] sm:$0xf]
      %v198 = vld [vmem:[%s188 + $0x4] sm:$0xf]
      %v199 = vld [vmem:[%s188 + $0x8] sm:$0xf]
      %v200 = vld [vmem:[%s188 + $0xc] sm:$0xf]
      %v201 = vld [vmem:[%s188 + $0x10] sm:$0xf]
      %v202 = vld [vmem:[%s188 + $0x14] sm:$0xf]
      %v203 = vld [vmem:[%s188 + $0x18] sm:$0xf]
      %v204 = vld [vmem:[%s188 + $0x1c] sm:$0xf]
      %v205 = vld [vmem:[%s1] sm:$0xf]
      %v206 = vld [vmem:[%s1 + $0x4] sm:$0xf]
      %v207 = vld [vmem:[%s1 + $0x8] sm:$0xf]
      %v208 = vld [vmem:[%s1 + $0xc] sm:$0xf]
      %v209 = vld [vmem:[%s1 + $0x10] sm:$0xf]
      %v210 = vld [vmem:[%s1 + $0x14] sm:$0xf]
      %v211 = vld [vmem:[%s1 + $0x18] sm:$0xf]
      %v212 = vld [vmem:[%s1 + $0x1c] sm:$0xf]
      %v213 = vld [vmem:[%s1 + $0x20] sm:$0xf]
      %v214 = vld [vmem:[%s1 + $0x24] sm:$0xf]
      %v215 = vld [vmem:[%s1 + $0x28] sm:$0xf]
      %v216 = vld [vmem:[%s1 + $0x2c] sm:$0xf]
      %v217 = vld [vmem:[%s1 + $0x30] sm:$0xf]
      %v218 = vld [vmem:[%s1 + $0x34] sm:$0xf]
      %v219 = vld [vmem:[%s1 + $0x38] sm:$0xf]
      %v220 = vld [vmem:[%s1 + $0x3c] sm:$0xf]
      %v229 = vunpack.c.l.b16 %v197
      %v230 = vunpack.c.l.b16 %v198
      %v231 = vunpack.c.l.b16 %v199
      %v232 = vunpack.c.l.b16 %v200
      %v233 = vunpack.c.l.b16 %v201
      %v234 = vunpack.c.l.b16 %v202
      %v235 = vunpack.c.l.b16 %v203
      %v236 = vunpack.c.l.b16 %v204
      %v237 = vpack.c.b16 %v230, %v229
      %v238 = vpack.c.b16 %v232, %v231
      %v239 = vpack.c.b16 %v234, %v233
      %v240 = vpack.c.b16 %v236, %v235
      %v261 = vunpack.c.l.b16 %v205
      %v262 = vunpack.c.l.b16 %v206
      %v263 = vunpack.c.l.b16 %v207
      %v264 = vunpack.c.l.b16 %v208
      %v265 = vunpack.c.l.b16 %v209
      %v266 = vunpack.c.l.b16 %v210
      %v267 = vunpack.c.l.b16 %v211
      %v268 = vunpack.c.l.b16 %v212
      %v269 = vunpack.c.l.b16 %v213
      %v270 = vunpack.c.l.b16 %v214
      %v271 = vunpack.c.l.b16 %v215
      %v272 = vunpack.c.l.b16 %v216
      %v273 = vunpack.c.l.b16 %v217
      %v274 = vunpack.c.l.b16 %v218
      %v275 = vunpack.c.l.b16 %v219
      %v276 = vunpack.c.l.b16 %v220
      %v277 = vpack.c.b16 %v262, %v261
      %v278 = vpack.c.b16 %v264, %v263
      %v279 = vpack.c.b16 %v266, %v265
      %v280 = vpack.c.b16 %v268, %v267
      %v281 = vpack.c.b16 %v270, %v269
      %v282 = vpack.c.b16 %v272, %v271
      %v283 = vpack.c.b16 %v274, %v273
      %v284 = vpack.c.b16 %v276, %v275
      %293 = vmatprep.subr.bf16.mxu0 0
      %294 = vmatpush1.bf16.msra.mxu0 %v277
      %295 = vmatprep.subr.bf16.mxu0 0
      %296 = vmatpush1.bf16.msra.mxu0 %v278
      %297 = vmatprep.subr.bf16.mxu0 0
      %298 = vmatpush1.bf16.msra.mxu0 %v279
      %299 = vmatprep.subr.bf16.mxu0 0
      %300 = vmatpush1.bf16.msra.mxu0 %v280
      %301 = vmatprep.subr.bf16.mxu0 0
      %302 = vmatpush1.bf16.msra.mxu0 %v281
      %303 = vmatprep.subr.bf16.mxu0 0
      %304 = vmatpush1.bf16.msra.mxu0 %v282
      %305 = vmatprep.subr.bf16.mxu0 0
      %306 = vmatpush1.bf16.msra.mxu0 %v283
      %307 = vmatprep.subr.bf16.mxu0 0
      %308 = vmatpush1.bf16.msra.mxu0 %v284
      %309 = vmatprep.subr.bf16.mxu0 0
      %310 = vmatpush1.bf16.msra.mxu0 0
      %311 = vmatprep.subr.bf16.mxu0 0
      %312 = vmatpush1.bf16.msra.mxu0 0
      %313 = vmatprep.subr.bf16.mxu0 0
      %314 = vmatpush1.bf16.msra.mxu0 0
      %315 = vmatprep.subr.bf16.mxu0 0
      %316 = vmatpush1.bf16.msra.mxu0 0
      %317 = vmatprep.subr.bf16.mxu0 0
      %318 = vmatpush1.bf16.msra.mxu0 0
      %319 = vmatprep.subr.bf16.mxu0 0
      %320 = vmatpush1.bf16.msra.mxu0 0
      %321 = vmatprep.subr.bf16.mxu0 0
      %322 = vmatpush1.bf16.msra.mxu0 0
      %323 = vmatprep.subr.bf16.mxu0 0
      %324 = vmatpush1.bf16.msra.mxu0 0
      %325 = vmatprep.mubr.bf16.mxu0 0
      %326 = vmatmul.mubr.bf16.gmra.mrb[0].mxu0 %v237
      %v327 = vpop.f32.mrb[0].mxu0
      %v328 = vadd.f32 0.0, %v327
      %v329 = vpop.f32.mrb[0].mxu0
      %v330 = vpop.f32.mrb[0].mxu0
      %v331 = vadd.f32 0.0, %v330
      %v332 = vpop.f32.mrb[0].mxu0
      %333 = vmatprep.mubr.bf16.mxu0 0
      %334 = vmatmul.mubr.bf16.gmra.mrb[0].mxu0 %v238
      %v335 = vpop.f32.mrb[0].mxu0
      %v336 = vadd.f32 0.0, %v335
      %v337 = vpop.f32.mrb[0].mxu0
      %v338 = vpop.f32.mrb[0].mxu0
      %v339 = vadd.f32 0.0, %v338
      %v340 = vpop.f32.mrb[0].mxu0
      %341 = vmatprep.mubr.bf16.mxu0 0
      %342 = vmatmul.mubr.bf16.gmra.mrb[0].mxu0 %v239
      %v343 = vpop.f32.mrb[0].mxu0
      %v344 = vadd.f32 0.0, %v343
      %v345 = vpop.f32.mrb[0].mxu0
      %v346 = vpop.f32.mrb[0].mxu0
      %v347 = vadd.f32 0.0, %v346
      %v348 = vpop.f32.mrb[0].mxu0
      %349 = vmatprep.mubr.bf16.mxu0 0
      %350 = vmatmul.mubr.bf16.gmra.mrb[0].mxu0 %v240
      %v351 = vpop.f32.mrb[0].mxu0
      %v352 = vadd.f32 0.0, %v351
      %v353 = vpop.f32.mrb[0].mxu0
      %v354 = vpop.f32.mrb[0].mxu0
      %v355 = vadd.f32 0.0, %v354
      %v356 = vpop.f32.mrb[0].mxu0
      %357 = vdwg.mxu0
      %358 = vst [vmem:[%s194] sm:$0xff] %v328
      %359 = vst [vmem:[%s194 + $0x8] sm:$0xff] %v331
      %360 = vst [vmem:[%s194 + $0x10] sm:$0xff] %v336
      %361 = vst [vmem:[%s194 + $0x18] sm:$0xff] %v339
      %362 = vst [vmem:[%s194 + $0x20] sm:$0xff] %v344
      %363 = vst [vmem:[%s194 + $0x28] sm:$0xff] %v347
      %364 = vst [vmem:[%s194 + $0x30] sm:$0xff] %v352
      %365 = vst [vmem:[%s194 + $0x38] sm:$0xff] %v355
      %p366 = scmp.eq.s32.totalorder %s16, 0
      // Predicated region
      $region29: #{discriminator_forward.9} parent=27 // pred_check
        %p367 = pneg %p366
      $region30: #{discriminator_forward.9} parent=27 // pred_check_branch
        %369 = sbr.rel (%p367) target = $region32
      $region31: #{discriminator_forward.9} parent=27 // pred_region
        %370 = vst [vmem:[%s3] sm:$0x1] 0.0
        %371 = vst [vmem:[%s4] sm:$0x1] 0.0
      $region32: #{discriminator_forward.9} parent=27 // pred_fallthru
        _
      %v372 = vld [vmem:[%s3] sm:$0x1]
      %v373 = vadd.f32 %v328, %v331
      %v374 = vadd.f32 %v373, %v336
      %v375 = vadd.f32 %v374, %v339
      %v376 = vadd.f32 %v375, %v344
      %v377 = vadd.f32 %v376, %v347
      %v378 = vadd.f32 %v377, %v352
      %v379 = vadd.f32 %v378, %v355
      %v380 = vrot.slane %v379, 4
      %v381 = vadd.f32 %v379, %v380
      %v382 = vrot.slane %v381, 2
      %v383 = vadd.f32 %v381, %v382
      %v384 = vrot.slane %v383, 1
      %v385 = vadd.f32 %v383, %v384
      %v386 = vadd.f32 %v372, %v385
      %387 = vst [vmem:[%s3] sm:$0x1] %v386
      %v388 = vld [vmem:[%s4] sm:$0x1]
      %v389 = vmul.f32 %v328, %v328
      %v390 = vmul.f32 %v331, %v331
      %v391 = vmul.f32 %v336, %v336
      %v392 = vmul.f32 %v339, %v339
      %v393 = vmul.f32 %v344, %v344
      %v394 = vmul.f32 %v347, %v347
      %v395 = vmul.f32 %v352, %v352
      %v396 = vmul.f32 %v355, %v355
      %v397 = vadd.f32 %v389, %v390
      %v398 = vadd.f32 %v397, %v391
      %v399 = vadd.f32 %v398, %v392
      %v400 = vadd.f32 %v399, %v393
      %v401 = vadd.f32 %v400, %v394
      %v402 = vadd.f32 %v401, %v395
      %v403 = vadd.f32 %v402, %v396
      %v404 = vrot.slane %v403, 4
      %v405 = vadd.f32 %v403, %v404
      %v406 = vrot.slane %v405, 2
      %v407 = vadd.f32 %v405, %v406
      %v408 = vrot.slane %v407, 1
      %v409 = vadd.f32 %v407, %v408
      %v410 = vadd.f32 %v388, %v409
      %411 = vst [vmem:[%s4] sm:$0x1] %v410
      %s412 = smul.u32 8, %s16
      %p413 = scmp.lt.s32.totalorder %s412, 15
      %s414 = scalar_select %p413, %s412, 15
      %s415 = smul.addr %s414, 8
      %s416 = scalar_lea.vmem %s2, %s415
      // Predicated region
      $region33: #{discriminator_forward.9} parent=27 // pred_check
        %p417 = pneg %p81
      $region34: #{discriminator_forward.9} parent=27 // pred_check_branch
        %419 = sbr.rel (%p417) target = $region36
      $region35: #{discriminator_forward.9} parent=27 // pred_region
        %s420 = smul.u32 8, %s16
      $region36: #{discriminator_forward.9} parent=27 // pred_fallthru
        _
      // Predicated region
      $region37: #{discriminator_forward.9} parent=27 // pred_check
        %p421 = pneg %p102
      $region38: #{discriminator_forward.9} parent=27 // pred_check_branch
        %423 = sbr.rel (%p421) target = $region40
      $region39: #{discriminator_forward.9} parent=27 // pred_region
        _
      $region40: #{discriminator_forward.9} parent=27 // pred_fallthru
        _
      // Predicated region
      $region41: #{discriminator_forward.9} parent=27 // pred_check
        %p424 = pneg %p123
      $region42: #{discriminator_forward.9} parent=27 // pred_check_branch
        %426 = sbr.rel (%p424) target = $region44
      $region43: #{discriminator_forward.9} parent=27 // pred_region
        _
      $region44: #{discriminator_forward.9} parent=27 // pred_fallthru
        _
      // Predicated region
      $region45: #{discriminator_forward.9} parent=27 // pred_check
        %p427 = pneg %p102
      $region46: #{discriminator_forward.9} parent=27 // pred_check_branch
        %429 = sbr.rel (%p427) target = $region48
      $region47: #{discriminator_forward.9} parent=27 // pred_region
        _
      $region48: #{discriminator_forward.9} parent=27 // pred_fallthru
        _
      // Predicated region
      $region49: #{discriminator_forward.9} parent=27 // pred_check
        %p430 = pneg %p123
      $region50: #{discriminator_forward.9} parent=27 // pred_check_branch
        %432 = sbr.rel (%p430) target = $region52
      $region51: #{discriminator_forward.9} parent=27 // pred_region
        _
      $region52: #{discriminator_forward.9} parent=27 // pred_fallthru
        _
    $region28: #{discriminator_forward.9} parent=5 // pred_fallthru
      _
    %p433 = scmp.le.s32.totalorder 2, %s11
    // Predicated region
    $region53: #{discriminator_forward.9} parent=5 // pred_check
      %p434 = pneg %p433
    $region54: #{discriminator_forward.9} parent=5 // pred_check_branch
      %436 = sbr.rel (%p434) target = $region56
    $region55: #{discriminator_forward.9} parent=5 // pred_region
      %s437 = ssub.s32 %s11, 2
      // Predicated region
      $region57: #{discriminator_forward.9} parent=55 // pred_check
        %p438 = pneg %p87
      $region58: #{discriminator_forward.9} parent=55 // pred_check_branch
        %440 = sbr.rel (%p438) target = $region60
      $region59: #{discriminator_forward.9} parent=55 // pred_region
        %s441 = smul.u32 8, %s17
        %p442 = scmp.lt.s32.totalorder %s441, 15
        %s443 = scalar_select %p442, %s441, 15
        %s444 = smul.addr %s443, 8
        %s445 = scalar_lea.vmem %s2, %s444
      $region60: #{discriminator_forward.9} parent=55 // pred_fallthru
        _
    $region56: #{discriminator_forward.9} parent=5 // pred_fallthru
      _
  $region6: #{discriminator_forward.9} parent=0 // loop_footer
    %s15 = sadd.s32 1, %s11
  $region7: #{discriminator_forward.9} parent=0 // loop_footer_branch
    %10 = sbr.rel target = $region3
  $region8: #{discriminator_forward.9} parent=0 // loop_exit
    _

// kernel: discriminator_forward.10
$region0: #{discriminator_forward.10}
  #allocation0 [shape = 'u32[]', space=smem, size = 0x4, offset = 0x4, fixed_abs, tag = 'smem constant byte address 0x4 - core index']
  #allocation1 [shape = 'u32[144,128]{1,0:T(1,128)}', space=vmem, size = 0x12000, scoped, tag = 'internal scratch']
  %s0 = inlined_call_operand.vmem [shape: f32[128,128], index: 0, kind: input, shape index: {}]
  %s1 = inlined_call_operand.vmem [shape: f32[1,128], index: 1, kind: input, shape index: {}]
  %s2 = inlined_call_operand.vmem [shape: f32[1,128], index: 2, kind: input, shape index: {}]
  %s3 = inlined_call_operand.vmem [shape: f32[2,128], index: 3, kind: input, shape index: {}]
  %s4 = inlined_call_operand.vmem [shape: bf16[128,128], index: 4, kind: output, shape index: {}]
  %s5 = sld [smem:[#allocation0]]
  $region49: #{discriminator_forward.10} parent=0
    _
  %s7 = ssub.s32 1, %s5
  %s8 = scalar_select 0, %s7, %s5
  loop: start=0, step=1, limit=4
  $region2: #{discriminator_forward.10} parent=0 // loop_pre_header
    _
  $region3: #{discriminator_forward.10} parent=0 // loop_header
    %s10 = sphi 0, %s14
    %p11 = scmp.ge.s32.totalorder %s10, 4
    %s20 = sphi 0, %s22
    %s23 = sphi 0, %s20
    %s24 = sphi 0, %s23
    %s40 = sphi 0, %s24
    %s44 = sphi 0, %s44
    %s46 = sphi 0, %s44
    %s47 = sphi 0, %s46
    %s61 = sphi 0, %s47
    %s65 = sphi 0, %s65
    %s67 = sphi 0, %s65
    %s68 = sphi 0, %s67
    %s82 = sphi 0, %s68
    %s86 = sphi 0, %s86
    %s88 = sphi 0, %s86
    %s89 = sphi 0, %s88
    %s103 = sphi 0, %s89
    %s109 = sphi 0, %s111
    %s112 = sphi 0, %s109
    %s113 = sphi 0, %s112
    %s129 = sphi 0, %s113
  $region4: #{discriminator_forward.10} parent=0 // loop_header_branch
    %13 = sbr.rel (%p11) target = $region8
  $region5: #{discriminator_forward.10} parent=0 // loop_body
    %s15 = ssub.s32 %s10, 1
    %s16 = ssub.s32 %s10, 2
    %s17 = sadd.s32 %s10, 1
    %s18 = ssub.s32 %s10, %s17
    %p19 = scmp.eq.s32.totalorder %s18, 0
    %s21 = sadd.s32 %s20, 1
    %s22 = scalar_select %p19, %s20, %s21
    %p25 = pneg %p19
    %p26 = scmp.eq.s32.totalorder %s10, 1
    %p27 = por %p25, %p26
    %p28 = scmp.ne.s32.totalorder %s20, %s23
    %p29 = scmp.eq.s32.totalorder %s10, 0
    %p30 = por %p28, %p29
    %p31 = scmp.ne.s32.totalorder %s20, %s23
    %p32 = scmp.eq.s32.totalorder %s15, 1
    %p33 = por %p31, %p32
    %p34 = scmp.ne.s32.totalorder %s23, %s24
    %p35 = scmp.eq.s32.totalorder %s15, 0
    %p36 = por %p34, %p35
    %p37 = scmp.ne.s32.totalorder %s23, %s24
    %p38 = scmp.eq.s32.totalorder %s16, 1
    %p39 = por %p37, %p38
    %p41 = scmp.ne.s32.totalorder %s24, %s40
    %p42 = scmp.eq.s32.totalorder %s16, 0
    %p43 = por %p41, %p42
    %s45 = sadd.s32 %s44, 1
    %p48 = scmp.eq.s32.totalorder %s10, 1
    %p49 = scmp.ne.s32.totalorder %s44, %s46
    %p50 = scmp.eq.s32.totalorder %s10, 0
    %p51 = por %p49, %p50
    %p52 = scmp.ne.s32.totalorder %s44, %s46
    %p53 = scmp.eq.s32.totalorder %s15, 1
    %p54 = por %p52, %p53
    %p55 = scmp.ne.s32.totalorder %s46, %s47
    %p56 = scmp.eq.s32.totalorder %s15, 0
    %p57 = por %p55, %p56
    %p58 = scmp.ne.s32.totalorder %s46, %s47
    %p59 = scmp.eq.s32.totalorder %s16, 1
    %p60 = por %p58, %p59
    %p62 = scmp.ne.s32.totalorder %s47, %s61
    %p63 = scmp.eq.s32.totalorder %s16, 0
    %p64 = por %p62, %p63
    %s66 = sadd.s32 %s65, 1
    %p69 = scmp.eq.s32.totalorder %s10, 1
    %p70 = scmp.ne.s32.totalorder %s65, %s67
    %p71 = scmp.eq.s32.totalorder %s10, 0
    %p72 = por %p70, %p71
    %p73 = scmp.ne.s32.totalorder %s65, %s67
    %p74 = scmp.eq.s32.totalorder %s15, 1
    %p75 = por %p73, %p74
    %p76 = scmp.ne.s32.totalorder %s67, %s68
    %p77 = scmp.eq.s32.totalorder %s15, 0
    %p78 = por %p76, %p77
    %p79 = scmp.ne.s32.totalorder %s67, %s68
    %p80 = scmp.eq.s32.totalorder %s16, 1
    %p81 = por %p79, %p80
    %p83 = scmp.ne.s32.totalorder %s68, %s82
    %p84 = scmp.eq.s32.totalorder %s16, 0
    %p85 = por %p83, %p84
    %s87 = sadd.s32 %s86, 1
    %p90 = scmp.eq.s32.totalorder %s10, 1
    %p91 = scmp.ne.s32.totalorder %s86, %s88
    %p92 = scmp.eq.s32.totalorder %s10, 0
    %p93 = por %p91, %p92
    %p94 = scmp.ne.s32.totalorder %s86, %s88
    %p95 = scmp.eq.s32.totalorder %s15, 1
    %p96 = por %p94, %p95
    %p97 = scmp.ne.s32.totalorder %s88, %s89
    %p98 = scmp.eq.s32.totalorder %s15, 0
    %p99 = por %p97, %p98
    %p100 = scmp.ne.s32.totalorder %s88, %s89
    %p101 = scmp.eq.s32.totalorder %s16, 1
    %p102 = por %p100, %p101
    %p104 = scmp.ne.s32.totalorder %s89, %s103
    %p105 = scmp.eq.s32.totalorder %s16, 0
    %p106 = por %p104, %p105
    %s107 = ssub.s32 %s10, %s17
    %p108 = scmp.eq.s32.totalorder %s107, 0
    %s110 = sadd.s32 %s109, 1
    %s111 = scalar_select %p108, %s109, %s110
    %p114 = pneg %p108
    %p115 = scmp.eq.s32.totalorder %s10, 1
    %p116 = por %p114, %p115
    %p117 = scmp.ne.s32.totalorder %s109, %s112
    %p118 = scmp.eq.s32.totalorder %s10, 0
    %p119 = por %p117, %p118
    %p120 = scmp.ne.s32.totalorder %s109, %s112
    %p121 = scmp.eq.s32.totalorder %s15, 1
    %p122 = por %p120, %p121
    %p123 = scmp.ne.s32.totalorder %s112, %s113
    %p124 = scmp.eq.s32.totalorder %s15, 0
    %p125 = por %p123, %p124
    %p126 = scmp.ne.s32.totalorder %s112, %s113
    %p127 = scmp.eq.s32.totalorder %s16, 1
    %p128 = por %p126, %p127
    %p130 = scmp.ne.s32.totalorder %s113, %s129
    %p131 = scmp.eq.s32.totalorder %s16, 0
    %p132 = por %p130, %p131
    %p133 = scmp.le.s32.totalorder 1, %s10
    %p134 = scmp.lt.s32.totalorder %s10, 3
    %p135 = pnand %p133, %p134
    %p136 = pneg %p135
    // Predicated region
    $region9: #{discriminator_forward.10} parent=5 // pred_check
      _
    $region10: #{discriminator_forward.10} parent=5 // pred_check_branch
      %138 = sbr.rel (%p135) target = $region12
    $region11: #{discriminator_forward.10} parent=5 // pred_region
      %s139 = ssub.s32 %s10, 1
      // Predicated region
      $region13: #{discriminator_forward.10} parent=11 // pred_check
        %p140 = pneg %p57
      $region14: #{discriminator_forward.10} parent=11 // pred_check_branch
        %142 = sbr.rel (%p140) target = $region16
      $region15: #{discriminator_forward.10} parent=11 // pred_region
        _
      $region16: #{discriminator_forward.10} parent=11 // pred_fallthru
        _
      // Predicated region
      $region17: #{discriminator_forward.10} parent=11 // pred_check
        %p143 = pneg %p78
      $region18: #{discriminator_forward.10} parent=11 // pred_check_branch
        %145 = sbr.rel (%p143) target = $region20
      $region19: #{discriminator_forward.10} parent=11 // pred_region
        _
      $region20: #{discriminator_forward.10} parent=11 // pred_fallthru
        _
      // Predicated region
      $region21: #{discriminator_forward.10} parent=11 // pred_check
        %p146 = pneg %p99
      $region22: #{discriminator_forward.10} parent=11 // pred_check_branch
        %148 = sbr.rel (%p146) target = $region24
      $region23: #{discriminator_forward.10} parent=11 // pred_region
        _
      $region24: #{discriminator_forward.10} parent=11 // pred_fallthru
        _
    $region12: #{discriminator_forward.10} parent=5 // pred_fallthru
      _
    %p149 = scmp.lt.s32.totalorder %s10, 2
    // Predicated region
    $region25: #{discriminator_forward.10} parent=5 // pred_check
      %p150 = pneg %p149
    $region26: #{discriminator_forward.10} parent=5 // pred_check_branch
      %152 = sbr.rel (%p150) target = $region28
    $region27: #{discriminator_forward.10} parent=5 // pred_region
      // Predicated region
      $region29: #{discriminator_forward.10} parent=27 // pred_check
        %p153 = pneg %p30
      $region30: #{discriminator_forward.10} parent=27 // pred_check_branch
        %155 = sbr.rel (%p153) target = $region32
      $region31: #{discriminator_forward.10} parent=27 // pred_region
        %s156 = smul.u32 8, %s10
        %p157 = scmp.lt.s32.totalorder %s156, 15
        %s158 = scalar_select %p157, %s156, 15
        %s159 = smul.addr %s158, 8
        %s160 = scalar_lea.vmem %s0, %s159
        %s161 = smul.u32 8, %s10
      $region32: #{discriminator_forward.10} parent=27 // pred_fallthru
        _
    $region28: #{discriminator_forward.10} parent=5 // pred_fallthru
      _
    %p162 = scmp.le.s32.totalorder 1, %s10
    %p163 = scmp.lt.s32.totalorder %s10, 3
    %p164 = pnand %p162, %p163
    %p165 = pneg %p164
    // Predicated region
    $region33: #{discriminator_forward.10} parent=5 // pred_check
      _
    $region34: #{discriminator_forward.10} parent=5 // pred_check_branch
      %167 = sbr.rel (%p164) target = $region36
    $region35: #{discriminator_forward.10} parent=5 // pred_region
      %s168 = ssub.s32 %s10, 1
      %s169 = smul.u32 8, %s15
      %p170 = scmp.lt.s32.totalorder %s169, 15
      %s171 = scalar_select %p170, %s169, 15
      %s172 = smul.addr %s171, 8
      %s173 = scalar_lea.vmem %s0, %s172
      %p174 = pneg %p36
      %p175 = pneg %p33
      %p176 = pneg %p57
      %p177 = pneg %p54
      %p178 = pneg %p78
      %p179 = pneg %p75
      %p180 = pneg %p99
      %p181 = pneg %p96
      %p182 = pneg %p125
      %p183 = pneg %p122
      %s184 = smul.u32 8, %s15
      %p185 = scmp.lt.s32.totalorder %s184, 15
      %s186 = scalar_select %p185, %s184, 15
      %s187 = smul.addr %s186, 4
      %s188 = scalar_lea.vmem %s4, %s187
      %s189 = smul.u32 8, %s15
      %p190 = scmp.lt.s32.totalorder %s189, 15
      %s191 = scalar_select %p190, %s189, 15
      %s192 = smul.addr %s191, 8
      %s193 = scalar_lea.vmem %s0, %s192
      %s194 = smul.u32 8, %s15
      %s195 = smul.u32 8, %s15
      %p196 = scmp.lt.s32.totalorder %s195, 15
      %s197 = scalar_select %p196, %s195, 15
      %s198 = smul.addr %s197, 4
      %s199 = scalar_lea.vmem %s4, %s198
      %s200 = smul.u32 8, %s15
      %v201 = vld [vmem:[%s1] sm:$0x1]
      %v202 = vmul.f32 %v201, 0.0078125
      %v203 = vld [vmem:[%s2] sm:$0x1]
      %v204 = vmul.f32 %v203, 0.0078125
      %v205 = vmul.f32 %v202, %v202
      %v206 = vsub.f32 %v204, %v205
      %v207 = vld [vmem:[%s3] sm:$0x3]
      %v208 = vadd.f32 %v206, 1e-05
      %v209 = vrsqrt.pop %v208
      %v210 = vmul.f32 %v207, %v209
      %v211 = vmul.f32 %v202, %v210
      %v213 = vlaneseq
      %v214 = vshrl.u32 %v213, 7
      %v215 = vsub.s32 0, %v214
      %v216 = vrot.slane %v211, %v215
      %v218 = vsub.f32 %v207, %v216
      %v219 = vld [vmem:[%s193] sm:$0xff]
      %v220 = vld [vmem:[%s193 + $0x8] sm:$0xff]
      %v221 = vld [vmem:[%s193 + $0x10] sm:$0xff]
      %v222 = vld [vmem:[%s193 + $0x18] sm:$0xff]
      %v223 = vld [vmem:[%s193 + $0x20] sm:$0xff]
      %v224 = vld [vmem:[%s193 + $0x28] sm:$0xff]
      %v225 = vld [vmem:[%s193 + $0x30] sm:$0xff]
      %v226 = vld [vmem:[%s193 + $0x38] sm:$0xff]
      %v227 = vlaneseq
      %v228 = vshrl.u32 %v227, 7
      %v229 = vsub.s32 0, %v228
      %v230 = vrot.slane %v210, %v229
      %v231 = vmul.f32 %v219, %v230
      %v232 = vmul.f32 %v220, %v230
      %v233 = vmul.f32 %v221, %v230
      %v234 = vmul.f32 %v222, %v230
      %v235 = vmul.f32 %v223, %v230
      %v236 = vmul.f32 %v224, %v230
      %v237 = vmul.f32 %v225, %v230
      %v238 = vmul.f32 %v226, %v230
      %v239 = vlaneseq
      %v240 = vshrl.u32 %v239, 7
      %v241 = vsub.s32 1, %v240
      %v242 = vrot.slane %v218, %v241
      %v243 = vadd.f32 %v231, %v242
      %v244 = vadd.f32 %v232, %v242
      %v245 = vadd.f32 %v233, %v242
      %v246 = vadd.f32 %v234, %v242
      %v247 = vadd.f32 %v235, %v242
      %v248 = vadd.f32 %v236, %v242
      %v249 = vadd.f32 %v237, %v242
      %v250 = vadd.f32 %v238, %v242
      %vm251 = vcmp.gt.f32.partialorder %v243, 0.0
      %vm252 = vcmp.gt.f32.partialorder %v244, 0.0
      %vm253 = vcmp.gt.f32.partialorder %v245, 0.0
      %vm254 = vcmp.gt.f32.partialorder %v246, 0.0
      %vm255 = vcmp.gt.f32.partialorder %v247, 0.0
      %vm256 = vcmp.gt.f32.partialorder %v248, 0.0
      %vm257 = vcmp.gt.f32.partialorder %v249, 0.0
      %vm258 = vcmp.gt.f32.partialorder %v250, 0.0
      %v259 = vmul.f32 %v243, 0.2
      %v260 = vmul.f32 %v244, 0.2
      %v261 = vmul.f32 %v245, 0.2
      %v262 = vmul.f32 %v246, 0.2
      %v263 = vmul.f32 %v247, 0.2
      %v264 = vmul.f32 %v248, 0.2
      %v265 = vmul.f32 %v249, 0.2
      %v266 = vmul.f32 %v250, 0.2
      %v267 = vsel %vm251, %v243, %v259
      %v268 = vsel %vm252, %v244, %v260
      %v269 = vsel %vm253, %v245, %v261
      %v270 = vsel %vm254, %v246, %v262
      %v271 = vsel %vm255, %v247, %v263
      %v272 = vsel %vm256, %v248, %v264
      %v273 = vsel %vm257, %v249, %v265
      %v274 = vsel %vm258, %v250, %v266
      %v275 = vpack.c.bf16 %v268, %v267
      %v276 = vpack.c.bf16 %v270, %v269
      %v277 = vpack.c.bf16 %v272, %v271
      %v278 = vpack.c.bf16 %v274, %v273
      %v283 = vunpack.c.l.b16 %v275
      %v284 = vunpack.c.h.b16 %v275
      %v285 = vunpack.c.l.b16 %v276
      %v286 = vunpack.c.h.b16 %v276
      %v287 = vunpack.c.l.b16 %v277
      %v288 = vunpack.c.h.b16 %v277
      %v289 = vunpack.c.l.b16 %v278
      %v290 = vunpack.c.h.b16 %v278
      %v291 = vpack.c.b16 %v283, %v283
      %v292 = vpack.c.b16 %v284, %v284
      %v293 = vpack.c.b16 %v285, %v285
      %v294 = vpack.c.b16 %v286, %v286
      %v295 = vpack.c.b16 %v287, %v287
      %v296 = vpack.c.b16 %v288, %v288
      %v297 = vpack.c.b16 %v289, %v289
      %v298 = vpack.c.b16 %v290, %v290
      %307 = vst [vmem:[%s199] sm:$0xf] %v291
      %308 = vst [vmem:[%s199 + $0x4] sm:$0xf] %v292
      %309 = vst [vmem:[%s199 + $0x8] sm:$0xf] %v293
      %310 = vst [vmem:[%s199 + $0xc] sm:$0xf] %v294
      %311 = vst [vmem:[%s199 + $0x10] sm:$0xf] %v295
      %312 = vst [vmem:[%s199 + $0x14] sm:$0xf] %v296
      %313 = vst [vmem:[%s199 + $0x18] sm:$0xf] %v297
      %314 = vst [vmem:[%s199 + $0x1c] sm:$0xf] %v298
      %s315 = smul.u32 8, %s15
      %p316 = scmp.lt.s32.totalorder %s315, 15
      %s317 = scalar_select %p316, %s315, 15
      %s318 = smul.addr %s317, 4
      %s319 = scalar_lea.vmem %s4, %s318
      // Predicated region
      $region37: #{discriminator_forward.10} parent=35 // pred_check
        %p320 = pneg %p122
      $region38: #{discriminator_forward.10} parent=35 // pred_check_branch
        %322 = sbr.rel (%p320) target = $region40
      $region39: #{discriminator_forward.10} parent=35 // pred_region
        %s323 = smul.u32 8, %s15
      $region40: #{discriminator_forward.10} parent=35 // pred_fallthru
        _
    $region36: #{discriminator_forward.10} parent=5 // pred_fallthru
      _
    %p324 = scmp.le.s32.totalorder 2, %s10
    // Predicated region
    $region41: #{discriminator_forward.10} parent=5 // pred_check
      %p325 = pneg %p324
    $region42: #{discriminator_forward.10} parent=5 // pred_check_branch
      %327 = sbr.rel (%p325) target = $region44
    $region43: #{discriminator_forward.10} parent=5 // pred_region
      %s328 = ssub.s32 %s10, 2
      // Predicated region
      $region45: #{discriminator_forward.10} parent=43 // pred_check
        %p329 = pneg %p128
      $region46: #{discriminator_forward.10} parent=43 // pred_check_branch
        %331 = sbr.rel (%p329) target = $region48
      $region47: #{discriminator_forward.10} parent=43 // pred_region
        %s332 = smul.u32 8, %s16
        %p333 = scmp.lt.s32.totalorder %s332, 15
        %s334 = scalar_select %p333, %s332, 15
        %s335 = smul.addr %s334, 4
        %s336 = scalar_lea.vmem %s4, %s335
      $region48: #{discriminator_forward.10} parent=43 // pred_fallthru
        _
    $region44: #{discriminator_forward.10} parent=5 // pred_fallthru
      _
  $region6: #{discriminator_forward.10} parent=0 // loop_footer
    %s14 = sadd.s32 1, %s10
  $region7: #{discriminator_forward.10} parent=0 // loop_footer_branch
    %9 = sbr.rel target = $region3
  $region8: #{discriminator_forward.10} parent=0 // loop_exit
    _

// kernel: discriminator_forward.12
$region0: #{discriminator_forward.12}
  #allocation0 [shape = 'u32[]', space=smem, size = 0x4, offset = 0x4, fixed_abs, tag = 'smem constant byte address 0x4 - core index']
  #allocation1 [shape = 'u32[144,128]{1,0:T(1,128)}', space=vmem, size = 0x12000, scoped, tag = 'internal scratch']
  %s0 = inlined_call_operand.vmem [shape: f32[32,128], index: 0, kind: input, shape index: {}]
  %s1 = inlined_call_operand.vmem [shape: f32[1,128], index: 1, kind: input, shape index: {}]
  %s2 = inlined_call_operand.vmem [shape: f32[1,128], index: 2, kind: input, shape index: {}]
  %s3 = inlined_call_operand.vmem [shape: f32[2,128], index: 3, kind: input, shape index: {}]
  %s4 = inlined_call_operand.vmem [shape: bf16[32,128], index: 4, kind: output, shape index: {}]
  %s5 = sld [smem:[#allocation0]]
  $region26: #{discriminator_forward.12} parent=0
    _
  %s7 = ssub.s32 1, %s5
  %s8 = scalar_select 0, %s7, %s5
  // Predicated region
  $region2: #{discriminator_forward.12} parent=0 // pred_check
    _
  $region3: #{discriminator_forward.12} parent=0 // pred_check_branch
    %10 = sbr.rel (0) target = $region5
  $region4: #{discriminator_forward.12} parent=0 // pred_region
    _
  $region5: #{discriminator_forward.12} parent=0 // pred_fallthru
    _
  // Predicated region
  $region6: #{discriminator_forward.12} parent=0 // pred_check
    _
  $region7: #{discriminator_forward.12} parent=0 // pred_check_branch
    %12 = sbr.rel (0) target = $region9
  $region8: #{discriminator_forward.12} parent=0 // pred_region
    _
  $region9: #{discriminator_forward.12} parent=0 // pred_fallthru
    _
  // Predicated region
  $region10: #{discriminator_forward.12} parent=0 // pred_check
    _
  $region11: #{discriminator_forward.12} parent=0 // pred_check_branch
    %14 = sbr.rel (0) target = $region13
  $region12: #{discriminator_forward.12} parent=0 // pred_region
    _
  $region13: #{discriminator_forward.12} parent=0 // pred_fallthru
    _
  // Predicated region
  $region14: #{discriminator_forward.12} parent=0 // pred_check
    _
  $region15: #{discriminator_forward.12} parent=0 // pred_check_branch
    %16 = sbr.rel (0) target = $region17
  $region16: #{discriminator_forward.12} parent=0 // pred_region
    _
  $region17: #{discriminator_forward.12} parent=0 // pred_fallthru
    _
  %v17 = vld [vmem:[%s1] sm:$0x1]
  %v18 = vmul.f32 %v17, 0.03125
  %v19 = vld [vmem:[%s2] sm:$0x1]
  %v20 = vmul.f32 %v19, 0.03125
  %v21 = vmul.f32 %v18, %v18
  %v22 = vsub.f32 %v20, %v21
  %v23 = vld [vmem:[%s3] sm:$0x3]
  %v24 = vadd.f32 %v22, 1e-05
  %v25 = vrsqrt.pop %v24
  %v26 = vmul.f32 %v23, %v25
  %v27 = vmul.f32 %v18, %v26
  %v29 = vlaneseq
  %v30 = vshrl.u32 %v29, 7
  %v31 = vsub.s32 0, %v30
  %v32 = vrot.slane %v27, %v31
  %v34 = vsub.f32 %v23, %v32
  %v35 = vld [vmem:[%s0] sm:$0xff]
  %v36 = vld [vmem:[%s0 + $0x8] sm:$0xff]
  %v37 = vld [vmem:[%s0 + $0x10] sm:$0xff]
  %v38 = vld [vmem:[%s0 + $0x18] sm:$0xff]
  %v39 = vlaneseq
  %v40 = vshrl.u32 %v39, 7
  %v41 = vsub.s32 0, %v40
  %v42 = vrot.slane %v26, %v41
  %v43 = vmul.f32 %v35, %v42
  %v44 = vmul.f32 %v36, %v42
  %v45 = vmul.f32 %v37, %v42
  %v46 = vmul.f32 %v38, %v42
  %v47 = vlaneseq
  %v48 = vshrl.u32 %v47, 7
  %v49 = vsub.s32 1, %v48
  %v50 = vrot.slane %v34, %v49
  %v51 = vadd.f32 %v43, %v50
  %v52 = vadd.f32 %v44, %v50
  %v53 = vadd.f32 %v45, %v50
  %v54 = vadd.f32 %v46, %v50
  %vm55 = vcmp.gt.f32.partialorder %v51, 0.0
  %vm56 = vcmp.gt.f32.partialorder %v52, 0.0
  %vm57 = vcmp.gt.f32.partialorder %v53, 0.0
  %vm58 = vcmp.gt.f32.partialorder %v54, 0.0
  %v59 = vmul.f32 %v51, 0.2
  %v60 = vmul.f32 %v52, 0.2
  %v61 = vmul.f32 %v53, 0.2
  %v62 = vmul.f32 %v54, 0.2
  %v63 = vsel %vm55, %v51, %v59
  %v64 = vsel %vm56, %v52, %v60
  %v65 = vsel %vm57, %v53, %v61
  %v66 = vsel %vm58, %v54, %v62
  %v67 = vpack.c.bf16 %v64, %v63
  %v68 = vpack.c.bf16 %v66, %v65
  %v71 = vunpack.c.l.b16 %v67
  %v72 = vunpack.c.h.b16 %v67
  %v73 = vunpack.c.l.b16 %v68
  %v74 = vunpack.c.h.b16 %v68
  %v75 = vpack.c.b16 %v71, %v71
  %v76 = vpack.c.b16 %v72, %v72
  %v77 = vpack.c.b16 %v73, %v73
  %v78 = vpack.c.b16 %v74, %v74
  %83 = vst [vmem:[%s4] sm:$0xf] %v75
  %84 = vst [vmem:[%s4 + $0x4] sm:$0xf] %v76
  %85 = vst [vmem:[%s4 + $0x8] sm:$0xf] %v77
  %86 = vst [vmem:[%s4 + $0xc] sm:$0xf] %v78
  // Predicated region
  $region18: #{discriminator_forward.12} parent=0 // pred_check
    _
  $region19: #{discriminator_forward.12} parent=0 // pred_check_branch
    %88 = sbr.rel (0) target = $region21
  $region20: #{discriminator_forward.12} parent=0 // pred_region
    _
  $region21: #{discriminator_forward.12} parent=0 // pred_fallthru
    _
  // Predicated region
  $region22: #{discriminator_forward.12} parent=0 // pred_check
    _
  $region23: #{discriminator_forward.12} parent=0 // pred_check_branch
    %90 = sbr.rel (0) target = $region25
  $region24: #{discriminator_forward.12} parent=0 // pred_region
    _
  $region25: #{discriminator_forward.12} parent=0 // pred_fallthru
    _

// kernel: discriminator_forward.11
$region0: #{discriminator_forward.11}
  #allocation0 [shape = 'u32[]', space=smem, size = 0x4, offset = 0x4, fixed_abs, tag = 'smem constant byte address 0x4 - core index']
  #allocation1 [shape = 'u32[144,128]{1,0:T(1,128)}', space=vmem, size = 0x12000, scoped, tag = 'internal scratch']
  %s0 = inlined_call_operand.vmem [shape: bf16[32,256], index: 0, kind: input, shape index: {}]
  %s1 = inlined_call_operand.vmem [shape: bf16[256,128], index: 1, kind: input, shape index: {}]
  %s2 = inlined_call_operand.vmem [shape: f32[32,128], index: 2, kind: output, shape index: {0}]
  %s3 = inlined_call_operand.vmem [shape: f32[1,128], index: 3, kind: output, shape index: {1}]
  %s4 = inlined_call_operand.vmem [shape: f32[1,128], index: 4, kind: output, shape index: {2}]
  %5 = xla_tuple %s2, %s3, %s4
  %s6 = sld [smem:[#allocation0]]
  $region38: #{discriminator_forward.11} parent=0
    _
  %s8 = ssub.s32 1, %s6
  %s9 = scalar_select 0, %s8, %s6
  // Predicated region
  $region2: #{discriminator_forward.11} parent=0 // pred_check
    _
  $region3: #{discriminator_forward.11} parent=0 // pred_check_branch
    %11 = sbr.rel (0) target = $region5
  $region4: #{discriminator_forward.11} parent=0 // pred_region
    _
  $region5: #{discriminator_forward.11} parent=0 // pred_fallthru
    _
  // Predicated region
  $region6: #{discriminator_forward.11} parent=0 // pred_check
    _
  $region7: #{discriminator_forward.11} parent=0 // pred_check_branch
    %13 = sbr.rel (0) target = $region9
  $region8: #{discriminator_forward.11} parent=0 // pred_region
    _
  $region9: #{discriminator_forward.11} parent=0 // pred_fallthru
    _
  %v15 = vld [vmem:[%s0] sm:$0xff]
  %v16 = vld [vmem:[%s0 + $0x8] sm:$0xff]
  %v17 = vld [vmem:[%s0 + $0x10] sm:$0xff]
  %v18 = vld [vmem:[%s0 + $0x18] sm:$0xff]
  %v19 = vld [vmem:[%s1] sm:$0xf]
  %v20 = vld [vmem:[%s1 + $0x4] sm:$0xf]
  %v21 = vld [vmem:[%s1 + $0x8] sm:$0xf]
  %v22 = vld [vmem:[%s1 + $0xc] sm:$0xf]
  %v23 = vld [vmem:[%s1 + $0x10] sm:$0xf]
  %v24 = vld [vmem:[%s1 + $0x14] sm:$0xf]
  %v25 = vld [vmem:[%s1 + $0x18] sm:$0xf]
  %v26 = vld [vmem:[%s1 + $0x1c] sm:$0xf]
  %v27 = vld [vmem:[%s1 + $0x20] sm:$0xf]
  %v28 = vld [vmem:[%s1 + $0x24] sm:$0xf]
  %v29 = vld [vmem:[%s1 + $0x28] sm:$0xf]
  %v30 = vld [vmem:[%s1 + $0x2c] sm:$0xf]
  %v31 = vld [vmem:[%s1 + $0x30] sm:$0xf]
  %v32 = vld [vmem:[%s1 + $0x34] sm:$0xf]
  %v33 = vld [vmem:[%s1 + $0x38] sm:$0xf]
  %v34 = vld [vmem:[%s1 + $0x3c] sm:$0xf]
  %v35 = vld [vmem:[%s1 + $0x40] sm:$0xf]
  %v36 = vld [vmem:[%s1 + $0x44] sm:$0xf]
  %v37 = vld [vmem:[%s1 + $0x48] sm:$0xf]
  %v38 = vld [vmem:[%s1 + $0x4c] sm:$0xf]
  %v39 = vld [vmem:[%s1 + $0x50] sm:$0xf]
  %v40 = vld [vmem:[%s1 + $0x54] sm:$0xf]
  %v41 = vld [vmem:[%s1 + $0x58] sm:$0xf]
  %v42 = vld [vmem:[%s1 + $0x5c] sm:$0xf]
  %v43 = vld [vmem:[%s1 + $0x60] sm:$0xf]
  %v44 = vld [vmem:[%s1 + $0x64] sm:$0xf]
  %v45 = vld [vmem:[%s1 + $0x68] sm:$0xf]
  %v46 = vld [vmem:[%s1 + $0x6c] sm:$0xf]
  %v47 = vld [vmem:[%s1 + $0x70] sm:$0xf]
  %v48 = vld [vmem:[%s1 + $0x74] sm:$0xf]
  %v49 = vld [vmem:[%s1 + $0x78] sm:$0xf]
  %v50 = vld [vmem:[%s1 + $0x7c] sm:$0xf]
  %v55 = vunpack.c.l.b16 %v15
  %v56 = vunpack.c.h.b16 %v15
  %v57 = vunpack.c.l.b16 %v16
  %v58 = vunpack.c.h.b16 %v16
  %v59 = vunpack.c.l.b16 %v17
  %v60 = vunpack.c.h.b16 %v17
  %v61 = vunpack.c.l.b16 %v18
  %v62 = vunpack.c.h.b16 %v18
  %v63 = vpack.c.b16 %v57, %v55
  %v64 = vpack.c.b16 %v58, %v56
  %v65 = vpack.c.b16 %v61, %v59
  %v66 = vpack.c.b16 %v62, %v60
  %v103 = vunpack.c.l.b16 %v19
  %v104 = vunpack.c.l.b16 %v20
  %v105 = vunpack.c.l.b16 %v21
  %v106 = vunpack.c.l.b16 %v22
  %v107 = vunpack.c.l.b16 %v23
  %v108 = vunpack.c.l.b16 %v24
  %v109 = vunpack.c.l.b16 %v25
  %v110 = vunpack.c.l.b16 %v26
  %v111 = vunpack.c.l.b16 %v27
  %v112 = vunpack.c.l.b16 %v28
  %v113 = vunpack.c.l.b16 %v29
  %v114 = vunpack.c.l.b16 %v30
  %v115 = vunpack.c.l.b16 %v31
  %v116 = vunpack.c.l.b16 %v32
  %v117 = vunpack.c.l.b16 %v33
  %v118 = vunpack.c.l.b16 %v34
  %v119 = vunpack.c.l.b16 %v35
  %v120 = vunpack.c.l.b16 %v36
  %v121 = vunpack.c.l.b16 %v37
  %v122 = vunpack.c.l.b16 %v38
  %v123 = vunpack.c.l.b16 %v39
  %v124 = vunpack.c.l.b16 %v40
  %v125 = vunpack.c.l.b16 %v41
  %v126 = vunpack.c.l.b16 %v42
  %v127 = vunpack.c.l.b16 %v43
  %v128 = vunpack.c.l.b16 %v44
  %v129 = vunpack.c.l.b16 %v45
  %v130 = vunpack.c.l.b16 %v46
  %v131 = vunpack.c.l.b16 %v47
  %v132 = vunpack.c.l.b16 %v48
  %v133 = vunpack.c.l.b16 %v49
  %v134 = vunpack.c.l.b16 %v50
  %v135 = vpack.c.b16 %v104, %v103
  %v136 = vpack.c.b16 %v106, %v105
  %v137 = vpack.c.b16 %v108, %v107
  %v138 = vpack.c.b16 %v110, %v109
  %v139 = vpack.c.b16 %v112, %v111
  %v140 = vpack.c.b16 %v114, %v113
  %v141 = vpack.c.b16 %v116, %v115
  %v142 = vpack.c.b16 %v118, %v117
  %v143 = vpack.c.b16 %v120, %v119
  %v144 = vpack.c.b16 %v122, %v121
  %v145 = vpack.c.b16 %v124, %v123
  %v146 = vpack.c.b16 %v126, %v125
  %v147 = vpack.c.b16 %v128, %v127
  %v148 = vpack.c.b16 %v130, %v129
  %v149 = vpack.c.b16 %v132, %v131
  %v150 = vpack.c.b16 %v134, %v133
  %167 = vmatprep.subr.bf16.mxu0 0
  %168 = vmatpush1.bf16.msra.mxu0 %v135
  %169 = vmatprep.subr.bf16.mxu0 0
  %170 = vmatpush1.bf16.msra.mxu0 %v136
  %171 = vmatprep.subr.bf16.mxu0 0
  %172 = vmatpush1.bf16.msra.mxu0 %v137
  %173 = vmatprep.subr.bf16.mxu0 0
  %174 = vmatpush1.bf16.msra.mxu0 %v138
  %175 = vmatprep.subr.bf16.mxu0 0
  %176 = vmatpush1.bf16.msra.mxu0 %v139
  %177 = vmatprep.subr.bf16.mxu0 0
  %178 = vmatpush1.bf16.msra.mxu0 %v140
  %179 = vmatprep.subr.bf16.mxu0 0
  %180 = vmatpush1.bf16.msra.mxu0 %v141
  %181 = vmatprep.subr.bf16.mxu0 0
  %182 = vmatpush1.bf16.msra.mxu0 %v142
  %183 = vmatprep.subr.bf16.mxu0 0
  %184 = vmatpush1.bf16.msra.mxu0 %v143
  %185 = vmatprep.subr.bf16.mxu0 0
  %186 = vmatpush1.bf16.msra.mxu0 %v144
  %187 = vmatprep.subr.bf16.mxu0 0
  %188 = vmatpush1.bf16.msra.mxu0 %v145
  %189 = vmatprep.subr.bf16.mxu0 0
  %190 = vmatpush1.bf16.msra.mxu0 %v146
  %191 = vmatprep.subr.bf16.mxu0 0
  %192 = vmatpush1.bf16.msra.mxu0 %v147
  %193 = vmatprep.subr.bf16.mxu0 0
  %194 = vmatpush1.bf16.msra.mxu0 %v148
  %195 = vmatprep.subr.bf16.mxu0 0
  %196 = vmatpush1.bf16.msra.mxu0 %v149
  %197 = vmatprep.subr.bf16.mxu0 0
  %198 = vmatpush1.bf16.msra.mxu0 %v150
  %199 = vmatprep.mubr.bf16.mxu0 %v64
  %200 = vmatmul.mubr.bf16.gmra.mrb[0].mxu0 %v63
  %v201 = vpop.f32.mrb[0].mxu0
  %v202 = vadd.f32 0.0, %v201
  %v203 = vpop.f32.mrb[0].mxu0
  %v204 = vpop.f32.mrb[0].mxu0
  %v205 = vadd.f32 0.0, %v204
  %v206 = vpop.f32.mrb[0].mxu0
  %207 = vmatprep.mubr.bf16.mxu0 %v66
  %208 = vmatmul.mubr.bf16.gmra.mrb[0].mxu0 %v65
  %v209 = vpop.f32.mrb[0].mxu0
  %v210 = vadd.f32 0.0, %v209
  %v211 = vpop.f32.mrb[0].mxu0
  %v212 = vpop.f32.mrb[0].mxu0
  %v213 = vadd.f32 0.0, %v212
  %v214 = vpop.f32.mrb[0].mxu0
  %215 = vdwg.mxu0
  %216 = vst [vmem:[%s2] sm:$0xff] %v202
  %217 = vst [vmem:[%s2 + $0x8] sm:$0xff] %v205
  %218 = vst [vmem:[%s2 + $0x10] sm:$0xff] %v210
  %219 = vst [vmem:[%s2 + $0x18] sm:$0xff] %v213
  %p220 = scmp.eq.s32.totalorder 0, 0
  // Predicated region
  $region10: #{discriminator_forward.11} parent=0 // pred_check
    %p221 = pneg %p220
  $region11: #{discriminator_forward.11} parent=0 // pred_check_branch
    %223 = sbr.rel (%p221) target = $region13
  $region12: #{discriminator_forward.11} parent=0 // pred_region
    %224 = vst [vmem:[%s3] sm:$0x1] 0.0
    %225 = vst [vmem:[%s4] sm:$0x1] 0.0
  $region13: #{discriminator_forward.11} parent=0 // pred_fallthru
    _
  %v226 = vld [vmem:[%s3] sm:$0x1]
  %v227 = vadd.f32 %v202, %v205
  %v228 = vadd.f32 %v227, %v210
  %v229 = vadd.f32 %v228, %v213
  %v230 = vrot.slane %v229, 4
  %v231 = vadd.f32 %v229, %v230
  %v232 = vrot.slane %v231, 2
  %v233 = vadd.f32 %v231, %v232
  %v234 = vrot.slane %v233, 1
  %v235 = vadd.f32 %v233, %v234
  %v236 = vadd.f32 %v226, %v235
  %237 = vst [vmem:[%s3] sm:$0x1] %v236
  %v238 = vld [vmem:[%s4] sm:$0x1]
  %v239 = vmul.f32 %v202, %v202
  %v240 = vmul.f32 %v205, %v205
  %v241 = vmul.f32 %v210, %v210
  %v242 = vmul.f32 %v213, %v213
  %v243 = vadd.f32 %v239, %v240
  %v244 = vadd.f32 %v243, %v241
  %v245 = vadd.f32 %v244, %v242
  %v246 = vrot.slane %v245, 4
  %v247 = vadd.f32 %v245, %v246
  %v248 = vrot.slane %v247, 2
  %v249 = vadd.f32 %v247, %v248
  %v250 = vrot.slane %v249, 1
  %v251 = vadd.f32 %v249, %v250
  %v252 = vadd.f32 %v238, %v251
  %253 = vst [vmem:[%s4] sm:$0x1] %v252
  // Predicated region
  $region14: #{discriminator_forward.11} parent=0 // pred_check
    _
  $region15: #{discriminator_forward.11} parent=0 // pred_check_branch
    %255 = sbr.rel (0) target = $region17
  $region16: #{discriminator_forward.11} parent=0 // pred_region
    _
  $region17: #{discriminator_forward.11} parent=0 // pred_fallthru
    _
  // Predicated region
  $region18: #{discriminator_forward.11} parent=0 // pred_check
    _
  $region19: #{discriminator_forward.11} parent=0 // pred_check_branch
    %257 = sbr.rel (0) target = $region21
  $region20: #{discriminator_forward.11} parent=0 // pred_region
    _
  $region21: #{discriminator_forward.11} parent=0 // pred_fallthru
    _
  // Predicated region
  $region22: #{discriminator_forward.11} parent=0 // pred_check
    _
  $region23: #{discriminator_forward.11} parent=0 // pred_check_branch
    %259 = sbr.rel (0) target = $region25
  $region24: #{discriminator_forward.11} parent=0 // pred_region
    _
  $region25: #{discriminator_forward.11} parent=0 // pred_fallthru
    _
  // Predicated region
  $region26: #{discriminator_forward.11} parent=0 // pred_check
    _
  $region27: #{discriminator_forward.11} parent=0 // pred_check_branch
    %261 = sbr.rel (0) target = $region29
  $region28: #{discriminator_forward.11} parent=0 // pred_region
    _
  $region29: #{discriminator_forward.11} parent=0 // pred_fallthru
    _
  // Predicated region
  $region30: #{discriminator_forward.11} parent=0 // pred_check
    _
  $region31: #{discriminator_forward.11} parent=0 // pred_check_branch
    %263 = sbr.rel (0) target = $region33
  $region32: #{discriminator_forward.11} parent=0 // pred_region
    _
  $region33: #{discriminator_forward.11} parent=0 // pred_fallthru
    _
  // Predicated region
  $region34: #{discriminator_forward.11} parent=0 // pred_check
    _
  $region35: #{discriminator_forward.11} parent=0 // pred_check_branch
    %265 = sbr.rel (0) target = $region37
  $region36: #{discriminator_forward.11} parent=0 // pred_region
    _
  $region37: #{discriminator_forward.11} parent=0 // pred_fallthru
    _

// kernel: discriminator_forward.13
$region0: #{discriminator_forward.13}
  #allocation0 [shape = 'u32[]', space=smem, size = 0x4, offset = 0x4, fixed_abs, tag = 'smem constant byte address 0x4 - core index']
  #allocation1 [shape = 'u32[144,128]{1,0:T(1,128)}', space=vmem, size = 0x12000, scoped, tag = 'internal scratch']
  %s0 = inlined_call_operand.vmem [shape: bf16[8,512], index: 0, kind: input, shape index: {}]
  %s1 = inlined_call_operand.vmem [shape: bf16[512,128], index: 1, kind: input, shape index: {}]
  %s2 = inlined_call_operand.vmem [shape: f32[8,128], index: 2, kind: output, shape index: {0}]
  %s3 = inlined_call_operand.vmem [shape: f32[1,128], index: 3, kind: output, shape index: {1}]
  %s4 = inlined_call_operand.vmem [shape: f32[1,128], index: 4, kind: output, shape index: {2}]
  %5 = xla_tuple %s2, %s3, %s4
  %s6 = sld [smem:[#allocation0]]
  $region38: #{discriminator_forward.13} parent=0
    _
  %s8 = ssub.s32 1, %s6
  %s9 = scalar_select 0, %s8, %s6
  // Predicated region
  $region2: #{discriminator_forward.13} parent=0 // pred_check
    _
  $region3: #{discriminator_forward.13} parent=0 // pred_check_branch
    %11 = sbr.rel (0) target = $region5
  $region4: #{discriminator_forward.13} parent=0 // pred_region
    _
  $region5: #{discriminator_forward.13} parent=0 // pred_fallthru
    _
  // Predicated region
  $region6: #{discriminator_forward.13} parent=0 // pred_check
    _
  $region7: #{discriminator_forward.13} parent=0 // pred_check_branch
    %13 = sbr.rel (0) target = $region9
  $region8: #{discriminator_forward.13} parent=0 // pred_region
    _
  $region9: #{discriminator_forward.13} parent=0 // pred_fallthru
    _
  %v15 = vld [vmem:[%s0] sm:$0xff]
  %v16 = vld [vmem:[%s0 + $0x8] sm:$0xff]
  %v17 = vld [vmem:[%s1] sm:$0xf]
  %v18 = vld [vmem:[%s1 + $0x4] sm:$0xf]
  %v19 = vld [vmem:[%s1 + $0x8] sm:$0xf]
  %v20 = vld [vmem:[%s1 + $0xc] sm:$0xf]
  %v21 = vld [vmem:[%s1 + $0x10] sm:$0xf]
  %v22 = vld [vmem:[%s1 + $0x14] sm:$0xf]
  %v23 = vld [vmem:[%s1 + $0x18] sm:$0xf]
  %v24 = vld [vmem:[%s1 + $0x1c] sm:$0xf]
  %v25 = vld [vmem:[%s1 + $0x20] sm:$0xf]
  %v26 = vld [vmem:[%s1 + $0x24] sm:$0xf]
  %v27 = vld [vmem:[%s1 + $0x28] sm:$0xf]
  %v28 = vld [vmem:[%s1 + $0x2c] sm:$0xf]
  %v29 = vld [vmem:[%s1 + $0x30] sm:$0xf]
  %v30 = vld [vmem:[%s1 + $0x34] sm:$0xf]
  %v31 = vld [vmem:[%s1 + $0x38] sm:$0xf]
  %v32 = vld [vmem:[%s1 + $0x3c] sm:$0xf]
  %v33 = vld [vmem:[%s1 + $0x40] sm:$0xf]
  %v34 = vld [vmem:[%s1 + $0x44] sm:$0xf]
  %v35 = vld [vmem:[%s1 + $0x48] sm:$0xf]
  %v36 = vld [vmem:[%s1 + $0x4c] sm:$0xf]
  %v37 = vld [vmem:[%s1 + $0x50] sm:$0xf]
  %v38 = vld [vmem:[%s1 + $0x54] sm:$0xf]
  %v39 = vld [vmem:[%s1 + $0x58] sm:$0xf]
  %v40 = vld [vmem:[%s1 + $0x5c] sm:$0xf]
  %v41 = vld [vmem:[%s1 + $0x60] sm:$0xf]
  %v42 = vld [vmem:[%s1 + $0x64] sm:$0xf]
  %v43 = vld [vmem:[%s1 + $0x68] sm:$0xf]
  %v44 = vld [vmem:[%s1 + $0x6c] sm:$0xf]
  %v45 = vld [vmem:[%s1 + $0x70] sm:$0xf]
  %v46 = vld [vmem:[%s1 + $0x74] sm:$0xf]
  %v47 = vld [vmem:[%s1 + $0x78] sm:$0xf]
  %v48 = vld [vmem:[%s1 + $0x7c] sm:$0xf]
  %v49 = vld [vmem:[%s1 + $0x80] sm:$0xf]
  %v50 = vld [vmem:[%s1 + $0x84] sm:$0xf]
  %v51 = vld [vmem:[%s1 + $0x88] sm:$0xf]
  %v52 = vld [vmem:[%s1 + $0x8c] sm:$0xf]
  %v53 = vld [vmem:[%s1 + $0x90] sm:$0xf]
  %v54 = vld [vmem:[%s1 + $0x94] sm:$0xf]
  %v55 = vld [vmem:[%s1 + $0x98] sm:$0xf]
  %v56 = vld [vmem:[%s1 + $0x9c] sm:$0xf]
  %v57 = vld [vmem:[%s1 + $0xa0] sm:$0xf]
  %v58 = vld [vmem:[%s1 + $0xa4] sm:$0xf]
  %v59 = vld [vmem:[%s1 + $0xa8] sm:$0xf]
  %v60 = vld [vmem:[%s1 + $0xac] sm:$0xf]
  %v61 = vld [vmem:[%s1 + $0xb0] sm:$0xf]
  %v62 = vld [vmem:[%s1 + $0xb4] sm:$0xf]
  %v63 = vld [vmem:[%s1 + $0xb8] sm:$0xf]
  %v64 = vld [vmem:[%s1 + $0xbc] sm:$0xf]
  %v65 = vld [vmem:[%s1 + $0xc0] sm:$0xf]
  %v66 = vld [vmem:[%s1 + $0xc4] sm:$0xf]
  %v67 = vld [vmem:[%s1 + $0xc8] sm:$0xf]
  %v68 = vld [vmem:[%s1 + $0xcc] sm:$0xf]
  %v69 = vld [vmem:[%s1 + $0xd0] sm:$0xf]
  %v70 = vld [vmem:[%s1 + $0xd4] sm:$0xf]
  %v71 = vld [vmem:[%s1 + $0xd8] sm:$0xf]
  %v72 = vld [vmem:[%s1 + $0xdc] sm:$0xf]
  %v73 = vld [vmem:[%s1 + $0xe0] sm:$0xf]
  %v74 = vld [vmem:[%s1 + $0xe4] sm:$0xf]
  %v75 = vld [vmem:[%s1 + $0xe8] sm:$0xf]
  %v76 = vld [vmem:[%s1 + $0xec] sm:$0xf]
  %v77 = vld [vmem:[%s1 + $0xf0] sm:$0xf]
  %v78 = vld [vmem:[%s1 + $0xf4] sm:$0xf]
  %v79 = vld [vmem:[%s1 + $0xf8] sm:$0xf]
  %v80 = vld [vmem:[%s1 + $0xfc] sm:$0xf]
  %v83 = vunpack.c.l.b16 %v15
  %v84 = vunpack.c.h.b16 %v15
  %v85 = vunpack.c.l.b16 %v16
  %v86 = vunpack.c.h.b16 %v16
  %v87 = vpack.c.b16 %v83, %v83
  %v88 = vpack.c.b16 %v84, %v84
  %v89 = vpack.c.b16 %v85, %v85
  %v90 = vpack.c.b16 %v86, %v86
  %v159 = vunpack.c.l.b16 %v17
  %v160 = vunpack.c.l.b16 %v18
  %v161 = vunpack.c.l.b16 %v19
  %v162 = vunpack.c.l.b16 %v20
  %v163 = vunpack.c.l.b16 %v21
  %v164 = vunpack.c.l.b16 %v22
  %v165 = vunpack.c.l.b16 %v23
  %v166 = vunpack.c.l.b16 %v24
  %v167 = vunpack.c.l.b16 %v25
  %v168 = vunpack.c.l.b16 %v26
  %v169 = vunpack.c.l.b16 %v27
  %v170 = vunpack.c.l.b16 %v28
  %v171 = vunpack.c.l.b16 %v29
  %v172 = vunpack.c.l.b16 %v30
  %v173 = vunpack.c.l.b16 %v31
  %v174 = vunpack.c.l.b16 %v32
  %v175 = vunpack.c.l.b16 %v33
  %v176 = vunpack.c.l.b16 %v34
  %v177 = vunpack.c.l.b16 %v35
  %v178 = vunpack.c.l.b16 %v36
  %v179 = vunpack.c.l.b16 %v37
  %v180 = vunpack.c.l.b16 %v38
  %v181 = vunpack.c.l.b16 %v39
  %v182 = vunpack.c.l.b16 %v40
  %v183 = vunpack.c.l.b16 %v41
  %v184 = vunpack.c.l.b16 %v42
  %v185 = vunpack.c.l.b16 %v43
  %v186 = vunpack.c.l.b16 %v44
  %v187 = vunpack.c.l.b16 %v45
  %v188 = vunpack.c.l.b16 %v46
  %v189 = vunpack.c.l.b16 %v47
  %v190 = vunpack.c.l.b16 %v48
  %v191 = vunpack.c.l.b16 %v49
  %v192 = vunpack.c.l.b16 %v50
  %v193 = vunpack.c.l.b16 %v51
  %v194 = vunpack.c.l.b16 %v52
  %v195 = vunpack.c.l.b16 %v53
  %v196 = vunpack.c.l.b16 %v54
  %v197 = vunpack.c.l.b16 %v55
  %v198 = vunpack.c.l.b16 %v56
  %v199 = vunpack.c.l.b16 %v57
  %v200 = vunpack.c.l.b16 %v58
  %v201 = vunpack.c.l.b16 %v59
  %v202 = vunpack.c.l.b16 %v60
  %v203 = vunpack.c.l.b16 %v61
  %v204 = vunpack.c.l.b16 %v62
  %v205 = vunpack.c.l.b16 %v63
  %v206 = vunpack.c.l.b16 %v64
  %v207 = vunpack.c.l.b16 %v65
  %v208 = vunpack.c.l.b16 %v66
  %v209 = vunpack.c.l.b16 %v67
  %v210 = vunpack.c.l.b16 %v68
  %v211 = vunpack.c.l.b16 %v69
  %v212 = vunpack.c.l.b16 %v70
  %v213 = vunpack.c.l.b16 %v71
  %v214 = vunpack.c.l.b16 %v72
  %v215 = vunpack.c.l.b16 %v73
  %v216 = vunpack.c.l.b16 %v74
  %v217 = vunpack.c.l.b16 %v75
  %v218 = vunpack.c.l.b16 %v76
  %v219 = vunpack.c.l.b16 %v77
  %v220 = vunpack.c.l.b16 %v78
  %v221 = vunpack.c.l.b16 %v79
  %v222 = vunpack.c.l.b16 %v80
  %v223 = vpack.c.b16 %v160, %v159
  %v224 = vpack.c.b16 %v162, %v161
  %v225 = vpack.c.b16 %v164, %v163
  %v226 = vpack.c.b16 %v166, %v165
  %v227 = vpack.c.b16 %v168, %v167
  %v228 = vpack.c.b16 %v170, %v169
  %v229 = vpack.c.b16 %v172, %v171
  %v230 = vpack.c.b16 %v174, %v173
  %v231 = vpack.c.b16 %v176, %v175
  %v232 = vpack.c.b16 %v178, %v177
  %v233 = vpack.c.b16 %v180, %v179
  %v234 = vpack.c.b16 %v182, %v181
  %v235 = vpack.c.b16 %v184, %v183
  %v236 = vpack.c.b16 %v186, %v185
  %v237 = vpack.c.b16 %v188, %v187
  %v238 = vpack.c.b16 %v190, %v189
  %v239 = vpack.c.b16 %v192, %v191
  %v240 = vpack.c.b16 %v194, %v193
  %v241 = vpack.c.b16 %v196, %v195
  %v242 = vpack.c.b16 %v198, %v197
  %v243 = vpack.c.b16 %v200, %v199
  %v244 = vpack.c.b16 %v202, %v201
  %v245 = vpack.c.b16 %v204, %v203
  %v246 = vpack.c.b16 %v206, %v205
  %v247 = vpack.c.b16 %v208, %v207
  %v248 = vpack.c.b16 %v210, %v209
  %v249 = vpack.c.b16 %v212, %v211
  %v250 = vpack.c.b16 %v214, %v213
  %v251 = vpack.c.b16 %v216, %v215
  %v252 = vpack.c.b16 %v218, %v217
  %v253 = vpack.c.b16 %v220, %v219
  %v254 = vpack.c.b16 %v222, %v221
  %287 = vmatprep.subr.bf16.mxu0 0
  %288 = vmatpush1.bf16.msra.mxu0 %v223
  %289 = vmatprep.subr.bf16.mxu0 0
  %290 = vmatpush1.bf16.msra.mxu0 %v224
  %291 = vmatprep.subr.bf16.mxu0 0
  %292 = vmatpush1.bf16.msra.mxu0 %v225
  %293 = vmatprep.subr.bf16.mxu0 0
  %294 = vmatpush1.bf16.msra.mxu0 %v226
  %295 = vmatprep.subr.bf16.mxu0 0
  %296 = vmatpush1.bf16.msra.mxu0 %v227
  %297 = vmatprep.subr.bf16.mxu0 0
  %298 = vmatpush1.bf16.msra.mxu0 %v228
  %299 = vmatprep.subr.bf16.mxu0 0
  %300 = vmatpush1.bf16.msra.mxu0 %v229
  %301 = vmatprep.subr.bf16.mxu0 0
  %302 = vmatpush1.bf16.msra.mxu0 %v230
  %303 = vmatprep.subr.bf16.mxu0 0
  %304 = vmatpush1.bf16.msra.mxu0 %v231
  %305 = vmatprep.subr.bf16.mxu0 0
  %306 = vmatpush1.bf16.msra.mxu0 %v232
  %307 = vmatprep.subr.bf16.mxu0 0
  %308 = vmatpush1.bf16.msra.mxu0 %v233
  %309 = vmatprep.subr.bf16.mxu0 0
  %310 = vmatpush1.bf16.msra.mxu0 %v234
  %311 = vmatprep.subr.bf16.mxu0 0
  %312 = vmatpush1.bf16.msra.mxu0 %v235
  %313 = vmatprep.subr.bf16.mxu0 0
  %314 = vmatpush1.bf16.msra.mxu0 %v236
  %315 = vmatprep.subr.bf16.mxu0 0
  %316 = vmatpush1.bf16.msra.mxu0 %v237
  %317 = vmatprep.subr.bf16.mxu0 0
  %318 = vmatpush1.bf16.msra.mxu0 %v238
  %319 = vmatprep.mubr.bf16.mxu0 %v88
  %320 = vmatmul.mubr.bf16.gmra.mrb[0].mxu0 %v87
  %v321 = vpop.f32.mrb[0].mxu0
  %v322 = vadd.f32 0.0, %v321
  %v323 = vpop.f32.mrb[0].mxu0
  %v324 = vpop.f32.mrb[0].mxu0
  %v325 = vpop.f32.mrb[0].mxu0
  %326 = vdwg.mxu0
  %327 = vmatprep.subr.bf16.mxu0 0
  %328 = vmatpush1.bf16.msra.mxu0 %v239
  %329 = vmatprep.subr.bf16.mxu0 0
  %330 = vmatpush1.bf16.msra.mxu0 %v240
  %331 = vmatprep.subr.bf16.mxu0 0
  %332 = vmatpush1.bf16.msra.mxu0 %v241
  %333 = vmatprep.subr.bf16.mxu0 0
  %334 = vmatpush1.bf16.msra.mxu0 %v242
  %335 = vmatprep.subr.bf16.mxu0 0
  %336 = vmatpush1.bf16.msra.mxu0 %v243
  %337 = vmatprep.subr.bf16.mxu0 0
  %338 = vmatpush1.bf16.msra.mxu0 %v244
  %339 = vmatprep.subr.bf16.mxu0 0
  %340 = vmatpush1.bf16.msra.mxu0 %v245
  %341 = vmatprep.subr.bf16.mxu0 0
  %342 = vmatpush1.bf16.msra.mxu0 %v246
  %343 = vmatprep.subr.bf16.mxu0 0
  %344 = vmatpush1.bf16.msra.mxu0 %v247
  %345 = vmatprep.subr.bf16.mxu0 0
  %346 = vmatpush1.bf16.msra.mxu0 %v248
  %347 = vmatprep.subr.bf16.mxu0 0
  %348 = vmatpush1.bf16.msra.mxu0 %v249
  %349 = vmatprep.subr.bf16.mxu0 0
  %350 = vmatpush1.bf16.msra.mxu0 %v250
  %351 = vmatprep.subr.bf16.mxu0 0
  %352 = vmatpush1.bf16.msra.mxu0 %v251
  %353 = vmatprep.subr.bf16.mxu0 0
  %354 = vmatpush1.bf16.msra.mxu0 %v252
  %355 = vmatprep.subr.bf16.mxu0 0
  %356 = vmatpush1.bf16.msra.mxu0 %v253
  %357 = vmatprep.subr.bf16.mxu0 0
  %358 = vmatpush1.bf16.msra.mxu0 %v254
  %359 = vmatprep.mubr.bf16.mxu0 %v90
  %360 = vmatmul.mubr.bf16.gmra.mrb[0].mxu0 %v89
  %v361 = vpop.f32.mrb[0].mxu0
  %v362 = vadd.f32 %v322, %v361
  %v363 = vpop.f32.mrb[0].mxu0
  %v364 = vpop.f32.mrb[0].mxu0
  %v365 = vpop.f32.mrb[0].mxu0
  %366 = vdwg.mxu0
  %367 = vst [vmem:[%s2] sm:$0xff] %v362
  %p368 = scmp.eq.s32.totalorder 0, 0
  // Predicated region
  $region10: #{discriminator_forward.13} parent=0 // pred_check
    %p369 = pneg %p368
  $region11: #{discriminator_forward.13} parent=0 // pred_check_branch
    %371 = sbr.rel (%p369) target = $region13
  $region12: #{discriminator_forward.13} parent=0 // pred_region
    %372 = vst [vmem:[%s3] sm:$0x1] 0.0
    %373 = vst [vmem:[%s4] sm:$0x1] 0.0
  $region13: #{discriminator_forward.13} parent=0 // pred_fallthru
    _
  %v374 = vld [vmem:[%s3] sm:$0x1]
  %v375 = vrot.slane %v362, 4
  %v376 = vadd.f32 %v362, %v375
  %v377 = vrot.slane %v376, 2
  %v378 = vadd.f32 %v376, %v377
  %v379 = vrot.slane %v378, 1
  %v380 = vadd.f32 %v378, %v379
  %v381 = vadd.f32 %v374, %v380
  %382 = vst [vmem:[%s3] sm:$0x1] %v381
  %v383 = vld [vmem:[%s4] sm:$0x1]
  %v384 = vmul.f32 %v362, %v362
  %v385 = vrot.slane %v384, 4
  %v386 = vadd.f32 %v384, %v385
  %v387 = vrot.slane %v386, 2
  %v388 = vadd.f32 %v386, %v387
  %v389 = vrot.slane %v388, 1
  %v390 = vadd.f32 %v388, %v389
  %v391 = vadd.f32 %v383, %v390
  %392 = vst [vmem:[%s4] sm:$0x1] %v391
  // Predicated region
  $region14: #{discriminator_forward.13} parent=0 // pred_check
    _
  $region15: #{discriminator_forward.13} parent=0 // pred_check_branch
    %394 = sbr.rel (0) target = $region17
  $region16: #{discriminator_forward.13} parent=0 // pred_region
    _
  $region17: #{discriminator_forward.13} parent=0 // pred_fallthru
    _
  // Predicated region
  $region18: #{discriminator_forward.13} parent=0 // pred_check
    _
  $region19: #{discriminator_forward.13} parent=0 // pred_check_branch
    %396 = sbr.rel (0) target = $region21
  $region20: #{discriminator_forward.13} parent=0 // pred_region
    _
  $region21: #{discriminator_forward.13} parent=0 // pred_fallthru
    _
  // Predicated region
  $region22: #{discriminator_forward.13} parent=0 // pred_check
    _
  $region23: #{discriminator_forward.13} parent=0 // pred_check_branch
    %398 = sbr.rel (0) target = $region25
  $region24: #{discriminator_forward.13} parent=0 // pred_region
    _
  $region25: #{discriminator_forward.13} parent=0 // pred_fallthru
    _
  // Predicated region
  $region26: #{discriminator_forward.13} parent=0 // pred_check
    _
  $region27: #{discriminator_forward.13} parent=0 // pred_check_branch
    %400 = sbr.rel (0) target = $region29
  $region28: #{discriminator_forward.13} parent=0 // pred_region
    _
  $region29: #{discriminator_forward.13} parent=0 // pred_fallthru
    _
  // Predicated region
  $region30: #{discriminator_forward.13} parent=0 // pred_check
    _
  $region31: #{discriminator_forward.13} parent=0 // pred_check_branch
    %402 = sbr.rel (0) target = $region33
  $region32: #{discriminator_forward.13} parent=0 // pred_region
    _
  $region33: #{discriminator_forward.13} parent=0 // pred_fallthru
    _
  // Predicated region
  $region34: #{discriminator_forward.13} parent=0 // pred_check
    _
  $region35: #{discriminator_forward.13} parent=0 // pred_check_branch
    %404 = sbr.rel (0) target = $region37
  $region36: #{discriminator_forward.13} parent=0 // pred_region
    _
  $region37: #{discriminator_forward.13} parent=0 // pred_fallthru
    _

// kernel: discriminator_forward.14
$region0: #{discriminator_forward.14}
  #allocation0 [shape = 'u32[]', space=smem, size = 0x4, offset = 0x4, fixed_abs, tag = 'smem constant byte address 0x4 - core index']
  #allocation1 [shape = 'u32[144,128]{1,0:T(1,128)}', space=vmem, size = 0x12000, scoped, tag = 'internal scratch']
  %s0 = inlined_call_operand.vmem [shape: f32[8,128], index: 0, kind: input, shape index: {}]
  %s1 = inlined_call_operand.vmem [shape: f32[1,128], index: 1, kind: input, shape index: {}]
  %s2 = inlined_call_operand.vmem [shape: f32[1,128], index: 2, kind: input, shape index: {}]
  %s3 = inlined_call_operand.vmem [shape: f32[2,128], index: 3, kind: input, shape index: {}]
  %s4 = inlined_call_operand.vmem [shape: bf16[8,128], index: 4, kind: output, shape index: {}]
  %s5 = sld [smem:[#allocation0]]
  $region26: #{discriminator_forward.14} parent=0
    _
  %s7 = ssub.s32 1, %s5
  %s8 = scalar_select 0, %s7, %s5
  // Predicated region
  $region2: #{discriminator_forward.14} parent=0 // pred_check
    _
  $region3: #{discriminator_forward.14} parent=0 // pred_check_branch
    %10 = sbr.rel (0) target = $region5
  $region4: #{discriminator_forward.14} parent=0 // pred_region
    _
  $region5: #{discriminator_forward.14} parent=0 // pred_fallthru
    _
  // Predicated region
  $region6: #{discriminator_forward.14} parent=0 // pred_check
    _
  $region7: #{discriminator_forward.14} parent=0 // pred_check_branch
    %12 = sbr.rel (0) target = $region9
  $region8: #{discriminator_forward.14} parent=0 // pred_region
    _
  $region9: #{discriminator_forward.14} parent=0 // pred_fallthru
    _
  // Predicated region
  $region10: #{discriminator_forward.14} parent=0 // pred_check
    _
  $region11: #{discriminator_forward.14} parent=0 // pred_check_branch
    %14 = sbr.rel (0) target = $region13
  $region12: #{discriminator_forward.14} parent=0 // pred_region
    _
  $region13: #{discriminator_forward.14} parent=0 // pred_fallthru
    _
  // Predicated region
  $region14: #{discriminator_forward.14} parent=0 // pred_check
    _
  $region15: #{discriminator_forward.14} parent=0 // pred_check_branch
    %16 = sbr.rel (0) target = $region17
  $region16: #{discriminator_forward.14} parent=0 // pred_region
    _
  $region17: #{discriminator_forward.14} parent=0 // pred_fallthru
    _
  %v17 = vld [vmem:[%s1] sm:$0x1]
  %v18 = vmul.f32 %v17, 0.125
  %v19 = vld [vmem:[%s2] sm:$0x1]
  %v20 = vmul.f32 %v19, 0.125
  %v21 = vmul.f32 %v18, %v18
  %v22 = vsub.f32 %v20, %v21
  %v23 = vld [vmem:[%s3] sm:$0x3]
  %v24 = vadd.f32 %v22, 1e-05
  %v25 = vrsqrt.pop %v24
  %v26 = vmul.f32 %v23, %v25
  %v27 = vmul.f32 %v18, %v26
  %v29 = vlaneseq
  %v30 = vshrl.u32 %v29, 7
  %v31 = vsub.s32 0, %v30
  %v32 = vrot.slane %v27, %v31
  %v34 = vsub.f32 %v23, %v32
  %v35 = vld [vmem:[%s0] sm:$0xff]
  %v36 = vlaneseq
  %v37 = vshrl.u32 %v36, 7
  %v38 = vsub.s32 0, %v37
  %v39 = vrot.slane %v26, %v38
  %v40 = vmul.f32 %v35, %v39
  %v41 = vlaneseq
  %v42 = vshrl.u32 %v41, 7
  %v43 = vsub.s32 1, %v42
  %v44 = vrot.slane %v34, %v43
  %v45 = vadd.f32 %v40, %v44
  %vm46 = vcmp.gt.f32.partialorder %v45, 0.0
  %v47 = vmul.f32 %v45, 0.2
  %v48 = vsel %vm46, %v45, %v47
  %v49 = vpack.c.bf16 %v48, %v48
  %50 = vst [vmem:[%s4] sm:$0xf] %v49
  // Predicated region
  $region18: #{discriminator_forward.14} parent=0 // pred_check
    _
  $region19: #{discriminator_forward.14} parent=0 // pred_check_branch
    %52 = sbr.rel (0) target = $region21
  $region20: #{discriminator_forward.14} parent=0 // pred_region
    _
  $region21: #{discriminator_forward.14} parent=0 // pred_fallthru
    _
  // Predicated region
  $region22: #{discriminator_forward.14} parent=0 // pred_check
    _
  $region23: #{discriminator_forward.14} parent=0 // pred_check_branch
    %54 = sbr.rel (0) target = $region25
  $region24: #{discriminator_forward.14} parent=0 // pred_region
    _
  $region25: #{discriminator_forward.14} parent=0 // pred_fallthru
    _

// kernel: discriminator_forward.15
$region0: #{discriminator_forward.15}
  #allocation0 [shape = 'u32[]', space=smem, size = 0x4, offset = 0x4, fixed_abs, tag = 'smem constant byte address 0x4 - core index']
  #allocation1 [shape = 'u32[144,128]{1,0:T(1,128)}', space=vmem, size = 0x12000, scoped, tag = 'internal scratch']
  %s0 = inlined_call_operand.vmem [shape: bf16[2,1024], index: 0, kind: input, shape index: {}]
  %s1 = inlined_call_operand.vmem [shape: bf16[1024,128], index: 1, kind: input, shape index: {}]
  %s2 = inlined_call_operand.vmem [shape: f32[1,128], index: 2, kind: input, shape index: {}]
  %s3 = inlined_call_operand.vmem [shape: f32[2,128], index: 3, kind: output, shape index: {}]
  %s4 = sld [smem:[#allocation0]]
  $region22: #{discriminator_forward.15} parent=0
    _
  %s6 = ssub.s32 1, %s4
  %s7 = scalar_select 0, %s6, %s4
  // Predicated region
  $region2: #{discriminator_forward.15} parent=0 // pred_check
    _
  $region3: #{discriminator_forward.15} parent=0 // pred_check_branch
    %9 = sbr.rel (0) target = $region5
  $region4: #{discriminator_forward.15} parent=0 // pred_region
    _
  $region5: #{discriminator_forward.15} parent=0 // pred_fallthru
    _
  // Predicated region
  $region6: #{discriminator_forward.15} parent=0 // pred_check
    _
  $region7: #{discriminator_forward.15} parent=0 // pred_check_branch
    %11 = sbr.rel (0) target = $region9
  $region8: #{discriminator_forward.15} parent=0 // pred_region
    _
  $region9: #{discriminator_forward.15} parent=0 // pred_fallthru
    _
  // Predicated region
  $region10: #{discriminator_forward.15} parent=0 // pred_check
    _
  $region11: #{discriminator_forward.15} parent=0 // pred_check_branch
    %13 = sbr.rel (0) target = $region13
  $region12: #{discriminator_forward.15} parent=0 // pred_region
    _
  $region13: #{discriminator_forward.15} parent=0 // pred_fallthru
    _
  %v15 = vld [vmem:[%s0] sm:$0xff]
  %v16 = vld [vmem:[%s1] sm:$0xf]
  %v17 = vld [vmem:[%s1 + $0x4] sm:$0xf]
  %v18 = vld [vmem:[%s1 + $0x8] sm:$0xf]
  %v19 = vld [vmem:[%s1 + $0xc] sm:$0xf]
  %v20 = vld [vmem:[%s1 + $0x10] sm:$0xf]
  %v21 = vld [vmem:[%s1 + $0x14] sm:$0xf]
  %v22 = vld [vmem:[%s1 + $0x18] sm:$0xf]
  %v23 = vld [vmem:[%s1 + $0x1c] sm:$0xf]
  %v24 = vld [vmem:[%s1 + $0x20] sm:$0xf]
  %v25 = vld [vmem:[%s1 + $0x24] sm:$0xf]
  %v26 = vld [vmem:[%s1 + $0x28] sm:$0xf]
  %v27 = vld [vmem:[%s1 + $0x2c] sm:$0xf]
  %v28 = vld [vmem:[%s1 + $0x30] sm:$0xf]
  %v29 = vld [vmem:[%s1 + $0x34] sm:$0xf]
  %v30 = vld [vmem:[%s1 + $0x38] sm:$0xf]
  %v31 = vld [vmem:[%s1 + $0x3c] sm:$0xf]
  %v32 = vld [vmem:[%s1 + $0x40] sm:$0xf]
  %v33 = vld [vmem:[%s1 + $0x44] sm:$0xf]
  %v34 = vld [vmem:[%s1 + $0x48] sm:$0xf]
  %v35 = vld [vmem:[%s1 + $0x4c] sm:$0xf]
  %v36 = vld [vmem:[%s1 + $0x50] sm:$0xf]
  %v37 = vld [vmem:[%s1 + $0x54] sm:$0xf]
  %v38 = vld [vmem:[%s1 + $0x58] sm:$0xf]
  %v39 = vld [vmem:[%s1 + $0x5c] sm:$0xf]
  %v40 = vld [vmem:[%s1 + $0x60] sm:$0xf]
  %v41 = vld [vmem:[%s1 + $0x64] sm:$0xf]
  %v42 = vld [vmem:[%s1 + $0x68] sm:$0xf]
  %v43 = vld [vmem:[%s1 + $0x6c] sm:$0xf]
  %v44 = vld [vmem:[%s1 + $0x70] sm:$0xf]
  %v45 = vld [vmem:[%s1 + $0x74] sm:$0xf]
  %v46 = vld [vmem:[%s1 + $0x78] sm:$0xf]
  %v47 = vld [vmem:[%s1 + $0x7c] sm:$0xf]
  %v48 = vld [vmem:[%s1 + $0x80] sm:$0xf]
  %v49 = vld [vmem:[%s1 + $0x84] sm:$0xf]
  %v50 = vld [vmem:[%s1 + $0x88] sm:$0xf]
  %v51 = vld [vmem:[%s1 + $0x8c] sm:$0xf]
  %v52 = vld [vmem:[%s1 + $0x90] sm:$0xf]
  %v53 = vld [vmem:[%s1 + $0x94] sm:$0xf]
  %v54 = vld [vmem:[%s1 + $0x98] sm:$0xf]
  %v55 = vld [vmem:[%s1 + $0x9c] sm:$0xf]
  %v56 = vld [vmem:[%s1 + $0xa0] sm:$0xf]
  %v57 = vld [vmem:[%s1 + $0xa4] sm:$0xf]
  %v58 = vld [vmem:[%s1 + $0xa8] sm:$0xf]
  %v59 = vld [vmem:[%s1 + $0xac] sm:$0xf]
  %v60 = vld [vmem:[%s1 + $0xb0] sm:$0xf]
  %v61 = vld [vmem:[%s1 + $0xb4] sm:$0xf]
  %v62 = vld [vmem:[%s1 + $0xb8] sm:$0xf]
  %v63 = vld [vmem:[%s1 + $0xbc] sm:$0xf]
  %v64 = vld [vmem:[%s1 + $0xc0] sm:$0xf]
  %v65 = vld [vmem:[%s1 + $0xc4] sm:$0xf]
  %v66 = vld [vmem:[%s1 + $0xc8] sm:$0xf]
  %v67 = vld [vmem:[%s1 + $0xcc] sm:$0xf]
  %v68 = vld [vmem:[%s1 + $0xd0] sm:$0xf]
  %v69 = vld [vmem:[%s1 + $0xd4] sm:$0xf]
  %v70 = vld [vmem:[%s1 + $0xd8] sm:$0xf]
  %v71 = vld [vmem:[%s1 + $0xdc] sm:$0xf]
  %v72 = vld [vmem:[%s1 + $0xe0] sm:$0xf]
  %v73 = vld [vmem:[%s1 + $0xe4] sm:$0xf]
  %v74 = vld [vmem:[%s1 + $0xe8] sm:$0xf]
  %v75 = vld [vmem:[%s1 + $0xec] sm:$0xf]
  %v76 = vld [vmem:[%s1 + $0xf0] sm:$0xf]
  %v77 = vld [vmem:[%s1 + $0xf4] sm:$0xf]
  %v78 = vld [vmem:[%s1 + $0xf8] sm:$0xf]
  %v79 = vld [vmem:[%s1 + $0xfc] sm:$0xf]
  %v80 = vld [vmem:[%s1 + $0x100] sm:$0xf]
  %v81 = vld [vmem:[%s1 + $0x104] sm:$0xf]
  %v82 = vld [vmem:[%s1 + $0x108] sm:$0xf]
  %v83 = vld [vmem:[%s1 + $0x10c] sm:$0xf]
  %v84 = vld [vmem:[%s1 + $0x110] sm:$0xf]
  %v85 = vld [vmem:[%s1 + $0x114] sm:$0xf]
  %v86 = vld [vmem:[%s1 + $0x118] sm:$0xf]
  %v87 = vld [vmem:[%s1 + $0x11c] sm:$0xf]
  %v88 = vld [vmem:[%s1 + $0x120] sm:$0xf]
  %v89 = vld [vmem:[%s1 + $0x124] sm:$0xf]
  %v90 = vld [vmem:[%s1 + $0x128] sm:$0xf]
  %v91 = vld [vmem:[%s1 + $0x12c] sm:$0xf]
  %v92 = vld [vmem:[%s1 + $0x130] sm:$0xf]
  %v93 = vld [vmem:[%s1 + $0x134] sm:$0xf]
  %v94 = vld [vmem:[%s1 + $0x138] sm:$0xf]
  %v95 = vld [vmem:[%s1 + $0x13c] sm:$0xf]
  %v96 = vld [vmem:[%s1 + $0x140] sm:$0xf]
  %v97 = vld [vmem:[%s1 + $0x144] sm:$0xf]
  %v98 = vld [vmem:[%s1 + $0x148] sm:$0xf]
  %v99 = vld [vmem:[%s1 + $0x14c] sm:$0xf]
  %v100 = vld [vmem:[%s1 + $0x150] sm:$0xf]
  %v101 = vld [vmem:[%s1 + $0x154] sm:$0xf]
  %v102 = vld [vmem:[%s1 + $0x158] sm:$0xf]
  %v103 = vld [vmem:[%s1 + $0x15c] sm:$0xf]
  %v104 = vld [vmem:[%s1 + $0x160] sm:$0xf]
  %v105 = vld [vmem:[%s1 + $0x164] sm:$0xf]
  %v106 = vld [vmem:[%s1 + $0x168] sm:$0xf]
  %v107 = vld [vmem:[%s1 + $0x16c] sm:$0xf]
  %v108 = vld [vmem:[%s1 + $0x170] sm:$0xf]
  %v109 = vld [vmem:[%s1 + $0x174] sm:$0xf]
  %v110 = vld [vmem:[%s1 + $0x178] sm:$0xf]
  %v111 = vld [vmem:[%s1 + $0x17c] sm:$0xf]
  %v112 = vld [vmem:[%s1 + $0x180] sm:$0xf]
  %v113 = vld [vmem:[%s1 + $0x184] sm:$0xf]
  %v114 = vld [vmem:[%s1 + $0x188] sm:$0xf]
  %v115 = vld [vmem:[%s1 + $0x18c] sm:$0xf]
  %v116 = vld [vmem:[%s1 + $0x190] sm:$0xf]
  %v117 = vld [vmem:[%s1 + $0x194] sm:$0xf]
  %v118 = vld [vmem:[%s1 + $0x198] sm:$0xf]
  %v119 = vld [vmem:[%s1 + $0x19c] sm:$0xf]
  %v120 = vld [vmem:[%s1 + $0x1a0] sm:$0xf]
  %v121 = vld [vmem:[%s1 + $0x1a4] sm:$0xf]
  %v122 = vld [vmem:[%s1 + $0x1a8] sm:$0xf]
  %v123 = vld [vmem:[%s1 + $0x1ac] sm:$0xf]
  %v124 = vld [vmem:[%s1 + $0x1b0] sm:$0xf]
  %v125 = vld [vmem:[%s1 + $0x1b4] sm:$0xf]
  %v126 = vld [vmem:[%s1 + $0x1b8] sm:$0xf]
  %v127 = vld [vmem:[%s1 + $0x1bc] sm:$0xf]
  %v128 = vld [vmem:[%s1 + $0x1c0] sm:$0xf]
  %v129 = vld [vmem:[%s1 + $0x1c4] sm:$0xf]
  %v130 = vld [vmem:[%s1 + $0x1c8] sm:$0xf]
  %v131 = vld [vmem:[%s1 + $0x1cc] sm:$0xf]
  %v132 = vld [vmem:[%s1 + $0x1d0] sm:$0xf]
  %v133 = vld [vmem:[%s1 + $0x1d4] sm:$0xf]
  %v134 = vld [vmem:[%s1 + $0x1d8] sm:$0xf]
  %v135 = vld [vmem:[%s1 + $0x1dc] sm:$0xf]
  %v136 = vld [vmem:[%s1 + $0x1e0] sm:$0xf]
  %v137 = vld [vmem:[%s1 + $0x1e4] sm:$0xf]
  %v138 = vld [vmem:[%s1 + $0x1e8] sm:$0xf]
  %v139 = vld [vmem:[%s1 + $0x1ec] sm:$0xf]
  %v140 = vld [vmem:[%s1 + $0x1f0] sm:$0xf]
  %v141 = vld [vmem:[%s1 + $0x1f4] sm:$0xf]
  %v142 = vld [vmem:[%s1 + $0x1f8] sm:$0xf]
  %v143 = vld [vmem:[%s1 + $0x1fc] sm:$0xf]
  %v144 = vld [vmem:[%s2] sm:$0x1]
  %v146 = vlaneseq
  %v147 = vshrl.u32 %v146, 7
  %v148 = vsub.s32 0, %v147
  %v149 = vrot.slane %v144, %v148
  %v152 = vcombine.high %v15, %v15
  %v154 = vunpack.c.l.s4 1966171168
  %v155 = vunpack.c.0.s8 %v154
  %v156 = vlaneseq
  %v157 = vshrl.u32 %v156, 7
  %v158 = vsub.s32 %v155, %v157
  %v159 = vrot.slane %v15, %v158
  %v161 = vunpack.c.l.s4 1966171168
  %v162 = vunpack.c.0.s8 %v161
  %v163 = vlaneseq
  %v164 = vshrl.u32 %v163, 7
  %v165 = vsub.s32 %v162, %v164
  %v166 = vrot.slane %v152, %v165
  %v167 = vcombine.high %v159, %v159
  %v168 = vcombine.high %v166, %v166
  %v170 = vunpack.c.l.s4 1966171168
  %v171 = vunpack.c.0.s8 %v170
  %v172 = vlaneseq
  %v173 = vshrl.u32 %v172, 7
  %v174 = vsub.s32 %v171, %v173
  %v175 = vrot.slane %v159, %v174
  %v177 = vunpack.c.l.s4 1966171168
  %v178 = vunpack.c.0.s8 %v177
  %v179 = vlaneseq
  %v180 = vshrl.u32 %v179, 7
  %v181 = vsub.s32 %v178, %v180
  %v182 = vrot.slane %v166, %v181
  %v184 = vunpack.c.l.s4 1966171168
  %v185 = vunpack.c.0.s8 %v184
  %v186 = vlaneseq
  %v187 = vshrl.u32 %v186, 7
  %v188 = vsub.s32 %v185, %v187
  %v189 = vrot.slane %v167, %v188
  %v191 = vunpack.c.l.s4 1966171168
  %v192 = vunpack.c.0.s8 %v191
  %v193 = vlaneseq
  %v194 = vshrl.u32 %v193, 7
  %v195 = vsub.s32 %v192, %v194
  %v196 = vrot.slane %v168, %v195
  %v197 = vcombine.high %v175, %v175
  %v198 = vcombine.high %v182, %v182
  %v199 = vcombine.high %v189, %v189
  %v200 = vcombine.high %v196, %v196
  %v337 = vunpack.c.l.b16 %v16
  %v338 = vunpack.c.l.b16 %v17
  %v339 = vunpack.c.l.b16 %v18
  %v340 = vunpack.c.l.b16 %v19
  %v341 = vunpack.c.l.b16 %v20
  %v342 = vunpack.c.l.b16 %v21
  %v343 = vunpack.c.l.b16 %v22
  %v344 = vunpack.c.l.b16 %v23
  %v345 = vunpack.c.l.b16 %v24
  %v346 = vunpack.c.l.b16 %v25
  %v347 = vunpack.c.l.b16 %v26
  %v348 = vunpack.c.l.b16 %v27
  %v349 = vunpack.c.l.b16 %v28
  %v350 = vunpack.c.l.b16 %v29
  %v351 = vunpack.c.l.b16 %v30
  %v352 = vunpack.c.l.b16 %v31
  %v353 = vunpack.c.l.b16 %v32
  %v354 = vunpack.c.l.b16 %v33
  %v355 = vunpack.c.l.b16 %v34
  %v356 = vunpack.c.l.b16 %v35
  %v357 = vunpack.c.l.b16 %v36
  %v358 = vunpack.c.l.b16 %v37
  %v359 = vunpack.c.l.b16 %v38
  %v360 = vunpack.c.l.b16 %v39
  %v361 = vunpack.c.l.b16 %v40
  %v362 = vunpack.c.l.b16 %v41
  %v363 = vunpack.c.l.b16 %v42
  %v364 = vunpack.c.l.b16 %v43
  %v365 = vunpack.c.l.b16 %v44
  %v366 = vunpack.c.l.b16 %v45
  %v367 = vunpack.c.l.b16 %v46
  %v368 = vunpack.c.l.b16 %v47
  %v369 = vunpack.c.l.b16 %v48
  %v370 = vunpack.c.l.b16 %v49
  %v371 = vunpack.c.l.b16 %v50
  %v372 = vunpack.c.l.b16 %v51
  %v373 = vunpack.c.l.b16 %v52
  %v374 = vunpack.c.l.b16 %v53
  %v375 = vunpack.c.l.b16 %v54
  %v376 = vunpack.c.l.b16 %v55
  %v377 = vunpack.c.l.b16 %v56
  %v378 = vunpack.c.l.b16 %v57
  %v379 = vunpack.c.l.b16 %v58
  %v380 = vunpack.c.l.b16 %v59
  %v381 = vunpack.c.l.b16 %v60
  %v382 = vunpack.c.l.b16 %v61
  %v383 = vunpack.c.l.b16 %v62
  %v384 = vunpack.c.l.b16 %v63
  %v385 = vunpack.c.l.b16 %v64
  %v386 = vunpack.c.l.b16 %v65
  %v387 = vunpack.c.l.b16 %v66
  %v388 = vunpack.c.l.b16 %v67
  %v389 = vunpack.c.l.b16 %v68
  %v390 = vunpack.c.l.b16 %v69
  %v391 = vunpack.c.l.b16 %v70
  %v392 = vunpack.c.l.b16 %v71
  %v393 = vunpack.c.l.b16 %v72
  %v394 = vunpack.c.l.b16 %v73
  %v395 = vunpack.c.l.b16 %v74
  %v396 = vunpack.c.l.b16 %v75
  %v397 = vunpack.c.l.b16 %v76
  %v398 = vunpack.c.l.b16 %v77
  %v399 = vunpack.c.l.b16 %v78
  %v400 = vunpack.c.l.b16 %v79
  %v401 = vunpack.c.l.b16 %v80
  %v402 = vunpack.c.l.b16 %v81
  %v403 = vunpack.c.l.b16 %v82
  %v404 = vunpack.c.l.b16 %v83
  %v405 = vunpack.c.l.b16 %v84
  %v406 = vunpack.c.l.b16 %v85
  %v407 = vunpack.c.l.b16 %v86
  %v408 = vunpack.c.l.b16 %v87
  %v409 = vunpack.c.l.b16 %v88
  %v410 = vunpack.c.l.b16 %v89
  %v411 = vunpack.c.l.b16 %v90
  %v412 = vunpack.c.l.b16 %v91
  %v413 = vunpack.c.l.b16 %v92
  %v414 = vunpack.c.l.b16 %v93
  %v415 = vunpack.c.l.b16 %v94
  %v416 = vunpack.c.l.b16 %v95
  %v417 = vunpack.c.l.b16 %v96
  %v418 = vunpack.c.l.b16 %v97
  %v419 = vunpack.c.l.b16 %v98
  %v420 = vunpack.c.l.b16 %v99
  %v421 = vunpack.c.l.b16 %v100
  %v422 = vunpack.c.l.b16 %v101
  %v423 = vunpack.c.l.b16 %v102
  %v424 = vunpack.c.l.b16 %v103
  %v425 = vunpack.c.l.b16 %v104
  %v426 = vunpack.c.l.b16 %v105
  %v427 = vunpack.c.l.b16 %v106
  %v428 = vunpack.c.l.b16 %v107
  %v429 = vunpack.c.l.b16 %v108
  %v430 = vunpack.c.l.b16 %v109
  %v431 = vunpack.c.l.b16 %v110
  %v432 = vunpack.c.l.b16 %v111
  %v433 = vunpack.c.l.b16 %v112
  %v434 = vunpack.c.l.b16 %v113
  %v435 = vunpack.c.l.b16 %v114
  %v436 = vunpack.c.l.b16 %v115
  %v437 = vunpack.c.l.b16 %v116
  %v438 = vunpack.c.l.b16 %v117
  %v439 = vunpack.c.l.b16 %v118
  %v440 = vunpack.c.l.b16 %v119
  %v441 = vunpack.c.l.b16 %v120
  %v442 = vunpack.c.l.b16 %v121
  %v443 = vunpack.c.l.b16 %v122
  %v444 = vunpack.c.l.b16 %v123
  %v445 = vunpack.c.l.b16 %v124
  %v446 = vunpack.c.l.b16 %v125
  %v447 = vunpack.c.l.b16 %v126
  %v448 = vunpack.c.l.b16 %v127
  %v449 = vunpack.c.l.b16 %v128
  %v450 = vunpack.c.l.b16 %v129
  %v451 = vunpack.c.l.b16 %v130
  %v452 = vunpack.c.l.b16 %v131
  %v453 = vunpack.c.l.b16 %v132
  %v454 = vunpack.c.l.b16 %v133
  %v455 = vunpack.c.l.b16 %v134
  %v456 = vunpack.c.l.b16 %v135
  %v457 = vunpack.c.l.b16 %v136
  %v458 = vunpack.c.l.b16 %v137
  %v459 = vunpack.c.l.b16 %v138
  %v460 = vunpack.c.l.b16 %v139
  %v461 = vunpack.c.l.b16 %v140
  %v462 = vunpack.c.l.b16 %v141
  %v463 = vunpack.c.l.b16 %v142
  %v464 = vunpack.c.l.b16 %v143
  %v465 = vpack.c.b16 %v338, %v337
  %v466 = vpack.c.b16 %v340, %v339
  %v467 = vpack.c.b16 %v342, %v341
  %v468 = vpack.c.b16 %v344, %v343
  %v469 = vpack.c.b16 %v346, %v345
  %v470 = vpack.c.b16 %v348, %v347
  %v471 = vpack.c.b16 %v350, %v349
  %v472 = vpack.c.b16 %v352, %v351
  %v473 = vpack.c.b16 %v354, %v353
  %v474 = vpack.c.b16 %v356, %v355
  %v475 = vpack.c.b16 %v358, %v357
  %v476 = vpack.c.b16 %v360, %v359
  %v477 = vpack.c.b16 %v362, %v361
  %v478 = vpack.c.b16 %v364, %v363
  %v479 = vpack.c.b16 %v366, %v365
  %v480 = vpack.c.b16 %v368, %v367
  %v481 = vpack.c.b16 %v370, %v369
  %v482 = vpack.c.b16 %v372, %v371
  %v483 = vpack.c.b16 %v374, %v373
  %v484 = vpack.c.b16 %v376, %v375
  %v485 = vpack.c.b16 %v378, %v377
  %v486 = vpack.c.b16 %v380, %v379
  %v487 = vpack.c.b16 %v382, %v381
  %v488 = vpack.c.b16 %v384, %v383
  %v489 = vpack.c.b16 %v386, %v385
  %v490 = vpack.c.b16 %v388, %v387
  %v491 = vpack.c.b16 %v390, %v389
  %v492 = vpack.c.b16 %v392, %v391
  %v493 = vpack.c.b16 %v394, %v393
  %v494 = vpack.c.b16 %v396, %v395
  %v495 = vpack.c.b16 %v398, %v397
  %v496 = vpack.c.b16 %v400, %v399
  %v497 = vpack.c.b16 %v402, %v401
  %v498 = vpack.c.b16 %v404, %v403
  %v499 = vpack.c.b16 %v406, %v405
  %v500 = vpack.c.b16 %v408, %v407
  %v501 = vpack.c.b16 %v410, %v409
  %v502 = vpack.c.b16 %v412, %v411
  %v503 = vpack.c.b16 %v414, %v413
  %v504 = vpack.c.b16 %v416, %v415
  %v505 = vpack.c.b16 %v418, %v417
  %v506 = vpack.c.b16 %v420, %v419
  %v507 = vpack.c.b16 %v422, %v421
  %v508 = vpack.c.b16 %v424, %v423
  %v509 = vpack.c.b16 %v426, %v425
  %v510 = vpack.c.b16 %v428, %v427
  %v511 = vpack.c.b16 %v430, %v429
  %v512 = vpack.c.b16 %v432, %v431
  %v513 = vpack.c.b16 %v434, %v433
  %v514 = vpack.c.b16 %v436, %v435
  %v515 = vpack.c.b16 %v438, %v437
  %v516 = vpack.c.b16 %v440, %v439
  %v517 = vpack.c.b16 %v442, %v441
  %v518 = vpack.c.b16 %v444, %v443
  %v519 = vpack.c.b16 %v446, %v445
  %v520 = vpack.c.b16 %v448, %v447
  %v521 = vpack.c.b16 %v450, %v449
  %v522 = vpack.c.b16 %v452, %v451
  %v523 = vpack.c.b16 %v454, %v453
  %v524 = vpack.c.b16 %v456, %v455
  %v525 = vpack.c.b16 %v458, %v457
  %v526 = vpack.c.b16 %v460, %v459
  %v527 = vpack.c.b16 %v462, %v461
  %v528 = vpack.c.b16 %v464, %v463
  %593 = vmatprep.subr.bf16.mxu0 0
  %594 = vmatpush1.bf16.msra.mxu0 %v465
  %595 = vmatprep.subr.bf16.mxu0 0
  %596 = vmatpush1.bf16.msra.mxu0 %v466
  %597 = vmatprep.subr.bf16.mxu0 0
  %598 = vmatpush1.bf16.msra.mxu0 %v467
  %599 = vmatprep.subr.bf16.mxu0 0
  %600 = vmatpush1.bf16.msra.mxu0 %v468
  %601 = vmatprep.subr.bf16.mxu0 0
  %602 = vmatpush1.bf16.msra.mxu0 %v469
  %603 = vmatprep.subr.bf16.mxu0 0
  %604 = vmatpush1.bf16.msra.mxu0 %v470
  %605 = vmatprep.subr.bf16.mxu0 0
  %606 = vmatpush1.bf16.msra.mxu0 %v471
  %607 = vmatprep.subr.bf16.mxu0 0
  %608 = vmatpush1.bf16.msra.mxu0 %v472
  %609 = vmatprep.subr.bf16.mxu0 0
  %610 = vmatpush1.bf16.msra.mxu0 %v473
  %611 = vmatprep.subr.bf16.mxu0 0
  %612 = vmatpush1.bf16.msra.mxu0 %v474
  %613 = vmatprep.subr.bf16.mxu0 0
  %614 = vmatpush1.bf16.msra.mxu0 %v475
  %615 = vmatprep.subr.bf16.mxu0 0
  %616 = vmatpush1.bf16.msra.mxu0 %v476
  %617 = vmatprep.subr.bf16.mxu0 0
  %618 = vmatpush1.bf16.msra.mxu0 %v477
  %619 = vmatprep.subr.bf16.mxu0 0
  %620 = vmatpush1.bf16.msra.mxu0 %v478
  %621 = vmatprep.subr.bf16.mxu0 0
  %622 = vmatpush1.bf16.msra.mxu0 %v479
  %623 = vmatprep.subr.bf16.mxu0 0
  %624 = vmatpush1.bf16.msra.mxu0 %v480
  %625 = vmatprep.mubr.bf16.mxu0 %v189
  %626 = vmatmul.mubr.bf16.gmra.mrb[0].mxu0 %v175
  %v627 = vpop.f32.mrb[0].mxu0
  %v628 = vadd.f32 %v149, %v627
  %v629 = vpop.f32.mrb[0].mxu0
  %v630 = vpop.f32.mrb[0].mxu0
  %v631 = vpop.f32.mrb[0].mxu0
  %632 = vdwg.mxu0
  %633 = vmatprep.subr.bf16.mxu0 0
  %634 = vmatpush1.bf16.msra.mxu0 %v481
  %635 = vmatprep.subr.bf16.mxu0 0
  %636 = vmatpush1.bf16.msra.mxu0 %v482
  %637 = vmatprep.subr.bf16.mxu0 0
  %638 = vmatpush1.bf16.msra.mxu0 %v483
  %639 = vmatprep.subr.bf16.mxu0 0
  %640 = vmatpush1.bf16.msra.mxu0 %v484
  %641 = vmatprep.subr.bf16.mxu0 0
  %642 = vmatpush1.bf16.msra.mxu0 %v485
  %643 = vmatprep.subr.bf16.mxu0 0
  %644 = vmatpush1.bf16.msra.mxu0 %v486
  %645 = vmatprep.subr.bf16.mxu0 0
  %646 = vmatpush1.bf16.msra.mxu0 %v487
  %647 = vmatprep.subr.bf16.mxu0 0
  %648 = vmatpush1.bf16.msra.mxu0 %v488
  %649 = vmatprep.subr.bf16.mxu0 0
  %650 = vmatpush1.bf16.msra.mxu0 %v489
  %651 = vmatprep.subr.bf16.mxu0 0
  %652 = vmatpush1.bf16.msra.mxu0 %v490
  %653 = vmatprep.subr.bf16.mxu0 0
  %654 = vmatpush1.bf16.msra.mxu0 %v491
  %655 = vmatprep.subr.bf16.mxu0 0
  %656 = vmatpush1.bf16.msra.mxu0 %v492
  %657 = vmatprep.subr.bf16.mxu0 0
  %658 = vmatpush1.bf16.msra.mxu0 %v493
  %659 = vmatprep.subr.bf16.mxu0 0
  %660 = vmatpush1.bf16.msra.mxu0 %v494
  %661 = vmatprep.subr.bf16.mxu0 0
  %662 = vmatpush1.bf16.msra.mxu0 %v495
  %663 = vmatprep.subr.bf16.mxu0 0
  %664 = vmatpush1.bf16.msra.mxu0 %v496
  %665 = vmatprep.mubr.bf16.mxu0 %v199
  %666 = vmatmul.mubr.bf16.gmra.mrb[0].mxu0 %v197
  %v667 = vpop.f32.mrb[0].mxu0
  %v668 = vadd.f32 %v628, %v667
  %v669 = vpop.f32.mrb[0].mxu0
  %v670 = vpop.f32.mrb[0].mxu0
  %v671 = vpop.f32.mrb[0].mxu0
  %672 = vdwg.mxu0
  %673 = vmatprep.subr.bf16.mxu0 0
  %674 = vmatpush1.bf16.msra.mxu0 %v497
  %675 = vmatprep.subr.bf16.mxu0 0
  %676 = vmatpush1.bf16.msra.mxu0 %v498
  %677 = vmatprep.subr.bf16.mxu0 0
  %678 = vmatpush1.bf16.msra.mxu0 %v499
  %679 = vmatprep.subr.bf16.mxu0 0
  %680 = vmatpush1.bf16.msra.mxu0 %v500
  %681 = vmatprep.subr.bf16.mxu0 0
  %682 = vmatpush1.bf16.msra.mxu0 %v501
  %683 = vmatprep.subr.bf16.mxu0 0
  %684 = vmatpush1.bf16.msra.mxu0 %v502
  %685 = vmatprep.subr.bf16.mxu0 0
  %686 = vmatpush1.bf16.msra.mxu0 %v503
  %687 = vmatprep.subr.bf16.mxu0 0
  %688 = vmatpush1.bf16.msra.mxu0 %v504
  %689 = vmatprep.subr.bf16.mxu0 0
  %690 = vmatpush1.bf16.msra.mxu0 %v505
  %691 = vmatprep.subr.bf16.mxu0 0
  %692 = vmatpush1.bf16.msra.mxu0 %v506
  %693 = vmatprep.subr.bf16.mxu0 0
  %694 = vmatpush1.bf16.msra.mxu0 %v507
  %695 = vmatprep.subr.bf16.mxu0 0
  %696 = vmatpush1.bf16.msra.mxu0 %v508
  %697 = vmatprep.subr.bf16.mxu0 0
  %698 = vmatpush1.bf16.msra.mxu0 %v509
  %699 = vmatprep.subr.bf16.mxu0 0
  %700 = vmatpush1.bf16.msra.mxu0 %v510
  %701 = vmatprep.subr.bf16.mxu0 0
  %702 = vmatpush1.bf16.msra.mxu0 %v511
  %703 = vmatprep.subr.bf16.mxu0 0
  %704 = vmatpush1.bf16.msra.mxu0 %v512
  %705 = vmatprep.mubr.bf16.mxu0 %v196
  %706 = vmatmul.mubr.bf16.gmra.mrb[0].mxu0 %v182
  %v707 = vpop.f32.mrb[0].mxu0
  %v708 = vadd.f32 %v668, %v707
  %v709 = vpop.f32.mrb[0].mxu0
  %v710 = vpop.f32.mrb[0].mxu0
  %v711 = vpop.f32.mrb[0].mxu0
  %712 = vdwg.mxu0
  %713 = vmatprep.subr.bf16.mxu0 0
  %714 = vmatpush1.bf16.msra.mxu0 %v513
  %715 = vmatprep.subr.bf16.mxu0 0
  %716 = vmatpush1.bf16.msra.mxu0 %v514
  %717 = vmatprep.subr.bf16.mxu0 0
  %718 = vmatpush1.bf16.msra.mxu0 %v515
  %719 = vmatprep.subr.bf16.mxu0 0
  %720 = vmatpush1.bf16.msra.mxu0 %v516
  %721 = vmatprep.subr.bf16.mxu0 0
  %722 = vmatpush1.bf16.msra.mxu0 %v517
  %723 = vmatprep.subr.bf16.mxu0 0
  %724 = vmatpush1.bf16.msra.mxu0 %v518
  %725 = vmatprep.subr.bf16.mxu0 0
  %726 = vmatpush1.bf16.msra.mxu0 %v519
  %727 = vmatprep.subr.bf16.mxu0 0
  %728 = vmatpush1.bf16.msra.mxu0 %v520
  %729 = vmatprep.subr.bf16.mxu0 0
  %730 = vmatpush1.bf16.msra.mxu0 %v521
  %731 = vmatprep.subr.bf16.mxu0 0
  %732 = vmatpush1.bf16.msra.mxu0 %v522
  %733 = vmatprep.subr.bf16.mxu0 0
  %734 = vmatpush1.bf16.msra.mxu0 %v523
  %735 = vmatprep.subr.bf16.mxu0 0
  %736 = vmatpush1.bf16.msra.mxu0 %v524
  %737 = vmatprep.subr.bf16.mxu0 0
  %738 = vmatpush1.bf16.msra.mxu0 %v525
  %739 = vmatprep.subr.bf16.mxu0 0
  %740 = vmatpush1.bf16.msra.mxu0 %v526
  %741 = vmatprep.subr.bf16.mxu0 0
  %742 = vmatpush1.bf16.msra.mxu0 %v527
  %743 = vmatprep.subr.bf16.mxu0 0
  %744 = vmatpush1.bf16.msra.mxu0 %v528
  %745 = vmatprep.mubr.bf16.mxu0 %v200
  %746 = vmatmul.mubr.bf16.gmra.mrb[0].mxu0 %v198
  %v747 = vpop.f32.mrb[0].mxu0
  %v748 = vadd.f32 %v708, %v747
  %v749 = vpop.f32.mrb[0].mxu0
  %v750 = vpop.f32.mrb[0].mxu0
  %v751 = vpop.f32.mrb[0].mxu0
  %752 = vdwg.mxu0
  %v753 = vxor.u32 %v748, 2147483648
  %v754 = vmul.f32 %v753, 1.442695
  %v755 = vpow.pop %v754
  %v756 = vadd.f32 %v755, 1.0
  %v757 = vrcp.pop %v756
  %v758 = vmul.f32 1.0, %v757
  %759 = vst [vmem:[%s3] sm:$0x3] %v758
  // Predicated region
  $region14: #{discriminator_forward.15} parent=0 // pred_check
    _
  $region15: #{discriminator_forward.15} parent=0 // pred_check_branch
    %761 = sbr.rel (0) target = $region17
  $region16: #{discriminator_forward.15} parent=0 // pred_region
    _
  $region17: #{discriminator_forward.15} parent=0 // pred_fallthru
    _
  // Predicated region
  $region18: #{discriminator_forward.15} parent=0 // pred_check
    _
  $region19: #{discriminator_forward.15} parent=0 // pred_check_branch
    %763 = sbr.rel (0) target = $region21
  $region20: #{discriminator_forward.15} parent=0 // pred_region
    _
  $region21: #{discriminator_forward.15} parent=0 // pred_fallthru
    _

</llo_original>
